<compile_context>
chip_gen: v5e
topology: v5e:2x2
jax: 0.10.0
libtpu: 0.0.40
codegen_flags: <defaults>
</compile_context>

<pallas_src>
import jax
import jax.numpy as jnp
from jax import lax
from jax.experimental import pallas as pl
from jax.experimental.pallas import tpu as pltpu


# ------------------------------ Pallas kernel -------------------------------

def _lenet2_kernel(x_ref, t1_ref, b1_ref, t2_ref, b2_ref,
                   wf1_ref, bf1_ref, wf2_ref, bf2_ref, wc_ref, bc_ref,
                   out_ref, h1s, z1s, h2s, fcin):
    f32 = jnp.float32

    # Zero the scratches whose padding lanes/rows feed later matmuls
    # (uninitialized VMEM could contain NaNs; NaN * 0 = NaN).
    z1s[...] = jnp.zeros(z1s.shape, f32)
    fcin[...] = jnp.zeros(fcin.shape, f32)

    # ---- conv1 + ReLU: 3x32x32 -> 6x28x28, layout (rows=oy, lanes=ox*6+oc) --
    x = x_ref[0]                                    # (32, 128), lanes xx*3+c (96 real)
    y1 = jnp.dot(x[0:28, :], t1_ref[0], preferred_element_type=f32)
    for i in range(1, 5):
        y1 = y1 + jnp.dot(x[i:i + 28, :], t1_ref[i], preferred_element_type=f32)
    y1 = jnp.maximum(y1 + b1_ref[...], 0.0)         # (28, 256), lanes 0:168 real

    # ---- pool1 (2x2, stride 2): -> (rows=py, lanes=px*6+c) in z1s ----------
    C1 = 6
    for px in range(14):                            # horizontal pair-max
        a = y1[:, (2 * px) * C1:(2 * px) * C1 + C1]
        b = y1[:, (2 * px + 1) * C1:(2 * px + 1) * C1 + C1]
        h1s[0:28, px * C1:(px + 1) * C1] = jnp.maximum(a, b)
    for py in range(14):                            # vertical pair-max
        z1s[py:py + 1, 0:84] = jnp.maximum(h1s[2 * py:2 * py + 1, 0:84],
                                           h1s[2 * py + 1:2 * py + 2, 0:84])

    # ---- conv2 + ReLU: 6x14x14 -> 16x10x10, layout (rows=oy, lanes=ox*16+oc)
    z1 = z1s[...]                                   # (16, 128), lanes 0:84 real
    y2 = jnp.dot(z1[0:10, :], t2_ref[0], preferred_element_type=f32)
    for i in range(1, 5):
        y2 = y2 + jnp.dot(z1[i:i + 10, :], t2_ref[i], preferred_element_type=f32)
    y2 = jnp.maximum(y2 + b2_ref[...], 0.0)         # (10, 256), lanes 0:160 real

    # ---- pool2 (2x2) + NCHW-compatible flatten into fcin row 0 -------------
    C2 = 16
    for px in range(5):
        a = y2[:, (2 * px) * C2:(2 * px) * C2 + C2]
        b = y2[:, (2 * px + 1) * C2:(2 * px + 1) * C2 + C2]
        h2s[0:10, px * C2:(px + 1) * C2] = jnp.maximum(a, b)
    for py in range(5):
        # flatten order is (py, px, c); fc1 weight was pre-permuted to match.
        fcin[0:1, py * 80:(py + 1) * 80] = jnp.maximum(
            h2s[2 * py:2 * py + 1, 0:80], h2s[2 * py + 1:2 * py + 2, 0:80])

    # ---- fc1 -> relu -> fc2 -> relu -> clf ----------------------------------
    a0 = fcin[...]                                  # (8, 512), row 0 / lanes 0:400 real
    h1 = jnp.maximum(jnp.dot(a0, wf1_ref[...], preferred_element_type=f32)
                     + bf1_ref[...], 0.0)           # (8, 128)
    h2 = jnp.maximum(jnp.dot(h1, wf2_ref[...], preferred_element_type=f32)
                     + bf2_ref[...], 0.0)           # (8, 128)
    o = jnp.dot(h2, wc_ref[...], preferred_element_type=f32) + bc_ref[...]
    out_ref[0] = o                                  # row 0, lanes 0:2 are the logits


# --------------------------- weight preparation ------------------------------

def _pad_to(a, shape):
    return jnp.pad(a, [(0, t - s) for s, t in zip(a.shape, shape)])


def _conv_toeplitz(w, w_in, w_out, c_in, c_out, k_pad, n_pad):
    """Banded weight: T[i, x*c_in + c, p*c_out + q] = w[q, c, i, x - p]."""
    f32 = jnp.float32
    k = w.shape[2]
    band = jnp.stack([jnp.eye(w_in, w_out, k=-j, dtype=f32) for j in range(k)])
    t = jnp.einsum("jxp,qcij->ixcpq", band, w.astype(f32))
    t = t.reshape(k, w_in * c_in, w_out * c_out)
    return _pad_to(t, (k, k_pad, n_pad))


def prepare_params(params):
    """One-time weight re-layout / padding (done outside the jitted forward)."""
    f32 = jnp.float32
    t1 = _conv_toeplitz(params["conv1_w"], 32, 28, 3, 6, 128, 256)
    t2 = _conv_toeplitz(params["conv2_w"], 14, 10, 6, 16, 128, 256)
    b1r = _pad_to(jnp.tile(params["conv1_b"].astype(f32), 28).reshape(1, -1), (1, 256))
    b2r = _pad_to(jnp.tile(params["conv2_b"].astype(f32), 10).reshape(1, -1), (1, 256))

    # fc1: rows ordered (py, px, c) to match the in-kernel flatten.
    wf1 = params["fc1_w"].astype(f32).reshape(120, 16, 5, 5)
    wf1 = wf1.transpose(2, 3, 1, 0).reshape(400, 120)
    wf1 = _pad_to(wf1, (512, 128))
    bf1 = _pad_to(params["fc1_b"].astype(f32).reshape(1, -1), (1, 128))

    wf2 = _pad_to(params["fc2_w"].astype(f32).T, (128, 128))
    bf2 = _pad_to(params["fc2_b"].astype(f32).reshape(1, -1), (1, 128))

    wc = _pad_to(params["clf_w"].astype(f32).T, (128, 128))
    bc = _pad_to(params["clf_b"].astype(f32).reshape(1, -1), (1, 128))

    return dict(t1=t1, b1r=b1r, t2=t2, b2r=b2r,
                wf1=wf1, bf1r=bf1, wf2=wf2, bf2r=bf2, wc=wc, bcr=bc)


# ------------------------------ forward pass ---------------------------------

def lenet2_forward(prep, x):
    n = x.shape[0]
    assert x.shape[1:] == (3, 32, 32)
    # NCHW -> (rows = y, lanes = x*3 + c), zero-padded to 128 lanes.
    xr = jnp.transpose(x, (0, 2, 3, 1)).reshape(n, 32, 96).astype(jnp.float32)
    xr = jnp.pad(xr, ((0, 0), (0, 0), (0, 32)))                 # (N, 32, 128)

    out = pl.pallas_call(
        _lenet2_kernel,
        out_shape=jax.ShapeDtypeStruct((n, 8, 128), jnp.float32),
        grid=(n,),
        in_specs=[
            pl.BlockSpec((1, 32, 128), lambda i: (i, 0, 0)),      # x (per image)
            pl.BlockSpec((5, 128, 256), lambda i: (0, 0, 0)),     # conv1 Toeplitz
            pl.BlockSpec((1, 256), lambda i: (0, 0)),             # conv1 bias row
            pl.BlockSpec((5, 128, 256), lambda i: (0, 0, 0)),     # conv2 Toeplitz
            pl.BlockSpec((1, 256), lambda i: (0, 0)),             # conv2 bias row
            pl.BlockSpec((512, 128), lambda i: (0, 0)),           # fc1 weight
            pl.BlockSpec((1, 128), lambda i: (0, 0)),             # fc1 bias
            pl.BlockSpec((128, 128), lambda i: (0, 0)),           # fc2 weight
            pl.BlockSpec((1, 128), lambda i: (0, 0)),             # fc2 bias
            pl.BlockSpec((128, 128), lambda i: (0, 0)),           # clf weight
            pl.BlockSpec((1, 128), lambda i: (0, 0)),             # clf bias
        ],
        out_specs=pl.BlockSpec((1, 8, 128), lambda i: (i, 0, 0)),
        scratch_shapes=[
            pltpu.VMEM((32, 128), jnp.float32),   # h1s: pool1 horizontal max
            pltpu.VMEM((16, 128), jnp.float32),   # z1s: pooled conv1 output
            pltpu.VMEM((16, 128), jnp.float32),   # h2s: pool2 horizontal max
            pltpu.VMEM((8, 512), jnp.float32),    # fcin: flattened features
        ],
        compiler_params=pltpu.CompilerParams(
            dimension_semantics=("parallel",)),
    )(xr, prep["t1"], prep["b1r"], prep["t2"], prep["b2r"],
      prep["wf1"], prep["bf1r"], prep["wf2"], prep["bf2r"],
      prep["wc"], prep["bcr"])

    return out[:, 0, :2]


# --------------------------- reference / params ------------------------------

def lenet2_reference(params, x):
    hp = lax.Precision.HIGHEST
    y = lax.conv_general_dilated(x, params["conv1_w"], (1, 1), "VALID",
                                 dimension_numbers=("NCHW", "OIHW", "NCHW"),
                                 precision=hp)
    y = jax.nn.relu(y + params["conv1_b"][None, :, None, None])
    y = lax.reduce_window(y, -jnp.inf, lax.max, (1, 1, 2, 2), (1, 1, 2, 2), "VALID")
    y = lax.conv_general_dilated(y, params["conv2_w"], (1, 1), "VALID",
                                 dimension_numbers=("NCHW", "OIHW", "NCHW"),
                                 precision=hp)
    y = jax.nn.relu(y + params["conv2_b"][None, :, None, None])
    y = lax.reduce_window(y, -jnp.inf, lax.max, (1, 1, 2, 2), (1, 1, 2, 2), "VALID")
    y = y.reshape(y.shape[0], -1)
    y = jax.nn.relu(jnp.dot(y, params["fc1_w"].T, precision=hp) + params["fc1_b"])
    y = jax.nn.relu(jnp.dot(y, params["fc2_w"].T, precision=hp) + params["fc2_b"])
    return jnp.dot(y, params["clf_w"].T, precision=hp) + params["clf_b"]


def init_params(key):
    ks = jax.random.split(key, 10)

    def u(k, shape, fan_in):
        bound = 1.0 / (fan_in ** 0.5)
        return jax.random.uniform(k, shape, jnp.float32, -bound, bound)

    return {
        "conv1_w": u(ks[0], (6, 3, 5, 5), 3 * 5 * 5),
        "conv1_b": u(ks[1], (6,), 3 * 5 * 5),
        "conv2_w": u(ks[2], (16, 6, 5, 5), 6 * 5 * 5),
        "conv2_b": u(ks[3], (16,), 6 * 5 * 5),
        "fc1_w": u(ks[4], (120, 400), 400),
        "fc1_b": u(ks[5], (120,), 400),
        "fc2_w": u(ks[6], (84, 120), 120),
        "fc2_b": u(ks[7], (84,), 120),
        "clf_w": u(ks[8], (2, 84), 84),
        "clf_b": u(ks[9], (2,), 84),
    }


if __name__ == "__main__":
    key = jax.random.PRNGKey(0)
    pkey, xkey = jax.random.split(key)
    params = init_params(pkey)
    # Input must be 32x32 so the backbone yields 16*5*5 = 400 features.
    x = jax.random.normal(xkey, (2, 3, 32, 32), dtype=jnp.float32)

    prep = prepare_params(params)              # one-time weight re-layout
    fwd = jax.jit(lenet2_forward)
    out = jax.block_until_ready(fwd(prep, x))

    ref = jax.block_until_ready(jax.jit(lenet2_reference)(params, x))
    assert out.shape == (2, 2) and out.dtype == jnp.float32
    assert bool(jnp.all(jnp.isfinite(out)))
    assert bool(jnp.allclose(out, ref, rtol=1e-2, atol=1e-2)), (out, ref)
    print("KERNEL_OK")
</pallas_src>

<mosaic_0001>
module attributes {stable_mosaic.version = 11 : i64} {
  func.func @_lenet2_kernel(%arg0: i32, %arg1: memref<1x32x128xf32, #tpu.memory_space<vmem>>, %arg2: memref<5x128x256xf32, #tpu.memory_space<vmem>>, %arg3: memref<1x256xf32, #tpu.memory_space<vmem>>, %arg4: memref<5x128x256xf32, #tpu.memory_space<vmem>>, %arg5: memref<1x256xf32, #tpu.memory_space<vmem>>, %arg6: memref<512x128xf32, #tpu.memory_space<vmem>>, %arg7: memref<1x128xf32, #tpu.memory_space<vmem>>, %arg8: memref<128x128xf32, #tpu.memory_space<vmem>>, %arg9: memref<1x128xf32, #tpu.memory_space<vmem>>, %arg10: memref<128x128xf32, #tpu.memory_space<vmem>>, %arg11: memref<1x128xf32, #tpu.memory_space<vmem>>, %arg12: memref<1x8x128xf32, #tpu.memory_space<vmem>>, %arg13: memref<32x128xf32, #tpu.memory_space<vmem>>, %arg14: memref<16x128xf32, #tpu.memory_space<vmem>>, %arg15: memref<16x128xf32, #tpu.memory_space<vmem>>, %arg16: memref<8x512xf32, #tpu.memory_space<vmem>>) attributes {dimension_semantics = [#tpu.dimension_semantics<parallel>], iteration_bounds = array<i64: 2>, scalar_prefetch = 0 : i64, scratch_operands = 4 : i64, tpu.core_type = #tpu.core_type<tc>, window_params = [{transform_indices = @transform_0, window_bounds = array<i64: 1, 32, 128>}, {pipeline_mode = #tpu.pipeline_mode<synchronous>, transform_indices = @transform_1, window_bounds = array<i64: 5, 128, 256>}, {pipeline_mode = #tpu.pipeline_mode<synchronous>, transform_indices = @transform_2, window_bounds = array<i64: 1, 256>}, {pipeline_mode = #tpu.pipeline_mode<synchronous>, transform_indices = @transform_3, window_bounds = array<i64: 5, 128, 256>}, {pipeline_mode = #tpu.pipeline_mode<synchronous>, transform_indices = @transform_4, window_bounds = array<i64: 1, 256>}, {pipeline_mode = #tpu.pipeline_mode<synchronous>, transform_indices = @transform_5, window_bounds = array<i64: 512, 128>}, {pipeline_mode = #tpu.pipeline_mode<synchronous>, transform_indices = @transform_6, window_bounds = array<i64: 1, 128>}, {pipeline_mode = #tpu.pipeline_mode<synchronous>, transform_indices = @transform_7, window_bounds = array<i64: 128, 128>}, {pipeline_mode = #tpu.pipeline_mode<synchronous>, transform_indices = @transform_8, window_bounds = array<i64: 1, 128>}, {pipeline_mode = #tpu.pipeline_mode<synchronous>, transform_indices = @transform_9, window_bounds = array<i64: 128, 128>}, {pipeline_mode = #tpu.pipeline_mode<synchronous>, transform_indices = @transform_10, window_bounds = array<i64: 1, 128>}, {transform_indices = @transform_11, window_bounds = array<i64: 1, 8, 128>}]} {
    %cst = arith.constant 0.000000e+00 : f32
    %0 = vector.broadcast %cst : f32 to vector<16x128xf32>
    %c0 = arith.constant 0 : index
    %c0_0 = arith.constant 0 : index
    %1 = vector.load %arg14[%c0, %c0_0] : memref<16x128xf32, #tpu.memory_space<vmem>>, vector<16x128xf32>
    tpu.vector_store %arg14[%c0, %c0_0], %0 {strides = array<i32>} : memref<16x128xf32, #tpu.memory_space<vmem>>, vector<16x128xf32>,
    %cst_1 = arith.constant 0.000000e+00 : f32
    %2 = vector.broadcast %cst_1 : f32 to vector<8x512xf32>
    %c0_2 = arith.constant 0 : index
    %c0_3 = arith.constant 0 : index
    %3 = vector.load %arg16[%c0_2, %c0_3] : memref<8x512xf32, #tpu.memory_space<vmem>>, vector<8x512xf32>
    tpu.vector_store %arg16[%c0_2, %c0_3], %2 {strides = array<i32>} : memref<8x512xf32, #tpu.memory_space<vmem>>, vector<8x512xf32>,
    %c0_4 = arith.constant 0 : index
    %c0_5 = arith.constant 0 : index
    %c0_6 = arith.constant 0 : index
    %4 = vector.load %arg1[%c0_4, %c0_5, %c0_6] : memref<1x32x128xf32, #tpu.memory_space<vmem>>, vector<1x32x128xf32>
    %5 = vector.shape_cast %4 : vector<1x32x128xf32> to vector<32x128xf32>
    %6 = vector.extract_strided_slice %5 {offsets = [0, 0], sizes = [28, 128], strides = [1, 1]} : vector<32x128xf32> to vector<28x128xf32>
    %c0_7 = arith.constant 0 : index
    %c0_8 = arith.constant 0 : index
    %c0_9 = arith.constant 0 : index
    %7 = vector.load %arg2[%c0_7, %c0_8, %c0_9] : memref<5x128x256xf32, #tpu.memory_space<vmem>>, vector<1x128x256xf32>
    %8 = vector.shape_cast %7 : vector<1x128x256xf32> to vector<128x256xf32>
    %cst_10 = arith.constant dense<0.000000e+00> : vector<28x256xf32>
    %9 = tpu.matmul %6, %8, %cst_10 {dimension_numbers = #tpu.dot_dimension_numbers<[1], [0], [0], [1], [0, 0, 1, 1], [], []>} : vector<28x128xf32>, vector<128x256xf32>, vector<28x256xf32> -> vector<28x256xf32>
    %10 = vector.extract_strided_slice %5 {offsets = [1, 0], sizes = [28, 128], strides = [1, 1]} : vector<32x128xf32> to vector<28x128xf32>
    %c1 = arith.constant 1 : index
    %c0_11 = arith.constant 0 : index
    %c0_12 = arith.constant 0 : index
    %11 = vector.load %arg2[%c1, %c0_11, %c0_12] : memref<5x128x256xf32, #tpu.memory_space<vmem>>, vector<1x128x256xf32>
    %12 = vector.shape_cast %11 : vector<1x128x256xf32> to vector<128x256xf32>
    %cst_13 = arith.constant dense<0.000000e+00> : vector<28x256xf32>
    %13 = tpu.matmul %10, %12, %cst_13 {dimension_numbers = #tpu.dot_dimension_numbers<[1], [0], [0], [1], [0, 0, 1, 1], [], []>} : vector<28x128xf32>, vector<128x256xf32>, vector<28x256xf32> -> vector<28x256xf32>
    %14 = arith.addf %9, %13 : vector<28x256xf32>
    %15 = vector.extract_strided_slice %5 {offsets = [2, 0], sizes = [28, 128], strides = [1, 1]} : vector<32x128xf32> to vector<28x128xf32>
    %c2 = arith.constant 2 : index
    %c0_14 = arith.constant 0 : index
    %c0_15 = arith.constant 0 : index
    %16 = vector.load %arg2[%c2, %c0_14, %c0_15] : memref<5x128x256xf32, #tpu.memory_space<vmem>>, vector<1x128x256xf32>
    %17 = vector.shape_cast %16 : vector<1x128x256xf32> to vector<128x256xf32>
    %cst_16 = arith.constant dense<0.000000e+00> : vector<28x256xf32>
    %18 = tpu.matmul %15, %17, %cst_16 {dimension_numbers = #tpu.dot_dimension_numbers<[1], [0], [0], [1], [0, 0, 1, 1], [], []>} : vector<28x128xf32>, vector<128x256xf32>, vector<28x256xf32> -> vector<28x256xf32>
    %19 = arith.addf %14, %18 : vector<28x256xf32>
    %20 = vector.extract_strided_slice %5 {offsets = [3, 0], sizes = [28, 128], strides = [1, 1]} : vector<32x128xf32> to vector<28x128xf32>
    %c3 = arith.constant 3 : index
    %c0_17 = arith.constant 0 : index
    %c0_18 = arith.constant 0 : index
    %21 = vector.load %arg2[%c3, %c0_17, %c0_18] : memref<5x128x256xf32, #tpu.memory_space<vmem>>, vector<1x128x256xf32>
    %22 = vector.shape_cast %21 : vector<1x128x256xf32> to vector<128x256xf32>
    %cst_19 = arith.constant dense<0.000000e+00> : vector<28x256xf32>
    %23 = tpu.matmul %20, %22, %cst_19 {dimension_numbers = #tpu.dot_dimension_numbers<[1], [0], [0], [1], [0, 0, 1, 1], [], []>} : vector<28x128xf32>, vector<128x256xf32>, vector<28x256xf32> -> vector<28x256xf32>
    %24 = arith.addf %19, %23 : vector<28x256xf32>
    %25 = vector.extract_strided_slice %5 {offsets = [4, 0], sizes = [28, 128], strides = [1, 1]} : vector<32x128xf32> to vector<28x128xf32>
    %c4 = arith.constant 4 : index
    %c0_20 = arith.constant 0 : index
    %c0_21 = arith.constant 0 : index
    %26 = vector.load %arg2[%c4, %c0_20, %c0_21] : memref<5x128x256xf32, #tpu.memory_space<vmem>>, vector<1x128x256xf32>
    %27 = vector.shape_cast %26 : vector<1x128x256xf32> to vector<128x256xf32>
    %cst_22 = arith.constant dense<0.000000e+00> : vector<28x256xf32>
    %28 = tpu.matmul %25, %27, %cst_22 {dimension_numbers = #tpu.dot_dimension_numbers<[1], [0], [0], [1], [0, 0, 1, 1], [], []>} : vector<28x128xf32>, vector<128x256xf32>, vector<28x256xf32> -> vector<28x256xf32>
    %29 = arith.addf %24, %28 : vector<28x256xf32>
    %c0_23 = arith.constant 0 : index
    %c0_24 = arith.constant 0 : index
    %30 = vector.load %arg3[%c0_23, %c0_24] : memref<1x256xf32, #tpu.memory_space<vmem>>, vector<1x256xf32>
    %31 = vector.broadcast %30 : vector<1x256xf32> to vector<28x256xf32>
    %32 = arith.addf %29, %31 : vector<28x256xf32>
    %cst_25 = arith.constant 0.000000e+00 : f32
    %33 = vector.broadcast %cst_25 : f32 to vector<28x256xf32>
    %34 = arith.maximumf %32, %33 : vector<28x256xf32>
    %35 = vector.extract_strided_slice %34 {offsets = [0, 0], sizes = [28, 6], strides = [1, 1]} : vector<28x256xf32> to vector<28x6xf32>
    %36 = vector.extract_strided_slice %34 {offsets = [0, 6], sizes = [28, 6], strides = [1, 1]} : vector<28x256xf32> to vector<28x6xf32>
    %37 = arith.maximumf %35, %36 : vector<28x6xf32>
    %c0_26 = arith.constant 0 : index
    %c0_27 = arith.constant 0 : index
    %38 = vector.load %arg13[%c0_26, %c0_27] : memref<32x128xf32, #tpu.memory_space<vmem>>, vector<28x6xf32>
    tpu.vector_store %arg13[%c0_26, %c0_27], %37 {strides = array<i32>} : memref<32x128xf32, #tpu.memory_space<vmem>>, vector<28x6xf32>,
    %39 = vector.extract_strided_slice %34 {offsets = [0, 12], sizes = [28, 6], strides = [1, 1]} : vector<28x256xf32> to vector<28x6xf32>
    %40 = vector.extract_strided_slice %34 {offsets = [0, 18], sizes = [28, 6], strides = [1, 1]} : vector<28x256xf32> to vector<28x6xf32>
    %41 = arith.maximumf %39, %40 : vector<28x6xf32>
    %c0_28 = arith.constant 0 : index
    %c6 = arith.constant 6 : index
    %42 = vector.load %arg13[%c0_28, %c6] : memref<32x128xf32, #tpu.memory_space<vmem>>, vector<28x6xf32>
    tpu.vector_store %arg13[%c0_28, %c6], %41 {strides = array<i32>} : memref<32x128xf32, #tpu.memory_space<vmem>>, vector<28x6xf32>,
    %43 = vector.extract_strided_slice %34 {offsets = [0, 24], sizes = [28, 6], strides = [1, 1]} : vector<28x256xf32> to vector<28x6xf32>
    %44 = vector.extract_strided_slice %34 {offsets = [0, 30], sizes = [28, 6], strides = [1, 1]} : vector<28x256xf32> to vector<28x6xf32>
    %45 = arith.maximumf %43, %44 : vector<28x6xf32>
    %c0_29 = arith.constant 0 : index
    %c12 = arith.constant 12 : index
    %46 = vector.load %arg13[%c0_29, %c12] : memref<32x128xf32, #tpu.memory_space<vmem>>, vector<28x6xf32>
    tpu.vector_store %arg13[%c0_29, %c12], %45 {strides = array<i32>} : memref<32x128xf32, #tpu.memory_space<vmem>>, vector<28x6xf32>,
    %47 = vector.extract_strided_slice %34 {offsets = [0, 36], sizes = [28, 6], strides = [1, 1]} : vector<28x256xf32> to vector<28x6xf32>
    %48 = vector.extract_strided_slice %34 {offsets = [0, 42], sizes = [28, 6], strides = [1, 1]} : vector<28x256xf32> to vector<28x6xf32>
    %49 = arith.maximumf %47, %48 : vector<28x6xf32>
    %c0_30 = arith.constant 0 : index
    %c18 = arith.constant 18 : index
    %50 = vector.load %arg13[%c0_30, %c18] : memref<32x128xf32, #tpu.memory_space<vmem>>, vector<28x6xf32>
    tpu.vector_store %arg13[%c0_30, %c18], %49 {strides = array<i32>} : memref<32x128xf32, #tpu.memory_space<vmem>>, vector<28x6xf32>,
    %51 = vector.extract_strided_slice %34 {offsets = [0, 48], sizes = [28, 6], strides = [1, 1]} : vector<28x256xf32> to vector<28x6xf32>
    %52 = vector.extract_strided_slice %34 {offsets = [0, 54], sizes = [28, 6], strides = [1, 1]} : vector<28x256xf32> to vector<28x6xf32>
    %53 = arith.maximumf %51, %52 : vector<28x6xf32>
    %c0_31 = arith.constant 0 : index
    %c24 = arith.constant 24 : index
    %54 = vector.load %arg13[%c0_31, %c24] : memref<32x128xf32, #tpu.memory_space<vmem>>, vector<28x6xf32>
    tpu.vector_store %arg13[%c0_31, %c24], %53 {strides = array<i32>} : memref<32x128xf32, #tpu.memory_space<vmem>>, vector<28x6xf32>,
    %55 = vector.extract_strided_slice %34 {offsets = [0, 60], sizes = [28, 6], strides = [1, 1]} : vector<28x256xf32> to vector<28x6xf32>
    %56 = vector.extract_strided_slice %34 {offsets = [0, 66], sizes = [28, 6], strides = [1, 1]} : vector<28x256xf32> to vector<28x6xf32>
    %57 = arith.maximumf %55, %56 : vector<28x6xf32>
    %c0_32 = arith.constant 0 : index
    %c30 = arith.constant 30 : index
    %58 = vector.load %arg13[%c0_32, %c30] : memref<32x128xf32, #tpu.memory_space<vmem>>, vector<28x6xf32>
    tpu.vector_store %arg13[%c0_32, %c30], %57 {strides = array<i32>} : memref<32x128xf32, #tpu.memory_space<vmem>>, vector<28x6xf32>,
    %59 = vector.extract_strided_slice %34 {offsets = [0, 72], sizes = [28, 6], strides = [1, 1]} : vector<28x256xf32> to vector<28x6xf32>
    %60 = vector.extract_strided_slice %34 {offsets = [0, 78], sizes = [28, 6], strides = [1, 1]} : vector<28x256xf32> to vector<28x6xf32>
    %61 = arith.maximumf %59, %60 : vector<28x6xf32>
    %c0_33 = arith.constant 0 : index
    %c36 = arith.constant 36 : index
    %62 = vector.load %arg13[%c0_33, %c36] : memref<32x128xf32, #tpu.memory_space<vmem>>, vector<28x6xf32>
    tpu.vector_store %arg13[%c0_33, %c36], %61 {strides = array<i32>} : memref<32x128xf32, #tpu.memory_space<vmem>>, vector<28x6xf32>,
    %63 = vector.extract_strided_slice %34 {offsets = [0, 84], sizes = [28, 6], strides = [1, 1]} : vector<28x256xf32> to vector<28x6xf32>
    %64 = vector.extract_strided_slice %34 {offsets = [0, 90], sizes = [28, 6], strides = [1, 1]} : vector<28x256xf32> to vector<28x6xf32>
    %65 = arith.maximumf %63, %64 : vector<28x6xf32>
    %c0_34 = arith.constant 0 : index
    %c42 = arith.constant 42 : index
    %66 = vector.load %arg13[%c0_34, %c42] : memref<32x128xf32, #tpu.memory_space<vmem>>, vector<28x6xf32>
    tpu.vector_store %arg13[%c0_34, %c42], %65 {strides = array<i32>} : memref<32x128xf32, #tpu.memory_space<vmem>>, vector<28x6xf32>,
    %67 = vector.extract_strided_slice %34 {offsets = [0, 96], sizes = [28, 6], strides = [1, 1]} : vector<28x256xf32> to vector<28x6xf32>
    %68 = vector.extract_strided_slice %34 {offsets = [0, 102], sizes = [28, 6], strides = [1, 1]} : vector<28x256xf32> to vector<28x6xf32>
    %69 = arith.maximumf %67, %68 : vector<28x6xf32>
    %c0_35 = arith.constant 0 : index
    %c48 = arith.constant 48 : index
    %70 = vector.load %arg13[%c0_35, %c48] : memref<32x128xf32, #tpu.memory_space<vmem>>, vector<28x6xf32>
    tpu.vector_store %arg13[%c0_35, %c48], %69 {strides = array<i32>} : memref<32x128xf32, #tpu.memory_space<vmem>>, vector<28x6xf32>,
    %71 = vector.extract_strided_slice %34 {offsets = [0, 108], sizes = [28, 6], strides = [1, 1]} : vector<28x256xf32> to vector<28x6xf32>
    %72 = vector.extract_strided_slice %34 {offsets = [0, 114], sizes = [28, 6], strides = [1, 1]} : vector<28x256xf32> to vector<28x6xf32>
    %73 = arith.maximumf %71, %72 : vector<28x6xf32>
    %c0_36 = arith.constant 0 : index
    %c54 = arith.constant 54 : index
    %74 = vector.load %arg13[%c0_36, %c54] : memref<32x128xf32, #tpu.memory_space<vmem>>, vector<28x6xf32>
    tpu.vector_store %arg13[%c0_36, %c54], %73 {strides = array<i32>} : memref<32x128xf32, #tpu.memory_space<vmem>>, vector<28x6xf32>,
    %75 = vector.extract_strided_slice %34 {offsets = [0, 120], sizes = [28, 6], strides = [1, 1]} : vector<28x256xf32> to vector<28x6xf32>
    %76 = vector.extract_strided_slice %34 {offsets = [0, 126], sizes = [28, 6], strides = [1, 1]} : vector<28x256xf32> to vector<28x6xf32>
    %77 = arith.maximumf %75, %76 : vector<28x6xf32>
    %c0_37 = arith.constant 0 : index
    %c60 = arith.constant 60 : index
    %78 = vector.load %arg13[%c0_37, %c60] : memref<32x128xf32, #tpu.memory_space<vmem>>, vector<28x6xf32>
    tpu.vector_store %arg13[%c0_37, %c60], %77 {strides = array<i32>} : memref<32x128xf32, #tpu.memory_space<vmem>>, vector<28x6xf32>,
    %79 = vector.extract_strided_slice %34 {offsets = [0, 132], sizes = [28, 6], strides = [1, 1]} : vector<28x256xf32> to vector<28x6xf32>
    %80 = vector.extract_strided_slice %34 {offsets = [0, 138], sizes = [28, 6], strides = [1, 1]} : vector<28x256xf32> to vector<28x6xf32>
    %81 = arith.maximumf %79, %80 : vector<28x6xf32>
    %c0_38 = arith.constant 0 : index
    %c66 = arith.constant 66 : index
    %82 = vector.load %arg13[%c0_38, %c66] : memref<32x128xf32, #tpu.memory_space<vmem>>, vector<28x6xf32>
    tpu.vector_store %arg13[%c0_38, %c66], %81 {strides = array<i32>} : memref<32x128xf32, #tpu.memory_space<vmem>>, vector<28x6xf32>,
    %83 = vector.extract_strided_slice %34 {offsets = [0, 144], sizes = [28, 6], strides = [1, 1]} : vector<28x256xf32> to vector<28x6xf32>
    %84 = vector.extract_strided_slice %34 {offsets = [0, 150], sizes = [28, 6], strides = [1, 1]} : vector<28x256xf32> to vector<28x6xf32>
    %85 = arith.maximumf %83, %84 : vector<28x6xf32>
    %c0_39 = arith.constant 0 : index
    %c72 = arith.constant 72 : index
    %86 = vector.load %arg13[%c0_39, %c72] : memref<32x128xf32, #tpu.memory_space<vmem>>, vector<28x6xf32>
    tpu.vector_store %arg13[%c0_39, %c72], %85 {strides = array<i32>} : memref<32x128xf32, #tpu.memory_space<vmem>>, vector<28x6xf32>,
    %87 = vector.extract_strided_slice %34 {offsets = [0, 156], sizes = [28, 6], strides = [1, 1]} : vector<28x256xf32> to vector<28x6xf32>
    %88 = vector.extract_strided_slice %34 {offsets = [0, 162], sizes = [28, 6], strides = [1, 1]} : vector<28x256xf32> to vector<28x6xf32>
    %89 = arith.maximumf %87, %88 : vector<28x6xf32>
    %c0_40 = arith.constant 0 : index
    %c78 = arith.constant 78 : index
    %90 = vector.load %arg13[%c0_40, %c78] : memref<32x128xf32, #tpu.memory_space<vmem>>, vector<28x6xf32>
    tpu.vector_store %arg13[%c0_40, %c78], %89 {strides = array<i32>} : memref<32x128xf32, #tpu.memory_space<vmem>>, vector<28x6xf32>,
    %c0_41 = arith.constant 0 : index
    %c0_42 = arith.constant 0 : index
    %91 = vector.load %arg13[%c0_41, %c0_42] : memref<32x128xf32, #tpu.memory_space<vmem>>, vector<1x84xf32>
    %c1_43 = arith.constant 1 : index
    %c0_44 = arith.constant 0 : index
    %92 = vector.load %arg13[%c1_43, %c0_44] : memref<32x128xf32, #tpu.memory_space<vmem>>, vector<1x84xf32>
    %93 = arith.maximumf %91, %92 : vector<1x84xf32>
    %c0_45 = arith.constant 0 : index
    %c0_46 = arith.constant 0 : index
    %94 = vector.load %arg14[%c0_45, %c0_46] : memref<16x128xf32, #tpu.memory_space<vmem>>, vector<1x84xf32>
    tpu.vector_store %arg14[%c0_45, %c0_46], %93 {strides = array<i32>} : memref<16x128xf32, #tpu.memory_space<vmem>>, vector<1x84xf32>,
    %c2_47 = arith.constant 2 : index
    %c0_48 = arith.constant 0 : index
    %95 = vector.load %arg13[%c2_47, %c0_48] : memref<32x128xf32, #tpu.memory_space<vmem>>, vector<1x84xf32>
    %c3_49 = arith.constant 3 : index
    %c0_50 = arith.constant 0 : index
    %96 = vector.load %arg13[%c3_49, %c0_50] : memref<32x128xf32, #tpu.memory_space<vmem>>, vector<1x84xf32>
    %97 = arith.maximumf %95, %96 : vector<1x84xf32>
    %c1_51 = arith.constant 1 : index
    %c0_52 = arith.constant 0 : index
    %98 = vector.load %arg14[%c1_51, %c0_52] : memref<16x128xf32, #tpu.memory_space<vmem>>, vector<1x84xf32>
    tpu.vector_store %arg14[%c1_51, %c0_52], %97 {strides = array<i32>} : memref<16x128xf32, #tpu.memory_space<vmem>>, vector<1x84xf32>,
    %c4_53 = arith.constant 4 : index
    %c0_54 = arith.constant 0 : index
    %99 = vector.load %arg13[%c4_53, %c0_54] : memref<32x128xf32, #tpu.memory_space<vmem>>, vector<1x84xf32>
    %c5 = arith.constant 5 : index
    %c0_55 = arith.constant 0 : index
    %100 = vector.load %arg13[%c5, %c0_55] : memref<32x128xf32, #tpu.memory_space<vmem>>, vector<1x84xf32>
    %101 = arith.maximumf %99, %100 : vector<1x84xf32>
    %c2_56 = arith.constant 2 : index
    %c0_57 = arith.constant 0 : index
    %102 = vector.load %arg14[%c2_56, %c0_57] : memref<16x128xf32, #tpu.memory_space<vmem>>, vector<1x84xf32>
    tpu.vector_store %arg14[%c2_56, %c0_57], %101 {strides = array<i32>} : memref<16x128xf32, #tpu.memory_space<vmem>>, vector<1x84xf32>,
    %c6_58 = arith.constant 6 : index
    %c0_59 = arith.constant 0 : index
    %103 = vector.load %arg13[%c6_58, %c0_59] : memref<32x128xf32, #tpu.memory_space<vmem>>, vector<1x84xf32>
    %c7 = arith.constant 7 : index
    %c0_60 = arith.constant 0 : index
    %104 = vector.load %arg13[%c7, %c0_60] : memref<32x128xf32, #tpu.memory_space<vmem>>, vector<1x84xf32>
    %105 = arith.maximumf %103, %104 : vector<1x84xf32>
    %c3_61 = arith.constant 3 : index
    %c0_62 = arith.constant 0 : index
    %106 = vector.load %arg14[%c3_61, %c0_62] : memref<16x128xf32, #tpu.memory_space<vmem>>, vector<1x84xf32>
    tpu.vector_store %arg14[%c3_61, %c0_62], %105 {strides = array<i32>} : memref<16x128xf32, #tpu.memory_space<vmem>>, vector<1x84xf32>,
    %c8 = arith.constant 8 : index
    %c0_63 = arith.constant 0 : index
    %107 = vector.load %arg13[%c8, %c0_63] : memref<32x128xf32, #tpu.memory_space<vmem>>, vector<1x84xf32>
    %c9 = arith.constant 9 : index
    %c0_64 = arith.constant 0 : index
    %108 = vector.load %arg13[%c9, %c0_64] : memref<32x128xf32, #tpu.memory_space<vmem>>, vector<1x84xf32>
    %109 = arith.maximumf %107, %108 : vector<1x84xf32>
    %c4_65 = arith.constant 4 : index
    %c0_66 = arith.constant 0 : index
    %110 = vector.load %arg14[%c4_65, %c0_66] : memref<16x128xf32, #tpu.memory_space<vmem>>, vector<1x84xf32>
    tpu.vector_store %arg14[%c4_65, %c0_66], %109 {strides = array<i32>} : memref<16x128xf32, #tpu.memory_space<vmem>>, vector<1x84xf32>,
    %c10 = arith.constant 10 : index
    %c0_67 = arith.constant 0 : index
    %111 = vector.load %arg13[%c10, %c0_67] : memref<32x128xf32, #tpu.memory_space<vmem>>, vector<1x84xf32>
    %c11 = arith.constant 11 : index
    %c0_68 = arith.constant 0 : index
    %112 = vector.load %arg13[%c11, %c0_68] : memref<32x128xf32, #tpu.memory_space<vmem>>, vector<1x84xf32>
    %113 = arith.maximumf %111, %112 : vector<1x84xf32>
    %c5_69 = arith.constant 5 : index
    %c0_70 = arith.constant 0 : index
    %114 = vector.load %arg14[%c5_69, %c0_70] : memref<16x128xf32, #tpu.memory_space<vmem>>, vector<1x84xf32>
    tpu.vector_store %arg14[%c5_69, %c0_70], %113 {strides = array<i32>} : memref<16x128xf32, #tpu.memory_space<vmem>>, vector<1x84xf32>,
    %c12_71 = arith.constant 12 : index
    %c0_72 = arith.constant 0 : index
    %115 = vector.load %arg13[%c12_71, %c0_72] : memref<32x128xf32, #tpu.memory_space<vmem>>, vector<1x84xf32>
    %c13 = arith.constant 13 : index
    %c0_73 = arith.constant 0 : index
    %116 = vector.load %arg13[%c13, %c0_73] : memref<32x128xf32, #tpu.memory_space<vmem>>, vector<1x84xf32>
    %117 = arith.maximumf %115, %116 : vector<1x84xf32>
    %c6_74 = arith.constant 6 : index
    %c0_75 = arith.constant 0 : index
    %118 = vector.load %arg14[%c6_74, %c0_75] : memref<16x128xf32, #tpu.memory_space<vmem>>, vector<1x84xf32>
    tpu.vector_store %arg14[%c6_74, %c0_75], %117 {strides = array<i32>} : memref<16x128xf32, #tpu.memory_space<vmem>>, vector<1x84xf32>,
    %c14 = arith.constant 14 : index
    %c0_76 = arith.constant 0 : index
    %119 = vector.load %arg13[%c14, %c0_76] : memref<32x128xf32, #tpu.memory_space<vmem>>, vector<1x84xf32>
    %c15 = arith.constant 15 : index
    %c0_77 = arith.constant 0 : index
    %120 = vector.load %arg13[%c15, %c0_77] : memref<32x128xf32, #tpu.memory_space<vmem>>, vector<1x84xf32>
    %121 = arith.maximumf %119, %120 : vector<1x84xf32>
    %c7_78 = arith.constant 7 : index
    %c0_79 = arith.constant 0 : index
    %122 = vector.load %arg14[%c7_78, %c0_79] : memref<16x128xf32, #tpu.memory_space<vmem>>, vector<1x84xf32>
    tpu.vector_store %arg14[%c7_78, %c0_79], %121 {strides = array<i32>} : memref<16x128xf32, #tpu.memory_space<vmem>>, vector<1x84xf32>,
    %c16 = arith.constant 16 : index
    %c0_80 = arith.constant 0 : index
    %123 = vector.load %arg13[%c16, %c0_80] : memref<32x128xf32, #tpu.memory_space<vmem>>, vector<1x84xf32>
    %c17 = arith.constant 17 : index
    %c0_81 = arith.constant 0 : index
    %124 = vector.load %arg13[%c17, %c0_81] : memref<32x128xf32, #tpu.memory_space<vmem>>, vector<1x84xf32>
    %125 = arith.maximumf %123, %124 : vector<1x84xf32>
    %c8_82 = arith.constant 8 : index
    %c0_83 = arith.constant 0 : index
    %126 = vector.load %arg14[%c8_82, %c0_83] : memref<16x128xf32, #tpu.memory_space<vmem>>, vector<1x84xf32>
    tpu.vector_store %arg14[%c8_82, %c0_83], %125 {strides = array<i32>} : memref<16x128xf32, #tpu.memory_space<vmem>>, vector<1x84xf32>,
    %c18_84 = arith.constant 18 : index
    %c0_85 = arith.constant 0 : index
    %127 = vector.load %arg13[%c18_84, %c0_85] : memref<32x128xf32, #tpu.memory_space<vmem>>, vector<1x84xf32>
    %c19 = arith.constant 19 : index
    %c0_86 = arith.constant 0 : index
    %128 = vector.load %arg13[%c19, %c0_86] : memref<32x128xf32, #tpu.memory_space<vmem>>, vector<1x84xf32>
    %129 = arith.maximumf %127, %128 : vector<1x84xf32>
    %c9_87 = arith.constant 9 : index
    %c0_88 = arith.constant 0 : index
    %130 = vector.load %arg14[%c9_87, %c0_88] : memref<16x128xf32, #tpu.memory_space<vmem>>, vector<1x84xf32>
    tpu.vector_store %arg14[%c9_87, %c0_88], %129 {strides = array<i32>} : memref<16x128xf32, #tpu.memory_space<vmem>>, vector<1x84xf32>,
    %c20 = arith.constant 20 : index
    %c0_89 = arith.constant 0 : index
    %131 = vector.load %arg13[%c20, %c0_89] : memref<32x128xf32, #tpu.memory_space<vmem>>, vector<1x84xf32>
    %c21 = arith.constant 21 : index
    %c0_90 = arith.constant 0 : index
    %132 = vector.load %arg13[%c21, %c0_90] : memref<32x128xf32, #tpu.memory_space<vmem>>, vector<1x84xf32>
    %133 = arith.maximumf %131, %132 : vector<1x84xf32>
    %c10_91 = arith.constant 10 : index
    %c0_92 = arith.constant 0 : index
    %134 = vector.load %arg14[%c10_91, %c0_92] : memref<16x128xf32, #tpu.memory_space<vmem>>, vector<1x84xf32>
    tpu.vector_store %arg14[%c10_91, %c0_92], %133 {strides = array<i32>} : memref<16x128xf32, #tpu.memory_space<vmem>>, vector<1x84xf32>,
    %c22 = arith.constant 22 : index
    %c0_93 = arith.constant 0 : index
    %135 = vector.load %arg13[%c22, %c0_93] : memref<32x128xf32, #tpu.memory_space<vmem>>, vector<1x84xf32>
    %c23 = arith.constant 23 : index
    %c0_94 = arith.constant 0 : index
    %136 = vector.load %arg13[%c23, %c0_94] : memref<32x128xf32, #tpu.memory_space<vmem>>, vector<1x84xf32>
    %137 = arith.maximumf %135, %136 : vector<1x84xf32>
    %c11_95 = arith.constant 11 : index
    %c0_96 = arith.constant 0 : index
    %138 = vector.load %arg14[%c11_95, %c0_96] : memref<16x128xf32, #tpu.memory_space<vmem>>, vector<1x84xf32>
    tpu.vector_store %arg14[%c11_95, %c0_96], %137 {strides = array<i32>} : memref<16x128xf32, #tpu.memory_space<vmem>>, vector<1x84xf32>,
    %c24_97 = arith.constant 24 : index
    %c0_98 = arith.constant 0 : index
    %139 = vector.load %arg13[%c24_97, %c0_98] : memref<32x128xf32, #tpu.memory_space<vmem>>, vector<1x84xf32>
    %c25 = arith.constant 25 : index
    %c0_99 = arith.constant 0 : index
    %140 = vector.load %arg13[%c25, %c0_99] : memref<32x128xf32, #tpu.memory_space<vmem>>, vector<1x84xf32>
    %141 = arith.maximumf %139, %140 : vector<1x84xf32>
    %c12_100 = arith.constant 12 : index
    %c0_101 = arith.constant 0 : index
    %142 = vector.load %arg14[%c12_100, %c0_101] : memref<16x128xf32, #tpu.memory_space<vmem>>, vector<1x84xf32>
    tpu.vector_store %arg14[%c12_100, %c0_101], %141 {strides = array<i32>} : memref<16x128xf32, #tpu.memory_space<vmem>>, vector<1x84xf32>,
    %c26 = arith.constant 26 : index
    %c0_102 = arith.constant 0 : index
    %143 = vector.load %arg13[%c26, %c0_102] : memref<32x128xf32, #tpu.memory_space<vmem>>, vector<1x84xf32>
    %c27 = arith.constant 27 : index
    %c0_103 = arith.constant 0 : index
    %144 = vector.load %arg13[%c27, %c0_103] : memref<32x128xf32, #tpu.memory_space<vmem>>, vector<1x84xf32>
    %145 = arith.maximumf %143, %144 : vector<1x84xf32>
    %c13_104 = arith.constant 13 : index
    %c0_105 = arith.constant 0 : index
    %146 = vector.load %arg14[%c13_104, %c0_105] : memref<16x128xf32, #tpu.memory_space<vmem>>, vector<1x84xf32>
    tpu.vector_store %arg14[%c13_104, %c0_105], %145 {strides = array<i32>} : memref<16x128xf32, #tpu.memory_space<vmem>>, vector<1x84xf32>,
    %c0_106 = arith.constant 0 : index
    %c0_107 = arith.constant 0 : index
    %147 = vector.load %arg14[%c0_106, %c0_107] : memref<16x128xf32, #tpu.memory_space<vmem>>, vector<16x128xf32>
    %148 = vector.extract_strided_slice %147 {offsets = [0, 0], sizes = [10, 128], strides = [1, 1]} : vector<16x128xf32> to vector<10x128xf32>
    %c0_108 = arith.constant 0 : index
    %c0_109 = arith.constant 0 : index
    %c0_110 = arith.constant 0 : index
    %149 = vector.load %arg4[%c0_108, %c0_109, %c0_110] : memref<5x128x256xf32, #tpu.memory_space<vmem>>, vector<1x128x256xf32>
    %150 = vector.shape_cast %149 : vector<1x128x256xf32> to vector<128x256xf32>
    %cst_111 = arith.constant dense<0.000000e+00> : vector<10x256xf32>
    %151 = tpu.matmul %148, %150, %cst_111 {dimension_numbers = #tpu.dot_dimension_numbers<[1], [0], [0], [1], [0, 0, 1, 1], [], []>} : vector<10x128xf32>, vector<128x256xf32>, vector<10x256xf32> -> vector<10x256xf32>
    %152 = vector.extract_strided_slice %147 {offsets = [1, 0], sizes = [10, 128], strides = [1, 1]} : vector<16x128xf32> to vector<10x128xf32>
    %c1_112 = arith.constant 1 : index
    %c0_113 = arith.constant 0 : index
    %c0_114 = arith.constant 0 : index
    %153 = vector.load %arg4[%c1_112, %c0_113, %c0_114] : memref<5x128x256xf32, #tpu.memory_space<vmem>>, vector<1x128x256xf32>
    %154 = vector.shape_cast %153 : vector<1x128x256xf32> to vector<128x256xf32>
    %cst_115 = arith.constant dense<0.000000e+00> : vector<10x256xf32>
    %155 = tpu.matmul %152, %154, %cst_115 {dimension_numbers = #tpu.dot_dimension_numbers<[1], [0], [0], [1], [0, 0, 1, 1], [], []>} : vector<10x128xf32>, vector<128x256xf32>, vector<10x256xf32> -> vector<10x256xf32>
    %156 = arith.addf %151, %155 : vector<10x256xf32>
    %157 = vector.extract_strided_slice %147 {offsets = [2, 0], sizes = [10, 128], strides = [1, 1]} : vector<16x128xf32> to vector<10x128xf32>
    %c2_116 = arith.constant 2 : index
    %c0_117 = arith.constant 0 : index
    %c0_118 = arith.constant 0 : index
    %158 = vector.load %arg4[%c2_116, %c0_117, %c0_118] : memref<5x128x256xf32, #tpu.memory_space<vmem>>, vector<1x128x256xf32>
    %159 = vector.shape_cast %158 : vector<1x128x256xf32> to vector<128x256xf32>
    %cst_119 = arith.constant dense<0.000000e+00> : vector<10x256xf32>
    %160 = tpu.matmul %157, %159, %cst_119 {dimension_numbers = #tpu.dot_dimension_numbers<[1], [0], [0], [1], [0, 0, 1, 1], [], []>} : vector<10x128xf32>, vector<128x256xf32>, vector<10x256xf32> -> vector<10x256xf32>
    %161 = arith.addf %156, %160 : vector<10x256xf32>
    %162 = vector.extract_strided_slice %147 {offsets = [3, 0], sizes = [10, 128], strides = [1, 1]} : vector<16x128xf32> to vector<10x128xf32>
    %c3_120 = arith.constant 3 : index
    %c0_121 = arith.constant 0 : index
    %c0_122 = arith.constant 0 : index
    %163 = vector.load %arg4[%c3_120, %c0_121, %c0_122] : memref<5x128x256xf32, #tpu.memory_space<vmem>>, vector<1x128x256xf32>
    %164 = vector.shape_cast %163 : vector<1x128x256xf32> to vector<128x256xf32>
    %cst_123 = arith.constant dense<0.000000e+00> : vector<10x256xf32>
    %165 = tpu.matmul %162, %164, %cst_123 {dimension_numbers = #tpu.dot_dimension_numbers<[1], [0], [0], [1], [0, 0, 1, 1], [], []>} : vector<10x128xf32>, vector<128x256xf32>, vector<10x256xf32> -> vector<10x256xf32>
    %166 = arith.addf %161, %165 : vector<10x256xf32>
    %167 = vector.extract_strided_slice %147 {offsets = [4, 0], sizes = [10, 128], strides = [1, 1]} : vector<16x128xf32> to vector<10x128xf32>
    %c4_124 = arith.constant 4 : index
    %c0_125 = arith.constant 0 : index
    %c0_126 = arith.constant 0 : index
    %168 = vector.load %arg4[%c4_124, %c0_125, %c0_126] : memref<5x128x256xf32, #tpu.memory_space<vmem>>, vector<1x128x256xf32>
    %169 = vector.shape_cast %168 : vector<1x128x256xf32> to vector<128x256xf32>
    %cst_127 = arith.constant dense<0.000000e+00> : vector<10x256xf32>
    %170 = tpu.matmul %167, %169, %cst_127 {dimension_numbers = #tpu.dot_dimension_numbers<[1], [0], [0], [1], [0, 0, 1, 1], [], []>} : vector<10x128xf32>, vector<128x256xf32>, vector<10x256xf32> -> vector<10x256xf32>
    %171 = arith.addf %166, %170 : vector<10x256xf32>
    %c0_128 = arith.constant 0 : index
    %c0_129 = arith.constant 0 : index
    %172 = vector.load %arg5[%c0_128, %c0_129] : memref<1x256xf32, #tpu.memory_space<vmem>>, vector<1x256xf32>
    %173 = vector.broadcast %172 : vector<1x256xf32> to vector<10x256xf32>
    %174 = arith.addf %171, %173 : vector<10x256xf32>
    %cst_130 = arith.constant 0.000000e+00 : f32
    %175 = vector.broadcast %cst_130 : f32 to vector<10x256xf32>
    %176 = arith.maximumf %174, %175 : vector<10x256xf32>
    %177 = vector.extract_strided_slice %176 {offsets = [0, 0], sizes = [10, 16], strides = [1, 1]} : vector<10x256xf32> to vector<10x16xf32>
    %178 = vector.extract_strided_slice %176 {offsets = [0, 16], sizes = [10, 16], strides = [1, 1]} : vector<10x256xf32> to vector<10x16xf32>
    %179 = arith.maximumf %177, %178 : vector<10x16xf32>
    %c0_131 = arith.constant 0 : index
    %c0_132 = arith.constant 0 : index
    %180 = vector.load %arg15[%c0_131, %c0_132] : memref<16x128xf32, #tpu.memory_space<vmem>>, vector<10x16xf32>
    tpu.vector_store %arg15[%c0_131, %c0_132], %179 {strides = array<i32>} : memref<16x128xf32, #tpu.memory_space<vmem>>, vector<10x16xf32>,
    %181 = vector.extract_strided_slice %176 {offsets = [0, 32], sizes = [10, 16], strides = [1, 1]} : vector<10x256xf32> to vector<10x16xf32>
    %182 = vector.extract_strided_slice %176 {offsets = [0, 48], sizes = [10, 16], strides = [1, 1]} : vector<10x256xf32> to vector<10x16xf32>
    %183 = arith.maximumf %181, %182 : vector<10x16xf32>
    %c0_133 = arith.constant 0 : index
    %c16_134 = arith.constant 16 : index
    %184 = vector.load %arg15[%c0_133, %c16_134] : memref<16x128xf32, #tpu.memory_space<vmem>>, vector<10x16xf32>
    tpu.vector_store %arg15[%c0_133, %c16_134], %183 {strides = array<i32>} : memref<16x128xf32, #tpu.memory_space<vmem>>, vector<10x16xf32>,
    %185 = vector.extract_strided_slice %176 {offsets = [0, 64], sizes = [10, 16], strides = [1, 1]} : vector<10x256xf32> to vector<10x16xf32>
    %186 = vector.extract_strided_slice %176 {offsets = [0, 80], sizes = [10, 16], strides = [1, 1]} : vector<10x256xf32> to vector<10x16xf32>
    %187 = arith.maximumf %185, %186 : vector<10x16xf32>
    %c0_135 = arith.constant 0 : index
    %c32 = arith.constant 32 : index
    %188 = vector.load %arg15[%c0_135, %c32] : memref<16x128xf32, #tpu.memory_space<vmem>>, vector<10x16xf32>
    tpu.vector_store %arg15[%c0_135, %c32], %187 {strides = array<i32>} : memref<16x128xf32, #tpu.memory_space<vmem>>, vector<10x16xf32>,
    %189 = vector.extract_strided_slice %176 {offsets = [0, 96], sizes = [10, 16], strides = [1, 1]} : vector<10x256xf32> to vector<10x16xf32>
    %190 = vector.extract_strided_slice %176 {offsets = [0, 112], sizes = [10, 16], strides = [1, 1]} : vector<10x256xf32> to vector<10x16xf32>
    %191 = arith.maximumf %189, %190 : vector<10x16xf32>
    %c0_136 = arith.constant 0 : index
    %c48_137 = arith.constant 48 : index
    %192 = vector.load %arg15[%c0_136, %c48_137] : memref<16x128xf32, #tpu.memory_space<vmem>>, vector<10x16xf32>
    tpu.vector_store %arg15[%c0_136, %c48_137], %191 {strides = array<i32>} : memref<16x128xf32, #tpu.memory_space<vmem>>, vector<10x16xf32>,
    %193 = vector.extract_strided_slice %176 {offsets = [0, 128], sizes = [10, 16], strides = [1, 1]} : vector<10x256xf32> to vector<10x16xf32>
    %194 = vector.extract_strided_slice %176 {offsets = [0, 144], sizes = [10, 16], strides = [1, 1]} : vector<10x256xf32> to vector<10x16xf32>
    %195 = arith.maximumf %193, %194 : vector<10x16xf32>
    %c0_138 = arith.constant 0 : index
    %c64 = arith.constant 64 : index
    %196 = vector.load %arg15[%c0_138, %c64] : memref<16x128xf32, #tpu.memory_space<vmem>>, vector<10x16xf32>
    tpu.vector_store %arg15[%c0_138, %c64], %195 {strides = array<i32>} : memref<16x128xf32, #tpu.memory_space<vmem>>, vector<10x16xf32>,
    %c0_139 = arith.constant 0 : index
    %c0_140 = arith.constant 0 : index
    %197 = vector.load %arg15[%c0_139, %c0_140] : memref<16x128xf32, #tpu.memory_space<vmem>>, vector<1x80xf32>
    %c1_141 = arith.constant 1 : index
    %c0_142 = arith.constant 0 : index
    %198 = vector.load %arg15[%c1_141, %c0_142] : memref<16x128xf32, #tpu.memory_space<vmem>>, vector<1x80xf32>
    %199 = arith.maximumf %197, %198 : vector<1x80xf32>
    %c0_143 = arith.constant 0 : index
    %c0_144 = arith.constant 0 : index
    %200 = vector.load %arg16[%c0_143, %c0_144] : memref<8x512xf32, #tpu.memory_space<vmem>>, vector<1x80xf32>
    tpu.vector_store %arg16[%c0_143, %c0_144], %199 {strides = array<i32>} : memref<8x512xf32, #tpu.memory_space<vmem>>, vector<1x80xf32>,
    %c2_145 = arith.constant 2 : index
    %c0_146 = arith.constant 0 : index
    %201 = vector.load %arg15[%c2_145, %c0_146] : memref<16x128xf32, #tpu.memory_space<vmem>>, vector<1x80xf32>
    %c3_147 = arith.constant 3 : index
    %c0_148 = arith.constant 0 : index
    %202 = vector.load %arg15[%c3_147, %c0_148] : memref<16x128xf32, #tpu.memory_space<vmem>>, vector<1x80xf32>
    %203 = arith.maximumf %201, %202 : vector<1x80xf32>
    %c0_149 = arith.constant 0 : index
    %c80 = arith.constant 80 : index
    %204 = vector.load %arg16[%c0_149, %c80] : memref<8x512xf32, #tpu.memory_space<vmem>>, vector<1x80xf32>
    tpu.vector_store %arg16[%c0_149, %c80], %203 {strides = array<i32>} : memref<8x512xf32, #tpu.memory_space<vmem>>, vector<1x80xf32>,
    %c4_150 = arith.constant 4 : index
    %c0_151 = arith.constant 0 : index
    %205 = vector.load %arg15[%c4_150, %c0_151] : memref<16x128xf32, #tpu.memory_space<vmem>>, vector<1x80xf32>
    %c5_152 = arith.constant 5 : index
    %c0_153 = arith.constant 0 : index
    %206 = vector.load %arg15[%c5_152, %c0_153] : memref<16x128xf32, #tpu.memory_space<vmem>>, vector<1x80xf32>
    %207 = arith.maximumf %205, %206 : vector<1x80xf32>
    %c0_154 = arith.constant 0 : index
    %c160 = arith.constant 160 : index
    %208 = vector.load %arg16[%c0_154, %c160] : memref<8x512xf32, #tpu.memory_space<vmem>>, vector<1x80xf32>
    tpu.vector_store %arg16[%c0_154, %c160], %207 {strides = array<i32>} : memref<8x512xf32, #tpu.memory_space<vmem>>, vector<1x80xf32>,
    %c6_155 = arith.constant 6 : index
    %c0_156 = arith.constant 0 : index
    %209 = vector.load %arg15[%c6_155, %c0_156] : memref<16x128xf32, #tpu.memory_space<vmem>>, vector<1x80xf32>
    %c7_157 = arith.constant 7 : index
    %c0_158 = arith.constant 0 : index
    %210 = vector.load %arg15[%c7_157, %c0_158] : memref<16x128xf32, #tpu.memory_space<vmem>>, vector<1x80xf32>
    %211 = arith.maximumf %209, %210 : vector<1x80xf32>
    %c0_159 = arith.constant 0 : index
    %c240 = arith.constant 240 : index
    %212 = vector.load %arg16[%c0_159, %c240] : memref<8x512xf32, #tpu.memory_space<vmem>>, vector<1x80xf32>
    tpu.vector_store %arg16[%c0_159, %c240], %211 {strides = array<i32>} : memref<8x512xf32, #tpu.memory_space<vmem>>, vector<1x80xf32>,
    %c8_160 = arith.constant 8 : index
    %c0_161 = arith.constant 0 : index
    %213 = vector.load %arg15[%c8_160, %c0_161] : memref<16x128xf32, #tpu.memory_space<vmem>>, vector<1x80xf32>
    %c9_162 = arith.constant 9 : index
    %c0_163 = arith.constant 0 : index
    %214 = vector.load %arg15[%c9_162, %c0_163] : memref<16x128xf32, #tpu.memory_space<vmem>>, vector<1x80xf32>
    %215 = arith.maximumf %213, %214 : vector<1x80xf32>
    %c0_164 = arith.constant 0 : index
    %c320 = arith.constant 320 : index
    %216 = vector.load %arg16[%c0_164, %c320] : memref<8x512xf32, #tpu.memory_space<vmem>>, vector<1x80xf32>
    tpu.vector_store %arg16[%c0_164, %c320], %215 {strides = array<i32>} : memref<8x512xf32, #tpu.memory_space<vmem>>, vector<1x80xf32>,
    %c0_165 = arith.constant 0 : index
    %c0_166 = arith.constant 0 : index
    %217 = vector.load %arg16[%c0_165, %c0_166] : memref<8x512xf32, #tpu.memory_space<vmem>>, vector<8x512xf32>
    %c0_167 = arith.constant 0 : index
    %c0_168 = arith.constant 0 : index
    %218 = vector.load %arg6[%c0_167, %c0_168] : memref<512x128xf32, #tpu.memory_space<vmem>>, vector<512x128xf32>
    %cst_169 = arith.constant dense<0.000000e+00> : vector<8x128xf32>
    %219 = tpu.matmul %217, %218, %cst_169 {dimension_numbers = #tpu.dot_dimension_numbers<[1], [0], [0], [1], [0, 0, 1, 1], [], []>} : vector<8x512xf32>, vector<512x128xf32>, vector<8x128xf32> -> vector<8x128xf32>
    %c0_170 = arith.constant 0 : index
    %c0_171 = arith.constant 0 : index
    %220 = vector.load %arg7[%c0_170, %c0_171] : memref<1x128xf32, #tpu.memory_space<vmem>>, vector<1x128xf32>
    %221 = vector.broadcast %220 : vector<1x128xf32> to vector<8x128xf32>
    %222 = arith.addf %219, %221 : vector<8x128xf32>
    %cst_172 = arith.constant 0.000000e+00 : f32
    %223 = vector.broadcast %cst_172 : f32 to vector<8x128xf32>
    %224 = arith.maximumf %222, %223 : vector<8x128xf32>
    %c0_173 = arith.constant 0 : index
    %c0_174 = arith.constant 0 : index
    %225 = vector.load %arg8[%c0_173, %c0_174] : memref<128x128xf32, #tpu.memory_space<vmem>>, vector<128x128xf32>
    %cst_175 = arith.constant dense<0.000000e+00> : vector<8x128xf32>
    %226 = tpu.matmul %224, %225, %cst_175 {dimension_numbers = #tpu.dot_dimension_numbers<[1], [0], [0], [1], [0, 0, 1, 1], [], []>} : vector<8x128xf32>, vector<128x128xf32>, vector<8x128xf32> -> vector<8x128xf32>
    %c0_176 = arith.constant 0 : index
    %c0_177 = arith.constant 0 : index
    %227 = vector.load %arg9[%c0_176, %c0_177] : memref<1x128xf32, #tpu.memory_space<vmem>>, vector<1x128xf32>
    %228 = vector.broadcast %227 : vector<1x128xf32> to vector<8x128xf32>
    %229 = arith.addf %226, %228 : vector<8x128xf32>
    %cst_178 = arith.constant 0.000000e+00 : f32
    %230 = vector.broadcast %cst_178 : f32 to vector<8x128xf32>
    %231 = arith.maximumf %229, %230 : vector<8x128xf32>
    %c0_179 = arith.constant 0 : index
    %c0_180 = arith.constant 0 : index
    %232 = vector.load %arg10[%c0_179, %c0_180] : memref<128x128xf32, #tpu.memory_space<vmem>>, vector<128x128xf32>
    %cst_181 = arith.constant dense<0.000000e+00> : vector<8x128xf32>
    %233 = tpu.matmul %231, %232, %cst_181 {dimension_numbers = #tpu.dot_dimension_numbers<[1], [0], [0], [1], [0, 0, 1, 1], [], []>} : vector<8x128xf32>, vector<128x128xf32>, vector<8x128xf32> -> vector<8x128xf32>
    %c0_182 = arith.constant 0 : index
    %c0_183 = arith.constant 0 : index
    %234 = vector.load %arg11[%c0_182, %c0_183] : memref<1x128xf32, #tpu.memory_space<vmem>>, vector<1x128xf32>
    %235 = vector.broadcast %234 : vector<1x128xf32> to vector<8x128xf32>
    %236 = arith.addf %233, %235 : vector<8x128xf32>
    %c0_184 = arith.constant 0 : index
    %c0_185 = arith.constant 0 : index
    %c0_186 = arith.constant 0 : index
    %237 = vector.load %arg12[%c0_184, %c0_185, %c0_186] : memref<1x8x128xf32, #tpu.memory_space<vmem>>, vector<1x8x128xf32>
    %238 = vector.shape_cast %237 : vector<1x8x128xf32> to vector<8x128xf32>
    %239 = vector.shape_cast %236 : vector<8x128xf32> to vector<1x8x128xf32>
    tpu.vector_store %arg12[%c0_184, %c0_185, %c0_186], %239 {strides = array<i32>} : memref<1x8x128xf32, #tpu.memory_space<vmem>>, vector<1x8x128xf32>,
    return
  }
  func.func @transform_0(%arg0: i32) -> (i32, i32, i32) {
    %c0_i32 = arith.constant 0 : i32
    %c0_i32_0 = arith.constant 0 : i32
    %c0_i32_1 = arith.constant 0 : i32
    return %arg0, %c0_i32, %c0_i32_0 : i32, i32, i32
  }
  func.func @transform_1(%arg0: i32) -> (i32, i32, i32) {
    %c0_i32 = arith.constant 0 : i32
    %c0_i32_0 = arith.constant 0 : i32
    %c0_i32_1 = arith.constant 0 : i32
    %c0_i32_2 = arith.constant 0 : i32
    return %c0_i32, %c0_i32_0, %c0_i32_1 : i32, i32, i32
  }
  func.func @transform_2(%arg0: i32) -> (i32, i32) {
    %c0_i32 = arith.constant 0 : i32
    %c0_i32_0 = arith.constant 0 : i32
    %c0_i32_1 = arith.constant 0 : i32
    return %c0_i32, %c0_i32_0 : i32, i32
  }
  func.func @transform_3(%arg0: i32) -> (i32, i32, i32) {
    %c0_i32 = arith.constant 0 : i32
    %c0_i32_0 = arith.constant 0 : i32
    %c0_i32_1 = arith.constant 0 : i32
    %c0_i32_2 = arith.constant 0 : i32
    return %c0_i32, %c0_i32_0, %c0_i32_1 : i32, i32, i32
  }
  func.func @transform_4(%arg0: i32) -> (i32, i32) {
    %c0_i32 = arith.constant 0 : i32
    %c0_i32_0 = arith.constant 0 : i32
    %c0_i32_1 = arith.constant 0 : i32
    return %c0_i32, %c0_i32_0 : i32, i32
  }
  func.func @transform_5(%arg0: i32) -> (i32, i32) {
    %c0_i32 = arith.constant 0 : i32
    %c0_i32_0 = arith.constant 0 : i32
    %c0_i32_1 = arith.constant 0 : i32
    return %c0_i32, %c0_i32_0 : i32, i32
  }
  func.func @transform_6(%arg0: i32) -> (i32, i32) {
    %c0_i32 = arith.constant 0 : i32
    %c0_i32_0 = arith.constant 0 : i32
    %c0_i32_1 = arith.constant 0 : i32
    return %c0_i32, %c0_i32_0 : i32, i32
  }
  func.func @transform_7(%arg0: i32) -> (i32, i32) {
    %c0_i32 = arith.constant 0 : i32
    %c0_i32_0 = arith.constant 0 : i32
    %c0_i32_1 = arith.constant 0 : i32
    return %c0_i32, %c0_i32_0 : i32, i32
  }
  func.func @transform_8(%arg0: i32) -> (i32, i32) {
    %c0_i32 = arith.constant 0 : i32
    %c0_i32_0 = arith.constant 0 : i32
    %c0_i32_1 = arith.constant 0 : i32
    return %c0_i32, %c0_i32_0 : i32, i32
  }
  func.func @transform_9(%arg0: i32) -> (i32, i32) {
    %c0_i32 = arith.constant 0 : i32
    %c0_i32_0 = arith.constant 0 : i32
    %c0_i32_1 = arith.constant 0 : i32
    return %c0_i32, %c0_i32_0 : i32, i32
  }
  func.func @transform_10(%arg0: i32) -> (i32, i32) {
    %c0_i32 = arith.constant 0 : i32
    %c0_i32_0 = arith.constant 0 : i32
    %c0_i32_1 = arith.constant 0 : i32
    return %c0_i32, %c0_i32_0 : i32, i32
  }
  func.func @transform_11(%arg0: i32) -> (i32, i32, i32) {
    %c0_i32 = arith.constant 0 : i32
    %c0_i32_0 = arith.constant 0 : i32
    %c0_i32_1 = arith.constant 0 : i32
    return %arg0, %c0_i32, %c0_i32_0 : i32, i32, i32
  }
}

</mosaic_0001>

<llo_original>
// kernel: lenet2_forward.1
$region0: #{lenet2_forward.1}
  #allocation0 [shape = 'u32[]', space=smem, size = 0x4, offset = 0x4, fixed_abs, tag = 'smem constant byte address 0x4 - core index']
  #allocation1 [shape = 'u32[72,128]{1,0:T(1,128)}', space=vmem, size = 0x9000, scoped, tag = 'internal scratch']
  #allocation2 [shape = 'f32[32,128]{1,0:T(8,128)}', space=vmem, size = 0x4000, scoped, tag = 'scratch operand']
  #allocation3 [shape = 'f32[16,128]{1,0:T(8,128)}', space=vmem, size = 0x2000, scoped, tag = 'scratch operand']
  #allocation4 [shape = 'f32[16,128]{1,0:T(8,128)}', space=vmem, size = 0x2000, scoped, tag = 'scratch operand']
  #allocation5 [shape = 'f32[8,512]{1,0:T(8,128)}', space=vmem, size = 0x4000, scoped, tag = 'scratch operand']
  %s0 = inlined_call_operand.vmem [shape: f32[2,32,128], index: 0, kind: input, shape index: {}]
  %s1 = inlined_call_operand.hbm [shape: f32[5,128,256], index: 1, kind: input, shape index: {}]
  %s2 = inlined_call_operand.vmem [shape: f32[1,256], index: 2, kind: input, shape index: {}]
  %s3 = inlined_call_operand.hbm [shape: f32[5,128,256], index: 3, kind: input, shape index: {}]
  %s4 = inlined_call_operand.vmem [shape: f32[1,256], index: 4, kind: input, shape index: {}]
  %s5 = inlined_call_operand.vmem [shape: f32[512,128], index: 5, kind: input, shape index: {}]
  %s6 = inlined_call_operand.vmem [shape: f32[1,128], index: 6, kind: input, shape index: {}]
  %s7 = inlined_call_operand.vmem [shape: f32[128,128], index: 7, kind: input, shape index: {}]
  %s8 = inlined_call_operand.vmem [shape: f32[1,128], index: 8, kind: input, shape index: {}]
  %s9 = inlined_call_operand.vmem [shape: f32[128,128], index: 9, kind: input, shape index: {}]
  %s10 = inlined_call_operand.vmem [shape: f32[1,128], index: 10, kind: input, shape index: {}]
  %s11 = inlined_call_operand.vmem [shape: f32[2,8,128], index: 11, kind: output, shape index: {}]
  %s12 = sld [smem:[#allocation0]]
  $region85: #{lenet2_forward.1} parent=0
    _
  %s14 = ssub.s32 1, %s12
  %s15 = scalar_select 0, %s14, %s12
  $region1: #{lenet2_forward.1} parent=0
    #allocation6 [shape = 'u8[655360]{0}', space=vmem, size = 0xa0000, scoped, tag = 'input window, operand 1, single buffered']
    #allocation7 [shape = 's32[2]{0}', space=sflag, size = 0x8, scoped, tag = 'scoped memory for lenet2_forward.1']
    #allocation8 [shape = 'u8[655360]{0}', space=vmem, size = 0xa0000, scoped, tag = 'input window, operand 3, single buffered']
    #allocation9 [shape = 's32[1]{0}', space=sflag, size = 0x4, scoped, tag = 'scoped memory for lenet2_forward.1']
    %16 = vsyncpa [#allocation7], 0
    %17 = vsyncpa [#allocation9], 0
    loop: start=0, step=1, limit=4
    $region2: #{lenet2_forward.1} parent=1 // loop_pre_header
      _
    $region3: #{lenet2_forward.1} parent=1 // loop_header
      %s19 = sphi 0, %s23
      %p20 = scmp.ge.s32.totalorder %s19, 4
      %s29 = sphi 0, %s31
      %s32 = sphi 0, %s29
      %s33 = sphi 0, %s32
      %s49 = sphi 0, %s33
      %s53 = sphi 0, %s53
      %s55 = sphi 0, %s53
      %s56 = sphi 0, %s55
      %s70 = sphi 0, %s56
      %s74 = sphi 0, %s74
      %s76 = sphi 0, %s74
      %s77 = sphi 0, %s76
      %s91 = sphi 0, %s77
      %s95 = sphi 0, %s95
      %s97 = sphi 0, %s95
      %s98 = sphi 0, %s97
      %s112 = sphi 0, %s98
      %s116 = sphi 0, %s116
      %s118 = sphi 0, %s116
      %s119 = sphi 0, %s118
      %s133 = sphi 0, %s119
      %s137 = sphi 0, %s137
      %s139 = sphi 0, %s137
      %s140 = sphi 0, %s139
      %s154 = sphi 0, %s140
      %s158 = sphi 0, %s158
      %s160 = sphi 0, %s158
      %s161 = sphi 0, %s160
      %s175 = sphi 0, %s161
      %s179 = sphi 0, %s179
      %s181 = sphi 0, %s179
      %s182 = sphi 0, %s181
      %s196 = sphi 0, %s182
      %s200 = sphi 0, %s200
      %s202 = sphi 0, %s200
      %s203 = sphi 0, %s202
      %s217 = sphi 0, %s203
      %s221 = sphi 0, %s221
      %s223 = sphi 0, %s221
      %s224 = sphi 0, %s223
      %s238 = sphi 0, %s224
      %s242 = sphi 0, %s242
      %s244 = sphi 0, %s242
      %s245 = sphi 0, %s244
      %s259 = sphi 0, %s245
      %s265 = sphi 0, %s267
      %s268 = sphi 0, %s265
      %s269 = sphi 0, %s268
      %s285 = sphi 0, %s269
    $region4: #{lenet2_forward.1} parent=1 // loop_header_branch
      %22 = sbr.rel (%p20) target = $region8
    $region5: #{lenet2_forward.1} parent=1 // loop_body
      %s24 = ssub.s32 %s19, 1
      %s25 = ssub.s32 %s19, 2
      %s26 = sadd.s32 %s19, 1
      %s27 = ssub.s32 %s19, %s26
      %p28 = scmp.eq.s32.totalorder %s27, 0
      %s30 = sadd.s32 %s29, 1
      %s31 = scalar_select %p28, %s29, %s30
      %p34 = pneg %p28
      %p35 = scmp.eq.s32.totalorder %s19, 1
      %p36 = por %p34, %p35
      %p37 = scmp.ne.s32.totalorder %s29, %s32
      %p38 = scmp.eq.s32.totalorder %s19, 0
      %p39 = por %p37, %p38
      %p40 = scmp.ne.s32.totalorder %s29, %s32
      %p41 = scmp.eq.s32.totalorder %s24, 1
      %p42 = por %p40, %p41
      %p43 = scmp.ne.s32.totalorder %s32, %s33
      %p44 = scmp.eq.s32.totalorder %s24, 0
      %p45 = por %p43, %p44
      %p46 = scmp.ne.s32.totalorder %s32, %s33
      %p47 = scmp.eq.s32.totalorder %s25, 1
      %p48 = por %p46, %p47
      %p50 = scmp.ne.s32.totalorder %s33, %s49
      %p51 = scmp.eq.s32.totalorder %s25, 0
      %p52 = por %p50, %p51
      %s54 = sadd.s32 %s53, 1
      %p57 = scmp.eq.s32.totalorder %s19, 1
      %p58 = scmp.ne.s32.totalorder %s53, %s55
      %p59 = scmp.eq.s32.totalorder %s19, 0
      %p60 = por %p58, %p59
      %p61 = scmp.ne.s32.totalorder %s53, %s55
      %p62 = scmp.eq.s32.totalorder %s24, 1
      %p63 = por %p61, %p62
      %p64 = scmp.ne.s32.totalorder %s55, %s56
      %p65 = scmp.eq.s32.totalorder %s24, 0
      %p66 = por %p64, %p65
      %p67 = scmp.ne.s32.totalorder %s55, %s56
      %p68 = scmp.eq.s32.totalorder %s25, 1
      %p69 = por %p67, %p68
      %p71 = scmp.ne.s32.totalorder %s56, %s70
      %p72 = scmp.eq.s32.totalorder %s25, 0
      %p73 = por %p71, %p72
      %s75 = sadd.s32 %s74, 1
      %p78 = scmp.eq.s32.totalorder %s19, 1
      %p79 = scmp.ne.s32.totalorder %s74, %s76
      %p80 = scmp.eq.s32.totalorder %s19, 0
      %p81 = por %p79, %p80
      %p82 = scmp.ne.s32.totalorder %s74, %s76
      %p83 = scmp.eq.s32.totalorder %s24, 1
      %p84 = por %p82, %p83
      %p85 = scmp.ne.s32.totalorder %s76, %s77
      %p86 = scmp.eq.s32.totalorder %s24, 0
      %p87 = por %p85, %p86
      %p88 = scmp.ne.s32.totalorder %s76, %s77
      %p89 = scmp.eq.s32.totalorder %s25, 1
      %p90 = por %p88, %p89
      %p92 = scmp.ne.s32.totalorder %s77, %s91
      %p93 = scmp.eq.s32.totalorder %s25, 0
      %p94 = por %p92, %p93
      %s96 = sadd.s32 %s95, 1
      %p99 = scmp.eq.s32.totalorder %s19, 1
      %p100 = scmp.ne.s32.totalorder %s95, %s97
      %p101 = scmp.eq.s32.totalorder %s19, 0
      %p102 = por %p100, %p101
      %p103 = scmp.ne.s32.totalorder %s95, %s97
      %p104 = scmp.eq.s32.totalorder %s24, 1
      %p105 = por %p103, %p104
      %p106 = scmp.ne.s32.totalorder %s97, %s98
      %p107 = scmp.eq.s32.totalorder %s24, 0
      %p108 = por %p106, %p107
      %p109 = scmp.ne.s32.totalorder %s97, %s98
      %p110 = scmp.eq.s32.totalorder %s25, 1
      %p111 = por %p109, %p110
      %p113 = scmp.ne.s32.totalorder %s98, %s112
      %p114 = scmp.eq.s32.totalorder %s25, 0
      %p115 = por %p113, %p114
      %s117 = sadd.s32 %s116, 1
      %p120 = scmp.eq.s32.totalorder %s19, 1
      %p121 = scmp.ne.s32.totalorder %s116, %s118
      %p122 = scmp.eq.s32.totalorder %s19, 0
      %p123 = por %p121, %p122
      %p124 = scmp.ne.s32.totalorder %s116, %s118
      %p125 = scmp.eq.s32.totalorder %s24, 1
      %p126 = por %p124, %p125
      %p127 = scmp.ne.s32.totalorder %s118, %s119
      %p128 = scmp.eq.s32.totalorder %s24, 0
      %p129 = por %p127, %p128
      %p130 = scmp.ne.s32.totalorder %s118, %s119
      %p131 = scmp.eq.s32.totalorder %s25, 1
      %p132 = por %p130, %p131
      %p134 = scmp.ne.s32.totalorder %s119, %s133
      %p135 = scmp.eq.s32.totalorder %s25, 0
      %p136 = por %p134, %p135
      %s138 = sadd.s32 %s137, 1
      %p141 = scmp.eq.s32.totalorder %s19, 1
      %p142 = scmp.ne.s32.totalorder %s137, %s139
      %p143 = scmp.eq.s32.totalorder %s19, 0
      %p144 = por %p142, %p143
      %p145 = scmp.ne.s32.totalorder %s137, %s139
      %p146 = scmp.eq.s32.totalorder %s24, 1
      %p147 = por %p145, %p146
      %p148 = scmp.ne.s32.totalorder %s139, %s140
      %p149 = scmp.eq.s32.totalorder %s24, 0
      %p150 = por %p148, %p149
      %p151 = scmp.ne.s32.totalorder %s139, %s140
      %p152 = scmp.eq.s32.totalorder %s25, 1
      %p153 = por %p151, %p152
      %p155 = scmp.ne.s32.totalorder %s140, %s154
      %p156 = scmp.eq.s32.totalorder %s25, 0
      %p157 = por %p155, %p156
      %s159 = sadd.s32 %s158, 1
      %p162 = scmp.eq.s32.totalorder %s19, 1
      %p163 = scmp.ne.s32.totalorder %s158, %s160
      %p164 = scmp.eq.s32.totalorder %s19, 0
      %p165 = por %p163, %p164
      %p166 = scmp.ne.s32.totalorder %s158, %s160
      %p167 = scmp.eq.s32.totalorder %s24, 1
      %p168 = por %p166, %p167
      %p169 = scmp.ne.s32.totalorder %s160, %s161
      %p170 = scmp.eq.s32.totalorder %s24, 0
      %p171 = por %p169, %p170
      %p172 = scmp.ne.s32.totalorder %s160, %s161
      %p173 = scmp.eq.s32.totalorder %s25, 1
      %p174 = por %p172, %p173
      %p176 = scmp.ne.s32.totalorder %s161, %s175
      %p177 = scmp.eq.s32.totalorder %s25, 0
      %p178 = por %p176, %p177
      %s180 = sadd.s32 %s179, 1
      %p183 = scmp.eq.s32.totalorder %s19, 1
      %p184 = scmp.ne.s32.totalorder %s179, %s181
      %p185 = scmp.eq.s32.totalorder %s19, 0
      %p186 = por %p184, %p185
      %p187 = scmp.ne.s32.totalorder %s179, %s181
      %p188 = scmp.eq.s32.totalorder %s24, 1
      %p189 = por %p187, %p188
      %p190 = scmp.ne.s32.totalorder %s181, %s182
      %p191 = scmp.eq.s32.totalorder %s24, 0
      %p192 = por %p190, %p191
      %p193 = scmp.ne.s32.totalorder %s181, %s182
      %p194 = scmp.eq.s32.totalorder %s25, 1
      %p195 = por %p193, %p194
      %p197 = scmp.ne.s32.totalorder %s182, %s196
      %p198 = scmp.eq.s32.totalorder %s25, 0
      %p199 = por %p197, %p198
      %s201 = sadd.s32 %s200, 1
      %p204 = scmp.eq.s32.totalorder %s19, 1
      %p205 = scmp.ne.s32.totalorder %s200, %s202
      %p206 = scmp.eq.s32.totalorder %s19, 0
      %p207 = por %p205, %p206
      %p208 = scmp.ne.s32.totalorder %s200, %s202
      %p209 = scmp.eq.s32.totalorder %s24, 1
      %p210 = por %p208, %p209
      %p211 = scmp.ne.s32.totalorder %s202, %s203
      %p212 = scmp.eq.s32.totalorder %s24, 0
      %p213 = por %p211, %p212
      %p214 = scmp.ne.s32.totalorder %s202, %s203
      %p215 = scmp.eq.s32.totalorder %s25, 1
      %p216 = por %p214, %p215
      %p218 = scmp.ne.s32.totalorder %s203, %s217
      %p219 = scmp.eq.s32.totalorder %s25, 0
      %p220 = por %p218, %p219
      %s222 = sadd.s32 %s221, 1
      %p225 = scmp.eq.s32.totalorder %s19, 1
      %p226 = scmp.ne.s32.totalorder %s221, %s223
      %p227 = scmp.eq.s32.totalorder %s19, 0
      %p228 = por %p226, %p227
      %p229 = scmp.ne.s32.totalorder %s221, %s223
      %p230 = scmp.eq.s32.totalorder %s24, 1
      %p231 = por %p229, %p230
      %p232 = scmp.ne.s32.totalorder %s223, %s224
      %p233 = scmp.eq.s32.totalorder %s24, 0
      %p234 = por %p232, %p233
      %p235 = scmp.ne.s32.totalorder %s223, %s224
      %p236 = scmp.eq.s32.totalorder %s25, 1
      %p237 = por %p235, %p236
      %p239 = scmp.ne.s32.totalorder %s224, %s238
      %p240 = scmp.eq.s32.totalorder %s25, 0
      %p241 = por %p239, %p240
      %s243 = sadd.s32 %s242, 1
      %p246 = scmp.eq.s32.totalorder %s19, 1
      %p247 = scmp.ne.s32.totalorder %s242, %s244
      %p248 = scmp.eq.s32.totalorder %s19, 0
      %p249 = por %p247, %p248
      %p250 = scmp.ne.s32.totalorder %s242, %s244
      %p251 = scmp.eq.s32.totalorder %s24, 1
      %p252 = por %p250, %p251
      %p253 = scmp.ne.s32.totalorder %s244, %s245
      %p254 = scmp.eq.s32.totalorder %s24, 0
      %p255 = por %p253, %p254
      %p256 = scmp.ne.s32.totalorder %s244, %s245
      %p257 = scmp.eq.s32.totalorder %s25, 1
      %p258 = por %p256, %p257
      %p260 = scmp.ne.s32.totalorder %s245, %s259
      %p261 = scmp.eq.s32.totalorder %s25, 0
      %p262 = por %p260, %p261
      %s263 = ssub.s32 %s19, %s26
      %p264 = scmp.eq.s32.totalorder %s263, 0
      %s266 = sadd.s32 %s265, 1
      %s267 = scalar_select %p264, %s265, %s266
      %p270 = pneg %p264
      %p271 = scmp.eq.s32.totalorder %s19, 1
      %p272 = por %p270, %p271
      %p273 = scmp.ne.s32.totalorder %s265, %s268
      %p274 = scmp.eq.s32.totalorder %s19, 0
      %p275 = por %p273, %p274
      %p276 = scmp.ne.s32.totalorder %s265, %s268
      %p277 = scmp.eq.s32.totalorder %s24, 1
      %p278 = por %p276, %p277
      %p279 = scmp.ne.s32.totalorder %s268, %s269
      %p280 = scmp.eq.s32.totalorder %s24, 0
      %p281 = por %p279, %p280
      %p282 = scmp.ne.s32.totalorder %s268, %s269
      %p283 = scmp.eq.s32.totalorder %s25, 1
      %p284 = por %p282, %p283
      %p286 = scmp.ne.s32.totalorder %s269, %s285
      %p287 = scmp.eq.s32.totalorder %s25, 0
      %p288 = por %p286, %p287
      %p289 = scmp.le.s32.totalorder 1, %s19
      %p290 = scmp.lt.s32.totalorder %s19, 3
      %p291 = pnand %p289, %p290
      %p292 = pneg %p291
      // Predicated region
      $region9: #{lenet2_forward.1} parent=5 // pred_check
        _
      $region10: #{lenet2_forward.1} parent=5 // pred_check_branch
        %294 = sbr.rel (%p291) target = $region12
      $region11: #{lenet2_forward.1} parent=5 // pred_region
        %s295 = ssub.s32 %s19, 1
        // Predicated region
        $region13: #{lenet2_forward.1} parent=11 // pred_check
          %p296 = pneg %p66
        $region14: #{lenet2_forward.1} parent=11 // pred_check_branch
          %298 = sbr.rel (%p296) target = $region16
        $region15: #{lenet2_forward.1} parent=11 // pred_region
          %300 = vsyncadd [#allocation7], 0
          %s301 = sshll.u32 %s1, 4
          %s302 = int_to_ptr.hbm [resolvable:$true] %s301
          %s303 = sshll.u32 [#allocation6], 4
          %s304 = int_to_ptr.vmem [resolvable:$true] %s303
          %309 = dma.hbm_to_vmem [thread:$0]  %s302, 20480, %s304, [#allocation7], 256, 256, 16
        $region16: #{lenet2_forward.1} parent=11 // pred_fallthru
          _
        // Predicated region
        $region17: #{lenet2_forward.1} parent=11 // pred_check
          %p310 = pneg %p87
        $region18: #{lenet2_forward.1} parent=11 // pred_check_branch
          %312 = sbr.rel (%p310) target = $region20
        $region19: #{lenet2_forward.1} parent=11 // pred_region
          _
        $region20: #{lenet2_forward.1} parent=11 // pred_fallthru
          _
        // Predicated region
        $region21: #{lenet2_forward.1} parent=11 // pred_check
          %p313 = pneg %p108
        $region22: #{lenet2_forward.1} parent=11 // pred_check_branch
          %315 = sbr.rel (%p313) target = $region24
        $region23: #{lenet2_forward.1} parent=11 // pred_region
          %317 = vsyncadd [#allocation9], 0
          %s318 = sshll.u32 %s3, 4
          %s319 = int_to_ptr.hbm [resolvable:$true] %s318
          %s320 = sshll.u32 [#allocation8], 4
          %s321 = int_to_ptr.vmem [resolvable:$true] %s320
          %326 = dma.hbm_to_vmem [thread:$0]  %s319, 20480, %s321, [#allocation9], 256, 256, 16
        $region24: #{lenet2_forward.1} parent=11 // pred_fallthru
          _
        // Predicated region
        $region25: #{lenet2_forward.1} parent=11 // pred_check
          %p327 = pneg %p129
        $region26: #{lenet2_forward.1} parent=11 // pred_check_branch
          %329 = sbr.rel (%p327) target = $region28
        $region27: #{lenet2_forward.1} parent=11 // pred_region
          _
        $region28: #{lenet2_forward.1} parent=11 // pred_fallthru
          _
        // Predicated region
        $region29: #{lenet2_forward.1} parent=11 // pred_check
          %p330 = pneg %p150
        $region30: #{lenet2_forward.1} parent=11 // pred_check_branch
          %332 = sbr.rel (%p330) target = $region32
        $region31: #{lenet2_forward.1} parent=11 // pred_region
          _
        $region32: #{lenet2_forward.1} parent=11 // pred_fallthru
          _
        // Predicated region
        $region33: #{lenet2_forward.1} parent=11 // pred_check
          %p333 = pneg %p171
        $region34: #{lenet2_forward.1} parent=11 // pred_check_branch
          %335 = sbr.rel (%p333) target = $region36
        $region35: #{lenet2_forward.1} parent=11 // pred_region
          _
        $region36: #{lenet2_forward.1} parent=11 // pred_fallthru
          _
        // Predicated region
        $region37: #{lenet2_forward.1} parent=11 // pred_check
          %p336 = pneg %p192
        $region38: #{lenet2_forward.1} parent=11 // pred_check_branch
          %338 = sbr.rel (%p336) target = $region40
        $region39: #{lenet2_forward.1} parent=11 // pred_region
          _
        $region40: #{lenet2_forward.1} parent=11 // pred_fallthru
          _
        // Predicated region
        $region41: #{lenet2_forward.1} parent=11 // pred_check
          %p339 = pneg %p213
        $region42: #{lenet2_forward.1} parent=11 // pred_check_branch
          %341 = sbr.rel (%p339) target = $region44
        $region43: #{lenet2_forward.1} parent=11 // pred_region
          _
        $region44: #{lenet2_forward.1} parent=11 // pred_fallthru
          _
        // Predicated region
        $region45: #{lenet2_forward.1} parent=11 // pred_check
          %p342 = pneg %p234
        $region46: #{lenet2_forward.1} parent=11 // pred_check_branch
          %344 = sbr.rel (%p342) target = $region48
        $region47: #{lenet2_forward.1} parent=11 // pred_region
          _
        $region48: #{lenet2_forward.1} parent=11 // pred_fallthru
          _
        // Predicated region
        $region49: #{lenet2_forward.1} parent=11 // pred_check
          %p345 = pneg %p255
        $region50: #{lenet2_forward.1} parent=11 // pred_check_branch
          %347 = sbr.rel (%p345) target = $region52
        $region51: #{lenet2_forward.1} parent=11 // pred_region
          _
        $region52: #{lenet2_forward.1} parent=11 // pred_fallthru
          _
      $region12: #{lenet2_forward.1} parent=5 // pred_fallthru
        _
      %p348 = scmp.lt.s32.totalorder %s19, 2
      // Predicated region
      $region53: #{lenet2_forward.1} parent=5 // pred_check
        %p349 = pneg %p348
      $region54: #{lenet2_forward.1} parent=5 // pred_check_branch
        %351 = sbr.rel (%p349) target = $region56
      $region55: #{lenet2_forward.1} parent=5 // pred_region
        // Predicated region
        $region57: #{lenet2_forward.1} parent=55 // pred_check
          %p352 = pneg %p39
        $region58: #{lenet2_forward.1} parent=55 // pred_check_branch
          %354 = sbr.rel (%p352) target = $region60
        $region59: #{lenet2_forward.1} parent=55 // pred_region
          %p355 = scmp.lt.s32.totalorder %s19, 1
          %s356 = scalar_select %p355, %s19, 1
          %s357 = smul.addr %s356, 4
          %s358 = smul.addr %s357, 8
          %s359 = scalar_lea.vmem %s0, %s358
        $region60: #{lenet2_forward.1} parent=55 // pred_fallthru
          _
      $region56: #{lenet2_forward.1} parent=5 // pred_fallthru
        _
      %p360 = scmp.le.s32.totalorder 1, %s19
      %p361 = scmp.lt.s32.totalorder %s19, 3
      %p362 = pnand %p360, %p361
      %p363 = pneg %p362
      // Predicated region
      $region61: #{lenet2_forward.1} parent=5 // pred_check
        _
      $region62: #{lenet2_forward.1} parent=5 // pred_check_branch
        %365 = sbr.rel (%p362) target = $region64
      $region63: #{lenet2_forward.1} parent=5 // pred_region
        %s366 = ssub.s32 %s19, 1
        // Predicated region
        $region65: #{lenet2_forward.1} parent=63 // pred_check
          %p367 = pneg %p66
        $region66: #{lenet2_forward.1} parent=63 // pred_check_branch
          %369 = sbr.rel (%p367) target = $region68
        $region67: #{lenet2_forward.1} parent=63 // pred_region
          %371 = dma.done [#allocation7], 20480
        $region68: #{lenet2_forward.1} parent=63 // pred_fallthru
          _
        // Predicated region
        $region69: #{lenet2_forward.1} parent=63 // pred_check
          %p372 = pneg %p108
        $region70: #{lenet2_forward.1} parent=63 // pred_check_branch
          %374 = sbr.rel (%p372) target = $region72
        $region71: #{lenet2_forward.1} parent=63 // pred_region
          %376 = dma.done [#allocation9], 20480
        $region72: #{lenet2_forward.1} parent=63 // pred_fallthru
          _
        %p377 = scmp.lt.s32.totalorder %s24, 1
        %s378 = scalar_select %p377, %s24, 1
        %s379 = smul.addr %s378, 4
        %s380 = smul.addr %s379, 8
        %s381 = scalar_lea.vmem %s0, %s380
        %p382 = pneg %p45
        %p383 = pneg %p42
        %p384 = pneg %p66
        %p385 = pneg %p63
        %p386 = pneg %p87
        %p387 = pneg %p84
        %p388 = pneg %p108
        %p389 = pneg %p105
        %p390 = pneg %p129
        %p391 = pneg %p126
        %p392 = pneg %p150
        %p393 = pneg %p147
        %p394 = pneg %p171
        %p395 = pneg %p168
        %p396 = pneg %p192
        %p397 = pneg %p189
        %p398 = pneg %p213
        %p399 = pneg %p210
        %p400 = pneg %p234
        %p401 = pneg %p231
        %p402 = pneg %p255
        %p403 = pneg %p252
        %p404 = pneg %p281
        %p405 = pneg %p278
        %p406 = scmp.lt.s32.totalorder %s24, 1
        %s407 = scalar_select %p406, %s24, 1
        %s408 = smul.addr %s407, 8
        %s409 = scalar_lea.vmem %s11, %s408
        %p410 = scmp.lt.s32.totalorder %s24, 1
        %s411 = scalar_select %p410, %s24, 1
        %s412 = smul.addr %s411, 4
        %s413 = smul.addr %s412, 8
        %s414 = scalar_lea.vmem %s0, %s413
        %p415 = scmp.lt.s32.totalorder %s24, 1
        %s416 = scalar_select %p415, %s24, 1
        %s417 = smul.addr %s416, 8
        %s418 = scalar_lea.vmem %s11, %s417
        %419 = vst [vmem:[#allocation3] sm:$0xff] 0.0
        %420 = vst [vmem:[#allocation3 + $0x8] sm:$0xff] 0.0
        %421 = vst [vmem:[#allocation5] sm:$0xff] 0.0
        %422 = vst [vmem:[#allocation5 + $0x8] sm:$0xff] 0.0
        %423 = vst [vmem:[#allocation5 + $0x10] sm:$0xff] 0.0
        %424 = vst [vmem:[#allocation5 + $0x18] sm:$0xff] 0.0
        %v425 = vld [vmem:[%s414] sm:$0xff]
        %v426 = vld [vmem:[%s414 + $0x8] sm:$0xff]
        %v427 = vld [vmem:[%s414 + $0x10] sm:$0xff]
        %v428 = vld [vmem:[%s414 + $0x18] sm:$0xff]
        %v429 = vld [vmem:[#allocation6] sm:$0xff]
        %v430 = vld [vmem:[#allocation6 + $0x8] sm:$0xff]
        %v431 = vld [vmem:[#allocation6 + $0x10] sm:$0xff]
        %v432 = vld [vmem:[#allocation6 + $0x18] sm:$0xff]
        %v433 = vld [vmem:[#allocation6 + $0x20] sm:$0xff]
        %v434 = vld [vmem:[#allocation6 + $0x28] sm:$0xff]
        %v435 = vld [vmem:[#allocation6 + $0x30] sm:$0xff]
        %v436 = vld [vmem:[#allocation6 + $0x38] sm:$0xff]
        %v437 = vld [vmem:[#allocation6 + $0x40] sm:$0xff]
        %v438 = vld [vmem:[#allocation6 + $0x48] sm:$0xff]
        %v439 = vld [vmem:[#allocation6 + $0x50] sm:$0xff]
        %v440 = vld [vmem:[#allocation6 + $0x58] sm:$0xff]
        %v441 = vld [vmem:[#allocation6 + $0x60] sm:$0xff]
        %v442 = vld [vmem:[#allocation6 + $0x68] sm:$0xff]
        %v443 = vld [vmem:[#allocation6 + $0x70] sm:$0xff]
        %v444 = vld [vmem:[#allocation6 + $0x78] sm:$0xff]
        %v445 = vld [vmem:[#allocation6 + $0x80] sm:$0xff]
        %v446 = vld [vmem:[#allocation6 + $0x88] sm:$0xff]
        %v447 = vld [vmem:[#allocation6 + $0x90] sm:$0xff]
        %v448 = vld [vmem:[#allocation6 + $0x98] sm:$0xff]
        %v449 = vld [vmem:[#allocation6 + $0xa0] sm:$0xff]
        %v450 = vld [vmem:[#allocation6 + $0xa8] sm:$0xff]
        %v451 = vld [vmem:[#allocation6 + $0xb0] sm:$0xff]
        %v452 = vld [vmem:[#allocation6 + $0xb8] sm:$0xff]
        %v453 = vld [vmem:[#allocation6 + $0xc0] sm:$0xff]
        %v454 = vld [vmem:[#allocation6 + $0xc8] sm:$0xff]
        %v455 = vld [vmem:[#allocation6 + $0xd0] sm:$0xff]
        %v456 = vld [vmem:[#allocation6 + $0xd8] sm:$0xff]
        %v457 = vld [vmem:[#allocation6 + $0xe0] sm:$0xff]
        %v458 = vld [vmem:[#allocation6 + $0xe8] sm:$0xff]
        %v459 = vld [vmem:[#allocation6 + $0xf0] sm:$0xff]
        %v460 = vld [vmem:[#allocation6 + $0xf8] sm:$0xff]
        %s461 = scalar_lea.vmem [#allocation6], 256
        %v462 = vld [vmem:[%s461] sm:$0xff]
        %v463 = vld [vmem:[%s461 + $0x8] sm:$0xff]
        %v464 = vld [vmem:[%s461 + $0x10] sm:$0xff]
        %v465 = vld [vmem:[%s461 + $0x18] sm:$0xff]
        %v466 = vld [vmem:[%s461 + $0x20] sm:$0xff]
        %v467 = vld [vmem:[%s461 + $0x28] sm:$0xff]
        %v468 = vld [vmem:[%s461 + $0x30] sm:$0xff]
        %v469 = vld [vmem:[%s461 + $0x38] sm:$0xff]
        %v470 = vld [vmem:[%s461 + $0x40] sm:$0xff]
        %v471 = vld [vmem:[%s461 + $0x48] sm:$0xff]
        %v472 = vld [vmem:[%s461 + $0x50] sm:$0xff]
        %v473 = vld [vmem:[%s461 + $0x58] sm:$0xff]
        %v474 = vld [vmem:[%s461 + $0x60] sm:$0xff]
        %v475 = vld [vmem:[%s461 + $0x68] sm:$0xff]
        %v476 = vld [vmem:[%s461 + $0x70] sm:$0xff]
        %v477 = vld [vmem:[%s461 + $0x78] sm:$0xff]
        %v478 = vld [vmem:[%s461 + $0x80] sm:$0xff]
        %v479 = vld [vmem:[%s461 + $0x88] sm:$0xff]
        %v480 = vld [vmem:[%s461 + $0x90] sm:$0xff]
        %v481 = vld [vmem:[%s461 + $0x98] sm:$0xff]
        %v482 = vld [vmem:[%s461 + $0xa0] sm:$0xff]
        %v483 = vld [vmem:[%s461 + $0xa8] sm:$0xff]
        %v484 = vld [vmem:[%s461 + $0xb0] sm:$0xff]
        %v485 = vld [vmem:[%s461 + $0xb8] sm:$0xff]
        %v486 = vld [vmem:[%s461 + $0xc0] sm:$0xff]
        %v487 = vld [vmem:[%s461 + $0xc8] sm:$0xff]
        %v488 = vld [vmem:[%s461 + $0xd0] sm:$0xff]
        %v489 = vld [vmem:[%s461 + $0xd8] sm:$0xff]
        %v490 = vld [vmem:[%s461 + $0xe0] sm:$0xff]
        %v491 = vld [vmem:[%s461 + $0xe8] sm:$0xff]
        %v492 = vld [vmem:[%s461 + $0xf0] sm:$0xff]
        %v493 = vld [vmem:[%s461 + $0xf8] sm:$0xff]
        %vm498 = vcmask 1046528
        %v499 = vrot.slane %v425, 1
        %v500 = vrot.slane %v426, 1
        %v501 = vsel %vm498, %v499, %v500
        %v502 = vrot.slane %v427, 1
        %v503 = vsel %vm498, %v500, %v502
        %v504 = vrot.slane %v428, 1
        %v505 = vsel %vm498, %v502, %v504
        %510 = vmatpush.msra.mxu0 %v492
        %511 = vmatpush.msra.mxu0 %v490
        %512 = vmatpush.msra.mxu0 %v488
        %513 = vmatpush.msra.mxu0 %v486
        %514 = vmatpush.msra.mxu0 %v484
        %515 = vmatpush.msra.mxu0 %v482
        %516 = vmatpush.msra.mxu0 %v480
        %517 = vmatpush.msra.mxu0 %v478
        %518 = vmatpush.msra.mxu0 %v476
        %519 = vmatpush.msra.mxu0 %v474
        %520 = vmatpush.msra.mxu0 %v472
        %521 = vmatpush.msra.mxu0 %v470
        %522 = vmatpush.msra.mxu0 %v468
        %523 = vmatpush.msra.mxu0 %v466
        %524 = vmatpush.msra.mxu0 %v464
        %525 = vmatpush.msra.mxu0 %v462
        %526 = vmatmul.f32.gmra.mxu0 %v501
        %v527 = vpop.f32.mrf.mxu0
        %v528 = vadd.f32 0.0, %v527
        %529 = vmatmul.f32.gmra.mxu0 %v503
        %v530 = vpop.f32.mrf.mxu0
        %v531 = vadd.f32 0.0, %v530
        %532 = vmatmul.f32.gmra.mxu0 %v505
        %v533 = vpop.f32.mrf.mxu0
        %v534 = vadd.f32 0.0, %v533
        %535 = vmatmul.f32.gmra.mxu0 %v504
        %v536 = vpop.f32.mrf.mxu0
        %v537 = vadd.f32 0.0, %v536
        %538 = vdwg.mxu0
        %539 = vmatpush.msra.mxu0 %v493
        %540 = vmatpush.msra.mxu0 %v491
        %541 = vmatpush.msra.mxu0 %v489
        %542 = vmatpush.msra.mxu0 %v487
        %543 = vmatpush.msra.mxu0 %v485
        %544 = vmatpush.msra.mxu0 %v483
        %545 = vmatpush.msra.mxu0 %v481
        %546 = vmatpush.msra.mxu0 %v479
        %547 = vmatpush.msra.mxu0 %v477
        %548 = vmatpush.msra.mxu0 %v475
        %549 = vmatpush.msra.mxu0 %v473
        %550 = vmatpush.msra.mxu0 %v471
        %551 = vmatpush.msra.mxu0 %v469
        %552 = vmatpush.msra.mxu0 %v467
        %553 = vmatpush.msra.mxu0 %v465
        %554 = vmatpush.msra.mxu0 %v463
        %555 = vmatmul.f32.gmra.mxu0 %v501
        %v556 = vpop.f32.mrf.mxu0
        %v557 = vadd.f32 0.0, %v556
        %558 = vmatmul.f32.gmra.mxu0 %v503
        %v559 = vpop.f32.mrf.mxu0
        %v560 = vadd.f32 0.0, %v559
        %561 = vmatmul.f32.gmra.mxu0 %v505
        %v562 = vpop.f32.mrf.mxu0
        %v563 = vadd.f32 0.0, %v562
        %564 = vmatmul.f32.gmra.mxu0 %v504
        %v565 = vpop.f32.mrf.mxu0
        %v566 = vadd.f32 0.0, %v565
        %567 = vdwg.mxu0
        %568 = vmatpush.msra.mxu0 %v459
        %569 = vmatpush.msra.mxu0 %v457
        %570 = vmatpush.msra.mxu0 %v455
        %571 = vmatpush.msra.mxu0 %v453
        %572 = vmatpush.msra.mxu0 %v451
        %573 = vmatpush.msra.mxu0 %v449
        %574 = vmatpush.msra.mxu0 %v447
        %575 = vmatpush.msra.mxu0 %v445
        %576 = vmatpush.msra.mxu0 %v443
        %577 = vmatpush.msra.mxu0 %v441
        %578 = vmatpush.msra.mxu0 %v439
        %579 = vmatpush.msra.mxu0 %v437
        %580 = vmatpush.msra.mxu0 %v435
        %581 = vmatpush.msra.mxu0 %v433
        %582 = vmatpush.msra.mxu0 %v431
        %583 = vmatpush.msra.mxu0 %v429
        %584 = vmatmul.f32.gmra.mxu0 %v425
        %v585 = vpop.f32.mrf.mxu0
        %v586 = vadd.f32 %v528, %v585
        %587 = vmatmul.f32.gmra.mxu0 %v426
        %v588 = vpop.f32.mrf.mxu0
        %v589 = vadd.f32 %v531, %v588
        %590 = vmatmul.f32.gmra.mxu0 %v427
        %v591 = vpop.f32.mrf.mxu0
        %v592 = vadd.f32 %v534, %v591
        %593 = vmatmul.f32.gmra.mxu0 %v428
        %v594 = vpop.f32.mrf.mxu0
        %v595 = vadd.f32 %v537, %v594
        %596 = vdwg.mxu0
        %597 = vmatpush.msra.mxu0 %v460
        %598 = vmatpush.msra.mxu0 %v458
        %599 = vmatpush.msra.mxu0 %v456
        %600 = vmatpush.msra.mxu0 %v454
        %601 = vmatpush.msra.mxu0 %v452
        %602 = vmatpush.msra.mxu0 %v450
        %603 = vmatpush.msra.mxu0 %v448
        %604 = vmatpush.msra.mxu0 %v446
        %605 = vmatpush.msra.mxu0 %v444
        %606 = vmatpush.msra.mxu0 %v442
        %607 = vmatpush.msra.mxu0 %v440
        %608 = vmatpush.msra.mxu0 %v438
        %609 = vmatpush.msra.mxu0 %v436
        %610 = vmatpush.msra.mxu0 %v434
        %611 = vmatpush.msra.mxu0 %v432
        %612 = vmatpush.msra.mxu0 %v430
        %613 = vmatmul.f32.gmra.mxu0 %v425
        %v614 = vpop.f32.mrf.mxu0
        %v615 = vadd.f32 %v557, %v614
        %616 = vmatmul.f32.gmra.mxu0 %v426
        %v617 = vpop.f32.mrf.mxu0
        %v618 = vadd.f32 %v560, %v617
        %619 = vmatmul.f32.gmra.mxu0 %v427
        %v620 = vpop.f32.mrf.mxu0
        %v621 = vadd.f32 %v563, %v620
        %622 = vmatmul.f32.gmra.mxu0 %v428
        %v623 = vpop.f32.mrf.mxu0
        %v624 = vadd.f32 %v566, %v623
        %625 = vdwg.mxu0
        %s626 = scalar_lea.vmem [#allocation6], 512
        %v627 = vld [vmem:[%s626] sm:$0xff]
        %v628 = vld [vmem:[%s626 + $0x8] sm:$0xff]
        %v629 = vld [vmem:[%s626 + $0x10] sm:$0xff]
        %v630 = vld [vmem:[%s626 + $0x18] sm:$0xff]
        %v631 = vld [vmem:[%s626 + $0x20] sm:$0xff]
        %v632 = vld [vmem:[%s626 + $0x28] sm:$0xff]
        %v633 = vld [vmem:[%s626 + $0x30] sm:$0xff]
        %v634 = vld [vmem:[%s626 + $0x38] sm:$0xff]
        %v635 = vld [vmem:[%s626 + $0x40] sm:$0xff]
        %v636 = vld [vmem:[%s626 + $0x48] sm:$0xff]
        %v637 = vld [vmem:[%s626 + $0x50] sm:$0xff]
        %v638 = vld [vmem:[%s626 + $0x58] sm:$0xff]
        %v639 = vld [vmem:[%s626 + $0x60] sm:$0xff]
        %v640 = vld [vmem:[%s626 + $0x68] sm:$0xff]
        %v641 = vld [vmem:[%s626 + $0x70] sm:$0xff]
        %v642 = vld [vmem:[%s626 + $0x78] sm:$0xff]
        %v643 = vld [vmem:[%s626 + $0x80] sm:$0xff]
        %v644 = vld [vmem:[%s626 + $0x88] sm:$0xff]
        %v645 = vld [vmem:[%s626 + $0x90] sm:$0xff]
        %v646 = vld [vmem:[%s626 + $0x98] sm:$0xff]
        %v647 = vld [vmem:[%s626 + $0xa0] sm:$0xff]
        %v648 = vld [vmem:[%s626 + $0xa8] sm:$0xff]
        %v649 = vld [vmem:[%s626 + $0xb0] sm:$0xff]
        %v650 = vld [vmem:[%s626 + $0xb8] sm:$0xff]
        %v651 = vld [vmem:[%s626 + $0xc0] sm:$0xff]
        %v652 = vld [vmem:[%s626 + $0xc8] sm:$0xff]
        %v653 = vld [vmem:[%s626 + $0xd0] sm:$0xff]
        %v654 = vld [vmem:[%s626 + $0xd8] sm:$0xff]
        %v655 = vld [vmem:[%s626 + $0xe0] sm:$0xff]
        %v656 = vld [vmem:[%s626 + $0xe8] sm:$0xff]
        %v657 = vld [vmem:[%s626 + $0xf0] sm:$0xff]
        %v658 = vld [vmem:[%s626 + $0xf8] sm:$0xff]
        %vm659 = vcmask 1045504
        %v660 = vrot.slane %v425, 2
        %v661 = vrot.slane %v426, 2
        %v662 = vsel %vm659, %v660, %v661
        %v663 = vrot.slane %v427, 2
        %v664 = vsel %vm659, %v661, %v663
        %v665 = vrot.slane %v428, 2
        %v666 = vsel %vm659, %v663, %v665
        %671 = vmatpush.msra.mxu0 %v657
        %672 = vmatpush.msra.mxu0 %v655
        %673 = vmatpush.msra.mxu0 %v653
        %674 = vmatpush.msra.mxu0 %v651
        %675 = vmatpush.msra.mxu0 %v649
        %676 = vmatpush.msra.mxu0 %v647
        %677 = vmatpush.msra.mxu0 %v645
        %678 = vmatpush.msra.mxu0 %v643
        %679 = vmatpush.msra.mxu0 %v641
        %680 = vmatpush.msra.mxu0 %v639
        %681 = vmatpush.msra.mxu0 %v637
        %682 = vmatpush.msra.mxu0 %v635
        %683 = vmatpush.msra.mxu0 %v633
        %684 = vmatpush.msra.mxu0 %v631
        %685 = vmatpush.msra.mxu0 %v629
        %686 = vmatpush.msra.mxu0 %v627
        %687 = vmatmul.f32.gmra.mxu0 %v662
        %v688 = vpop.f32.mrf.mxu0
        %v689 = vadd.f32 0.0, %v688
        %690 = vmatmul.f32.gmra.mxu0 %v664
        %v691 = vpop.f32.mrf.mxu0
        %v692 = vadd.f32 0.0, %v691
        %693 = vmatmul.f32.gmra.mxu0 %v666
        %v694 = vpop.f32.mrf.mxu0
        %v695 = vadd.f32 0.0, %v694
        %696 = vmatmul.f32.gmra.mxu0 %v665
        %v697 = vpop.f32.mrf.mxu0
        %v698 = vadd.f32 0.0, %v697
        %699 = vdwg.mxu0
        %700 = vmatpush.msra.mxu0 %v658
        %701 = vmatpush.msra.mxu0 %v656
        %702 = vmatpush.msra.mxu0 %v654
        %703 = vmatpush.msra.mxu0 %v652
        %704 = vmatpush.msra.mxu0 %v650
        %705 = vmatpush.msra.mxu0 %v648
        %706 = vmatpush.msra.mxu0 %v646
        %707 = vmatpush.msra.mxu0 %v644
        %708 = vmatpush.msra.mxu0 %v642
        %709 = vmatpush.msra.mxu0 %v640
        %710 = vmatpush.msra.mxu0 %v638
        %711 = vmatpush.msra.mxu0 %v636
        %712 = vmatpush.msra.mxu0 %v634
        %713 = vmatpush.msra.mxu0 %v632
        %714 = vmatpush.msra.mxu0 %v630
        %715 = vmatpush.msra.mxu0 %v628
        %716 = vmatmul.f32.gmra.mxu0 %v662
        %v717 = vpop.f32.mrf.mxu0
        %v718 = vadd.f32 0.0, %v717
        %719 = vmatmul.f32.gmra.mxu0 %v664
        %v720 = vpop.f32.mrf.mxu0
        %v721 = vadd.f32 0.0, %v720
        %722 = vmatmul.f32.gmra.mxu0 %v666
        %v723 = vpop.f32.mrf.mxu0
        %v724 = vadd.f32 0.0, %v723
        %725 = vmatmul.f32.gmra.mxu0 %v665
        %v726 = vpop.f32.mrf.mxu0
        %v727 = vadd.f32 0.0, %v726
        %728 = vdwg.mxu0
        %v729 = vadd.f32 %v586, %v689
        %v730 = vadd.f32 %v615, %v718
        %v731 = vadd.f32 %v589, %v692
        %v732 = vadd.f32 %v618, %v721
        %v733 = vadd.f32 %v592, %v695
        %v734 = vadd.f32 %v621, %v724
        %v735 = vadd.f32 %v595, %v698
        %v736 = vadd.f32 %v624, %v727
        %s737 = scalar_lea.vmem [#allocation6], 768
        %v738 = vld [vmem:[%s737] sm:$0xff]
        %v739 = vld [vmem:[%s737 + $0x8] sm:$0xff]
        %v740 = vld [vmem:[%s737 + $0x10] sm:$0xff]
        %v741 = vld [vmem:[%s737 + $0x18] sm:$0xff]
        %v742 = vld [vmem:[%s737 + $0x20] sm:$0xff]
        %v743 = vld [vmem:[%s737 + $0x28] sm:$0xff]
        %v744 = vld [vmem:[%s737 + $0x30] sm:$0xff]
        %v745 = vld [vmem:[%s737 + $0x38] sm:$0xff]
        %v746 = vld [vmem:[%s737 + $0x40] sm:$0xff]
        %v747 = vld [vmem:[%s737 + $0x48] sm:$0xff]
        %v748 = vld [vmem:[%s737 + $0x50] sm:$0xff]
        %v749 = vld [vmem:[%s737 + $0x58] sm:$0xff]
        %v750 = vld [vmem:[%s737 + $0x60] sm:$0xff]
        %v751 = vld [vmem:[%s737 + $0x68] sm:$0xff]
        %v752 = vld [vmem:[%s737 + $0x70] sm:$0xff]
        %v753 = vld [vmem:[%s737 + $0x78] sm:$0xff]
        %v754 = vld [vmem:[%s737 + $0x80] sm:$0xff]
        %v755 = vld [vmem:[%s737 + $0x88] sm:$0xff]
        %v756 = vld [vmem:[%s737 + $0x90] sm:$0xff]
        %v757 = vld [vmem:[%s737 + $0x98] sm:$0xff]
        %v758 = vld [vmem:[%s737 + $0xa0] sm:$0xff]
        %v759 = vld [vmem:[%s737 + $0xa8] sm:$0xff]
        %v760 = vld [vmem:[%s737 + $0xb0] sm:$0xff]
        %v761 = vld [vmem:[%s737 + $0xb8] sm:$0xff]
        %v762 = vld [vmem:[%s737 + $0xc0] sm:$0xff]
        %v763 = vld [vmem:[%s737 + $0xc8] sm:$0xff]
        %v764 = vld [vmem:[%s737 + $0xd0] sm:$0xff]
        %v765 = vld [vmem:[%s737 + $0xd8] sm:$0xff]
        %v766 = vld [vmem:[%s737 + $0xe0] sm:$0xff]
        %v767 = vld [vmem:[%s737 + $0xe8] sm:$0xff]
        %v768 = vld [vmem:[%s737 + $0xf0] sm:$0xff]
        %v769 = vld [vmem:[%s737 + $0xf8] sm:$0xff]
        %vm770 = vcmask 1044480
        %v771 = vrot.slane %v425, 3
        %v772 = vrot.slane %v426, 3
        %v773 = vsel %vm770, %v771, %v772
        %v774 = vrot.slane %v427, 3
        %v775 = vsel %vm770, %v772, %v774
        %v776 = vrot.slane %v428, 3
        %v777 = vsel %vm770, %v774, %v776
        %782 = vmatpush.msra.mxu0 %v768
        %783 = vmatpush.msra.mxu0 %v766
        %784 = vmatpush.msra.mxu0 %v764
        %785 = vmatpush.msra.mxu0 %v762
        %786 = vmatpush.msra.mxu0 %v760
        %787 = vmatpush.msra.mxu0 %v758
        %788 = vmatpush.msra.mxu0 %v756
        %789 = vmatpush.msra.mxu0 %v754
        %790 = vmatpush.msra.mxu0 %v752
        %791 = vmatpush.msra.mxu0 %v750
        %792 = vmatpush.msra.mxu0 %v748
        %793 = vmatpush.msra.mxu0 %v746
        %794 = vmatpush.msra.mxu0 %v744
        %795 = vmatpush.msra.mxu0 %v742
        %796 = vmatpush.msra.mxu0 %v740
        %797 = vmatpush.msra.mxu0 %v738
        %798 = vmatmul.f32.gmra.mxu0 %v773
        %v799 = vpop.f32.mrf.mxu0
        %v800 = vadd.f32 0.0, %v799
        %801 = vmatmul.f32.gmra.mxu0 %v775
        %v802 = vpop.f32.mrf.mxu0
        %v803 = vadd.f32 0.0, %v802
        %804 = vmatmul.f32.gmra.mxu0 %v777
        %v805 = vpop.f32.mrf.mxu0
        %v806 = vadd.f32 0.0, %v805
        %807 = vmatmul.f32.gmra.mxu0 %v776
        %v808 = vpop.f32.mrf.mxu0
        %v809 = vadd.f32 0.0, %v808
        %810 = vdwg.mxu0
        %811 = vmatpush.msra.mxu0 %v769
        %812 = vmatpush.msra.mxu0 %v767
        %813 = vmatpush.msra.mxu0 %v765
        %814 = vmatpush.msra.mxu0 %v763
        %815 = vmatpush.msra.mxu0 %v761
        %816 = vmatpush.msra.mxu0 %v759
        %817 = vmatpush.msra.mxu0 %v757
        %818 = vmatpush.msra.mxu0 %v755
        %819 = vmatpush.msra.mxu0 %v753
        %820 = vmatpush.msra.mxu0 %v751
        %821 = vmatpush.msra.mxu0 %v749
        %822 = vmatpush.msra.mxu0 %v747
        %823 = vmatpush.msra.mxu0 %v745
        %824 = vmatpush.msra.mxu0 %v743
        %825 = vmatpush.msra.mxu0 %v741
        %826 = vmatpush.msra.mxu0 %v739
        %827 = vmatmul.f32.gmra.mxu0 %v773
        %v828 = vpop.f32.mrf.mxu0
        %v829 = vadd.f32 0.0, %v828
        %830 = vmatmul.f32.gmra.mxu0 %v775
        %v831 = vpop.f32.mrf.mxu0
        %v832 = vadd.f32 0.0, %v831
        %833 = vmatmul.f32.gmra.mxu0 %v777
        %v834 = vpop.f32.mrf.mxu0
        %v835 = vadd.f32 0.0, %v834
        %836 = vmatmul.f32.gmra.mxu0 %v776
        %v837 = vpop.f32.mrf.mxu0
        %v838 = vadd.f32 0.0, %v837
        %839 = vdwg.mxu0
        %v840 = vadd.f32 %v729, %v800
        %v841 = vadd.f32 %v730, %v829
        %v842 = vadd.f32 %v731, %v803
        %v843 = vadd.f32 %v732, %v832
        %v844 = vadd.f32 %v733, %v806
        %v845 = vadd.f32 %v734, %v835
        %v846 = vadd.f32 %v735, %v809
        %v847 = vadd.f32 %v736, %v838
        %s848 = scalar_lea.vmem [#allocation6], 1024
        %v849 = vld [vmem:[%s848] sm:$0xff]
        %v850 = vld [vmem:[%s848 + $0x8] sm:$0xff]
        %v851 = vld [vmem:[%s848 + $0x10] sm:$0xff]
        %v852 = vld [vmem:[%s848 + $0x18] sm:$0xff]
        %v853 = vld [vmem:[%s848 + $0x20] sm:$0xff]
        %v854 = vld [vmem:[%s848 + $0x28] sm:$0xff]
        %v855 = vld [vmem:[%s848 + $0x30] sm:$0xff]
        %v856 = vld [vmem:[%s848 + $0x38] sm:$0xff]
        %v857 = vld [vmem:[%s848 + $0x40] sm:$0xff]
        %v858 = vld [vmem:[%s848 + $0x48] sm:$0xff]
        %v859 = vld [vmem:[%s848 + $0x50] sm:$0xff]
        %v860 = vld [vmem:[%s848 + $0x58] sm:$0xff]
        %v861 = vld [vmem:[%s848 + $0x60] sm:$0xff]
        %v862 = vld [vmem:[%s848 + $0x68] sm:$0xff]
        %v863 = vld [vmem:[%s848 + $0x70] sm:$0xff]
        %v864 = vld [vmem:[%s848 + $0x78] sm:$0xff]
        %v865 = vld [vmem:[%s848 + $0x80] sm:$0xff]
        %v866 = vld [vmem:[%s848 + $0x88] sm:$0xff]
        %v867 = vld [vmem:[%s848 + $0x90] sm:$0xff]
        %v868 = vld [vmem:[%s848 + $0x98] sm:$0xff]
        %v869 = vld [vmem:[%s848 + $0xa0] sm:$0xff]
        %v870 = vld [vmem:[%s848 + $0xa8] sm:$0xff]
        %v871 = vld [vmem:[%s848 + $0xb0] sm:$0xff]
        %v872 = vld [vmem:[%s848 + $0xb8] sm:$0xff]
        %v873 = vld [vmem:[%s848 + $0xc0] sm:$0xff]
        %v874 = vld [vmem:[%s848 + $0xc8] sm:$0xff]
        %v875 = vld [vmem:[%s848 + $0xd0] sm:$0xff]
        %v876 = vld [vmem:[%s848 + $0xd8] sm:$0xff]
        %v877 = vld [vmem:[%s848 + $0xe0] sm:$0xff]
        %v878 = vld [vmem:[%s848 + $0xe8] sm:$0xff]
        %v879 = vld [vmem:[%s848 + $0xf0] sm:$0xff]
        %v880 = vld [vmem:[%s848 + $0xf8] sm:$0xff]
        %vm881 = vcmask 1043456
        %v882 = vrot.slane %v425, 4
        %v883 = vrot.slane %v426, 4
        %v884 = vsel %vm881, %v882, %v883
        %v885 = vrot.slane %v427, 4
        %v886 = vsel %vm881, %v883, %v885
        %v887 = vrot.slane %v428, 4
        %v888 = vsel %vm881, %v885, %v887
        %893 = vmatpush.msra.mxu0 %v879
        %894 = vmatpush.msra.mxu0 %v877
        %895 = vmatpush.msra.mxu0 %v875
        %896 = vmatpush.msra.mxu0 %v873
        %897 = vmatpush.msra.mxu0 %v871
        %898 = vmatpush.msra.mxu0 %v869
        %899 = vmatpush.msra.mxu0 %v867
        %900 = vmatpush.msra.mxu0 %v865
        %901 = vmatpush.msra.mxu0 %v863
        %902 = vmatpush.msra.mxu0 %v861
        %903 = vmatpush.msra.mxu0 %v859
        %904 = vmatpush.msra.mxu0 %v857
        %905 = vmatpush.msra.mxu0 %v855
        %906 = vmatpush.msra.mxu0 %v853
        %907 = vmatpush.msra.mxu0 %v851
        %908 = vmatpush.msra.mxu0 %v849
        %909 = vmatmul.f32.gmra.mxu0 %v884
        %v910 = vpop.f32.mrf.mxu0
        %v911 = vadd.f32 0.0, %v910
        %912 = vmatmul.f32.gmra.mxu0 %v886
        %v913 = vpop.f32.mrf.mxu0
        %v914 = vadd.f32 0.0, %v913
        %915 = vmatmul.f32.gmra.mxu0 %v888
        %v916 = vpop.f32.mrf.mxu0
        %v917 = vadd.f32 0.0, %v916
        %918 = vmatmul.f32.gmra.mxu0 %v887
        %v919 = vpop.f32.mrf.mxu0
        %v920 = vadd.f32 0.0, %v919
        %921 = vdwg.mxu0
        %922 = vmatpush.msra.mxu0 %v880
        %923 = vmatpush.msra.mxu0 %v878
        %924 = vmatpush.msra.mxu0 %v876
        %925 = vmatpush.msra.mxu0 %v874
        %926 = vmatpush.msra.mxu0 %v872
        %927 = vmatpush.msra.mxu0 %v870
        %928 = vmatpush.msra.mxu0 %v868
        %929 = vmatpush.msra.mxu0 %v866
        %930 = vmatpush.msra.mxu0 %v864
        %931 = vmatpush.msra.mxu0 %v862
        %932 = vmatpush.msra.mxu0 %v860
        %933 = vmatpush.msra.mxu0 %v858
        %934 = vmatpush.msra.mxu0 %v856
        %935 = vmatpush.msra.mxu0 %v854
        %936 = vmatpush.msra.mxu0 %v852
        %937 = vmatpush.msra.mxu0 %v850
        %938 = vmatmul.f32.gmra.mxu0 %v884
        %v939 = vpop.f32.mrf.mxu0
        %v940 = vadd.f32 0.0, %v939
        %941 = vmatmul.f32.gmra.mxu0 %v886
        %v942 = vpop.f32.mrf.mxu0
        %v943 = vadd.f32 0.0, %v942
        %944 = vmatmul.f32.gmra.mxu0 %v888
        %v945 = vpop.f32.mrf.mxu0
        %v946 = vadd.f32 0.0, %v945
        %947 = vmatmul.f32.gmra.mxu0 %v887
        %v948 = vpop.f32.mrf.mxu0
        %v949 = vadd.f32 0.0, %v948
        %950 = vdwg.mxu0
        %v951 = vadd.f32 %v840, %v911
        %v952 = vadd.f32 %v841, %v940
        %v953 = vadd.f32 %v842, %v914
        %v954 = vadd.f32 %v843, %v943
        %v955 = vadd.f32 %v844, %v917
        %v956 = vadd.f32 %v845, %v946
        %v957 = vadd.f32 %v846, %v920
        %v958 = vadd.f32 %v847, %v949
        %v959 = vld [vmem:[%s2] sm:$0x3]
        %v961 = vperm.slane %v959, 0
        %v962 = vperm.slane %v959, 1
        %v965 = vadd.f32 %v951, %v961
        %v966 = vadd.f32 %v952, %v962
        %v967 = vadd.f32 %v953, %v961
        %v968 = vadd.f32 %v954, %v962
        %v969 = vadd.f32 %v955, %v961
        %v970 = vadd.f32 %v956, %v962
        %v971 = vadd.f32 %v957, %v961
        %v972 = vadd.f32 %v958, %v962
        %v973 = vmax.f32 %v965, 0.0
        %v974 = vmax.f32 %v966, 0.0
        %v975 = vmax.f32 %v967, 0.0
        %v976 = vmax.f32 %v968, 0.0
        %v977 = vmax.f32 %v969, 0.0
        %v978 = vmax.f32 %v970, 0.0
        %v979 = vmax.f32 %v971, 0.0
        %v980 = vmax.f32 %v972, 0.0
        %985 = vrot.lane.b32.xlu0 %v973, 122
        %v986 = vpop.permute.xlu0 %985
        %987 = vrot.lane.b32.xlu0 %v975, 122
        %v988 = vpop.permute.xlu0 %987
        %989 = vrot.lane.b32.xlu0 %v977, 122
        %v990 = vpop.permute.xlu0 %989
        %991 = vrot.lane.b32.xlu0 %v979, 122
        %v992 = vpop.permute.xlu0 %991
        %v997 = vmax.f32 %v973, %v986
        %v998 = vmax.f32 %v975, %v988
        %v999 = vmax.f32 %v977, %v990
        %v1000 = vmax.f32 %v979, %v992
        %vm1001 = vcmask 48128
        %1002 = vst.msk [vmem:[#allocation2] sm:$0xff] %vm1001, %v997
        %1003 = vst.msk [vmem:[#allocation2 + $0x8] sm:$0xff] %vm1001, %v998
        %1004 = vst.msk [vmem:[#allocation2 + $0x10] sm:$0xff] %vm1001, %v999
        %vm1005 = vcmask 44032
        %1006 = vst.msk [vmem:[#allocation2 + $0x18] sm:$0xf] %vm1005, %v1000
        %1011 = vrot.lane.b32.xlu0 %v997, 122
        %v1012 = vpop.permute.xlu0 %1011
        %1013 = vrot.lane.b32.xlu0 %v998, 122
        %v1014 = vpop.permute.xlu0 %1013
        %1015 = vrot.lane.b32.xlu0 %v999, 122
        %v1016 = vpop.permute.xlu0 %1015
        %1017 = vrot.lane.b32.xlu0 %v1000, 122
        %v1018 = vpop.permute.xlu0 %1017
        %vm1023 = vcmask 97328
        %1024 = vst.msk [vmem:[#allocation2] sm:$0xff] %vm1023, %v1012
        %1025 = vst.msk [vmem:[#allocation2 + $0x8] sm:$0xff] %vm1023, %v1014
        %1026 = vst.msk [vmem:[#allocation2 + $0x10] sm:$0xff] %vm1023, %v1016
        %vm1027 = vcmask 93232
        %1028 = vst.msk [vmem:[#allocation2 + $0x18] sm:$0xf] %vm1027, %v1018
        %1029 = vrot.lane.b32.xlu0 %v997, 116
        %v1030 = vpop.permute.xlu0 %1029
        %1031 = vrot.lane.b32.xlu0 %v998, 116
        %v1032 = vpop.permute.xlu0 %1031
        %1033 = vrot.lane.b32.xlu0 %v999, 116
        %v1034 = vpop.permute.xlu0 %1033
        %1035 = vrot.lane.b32.xlu0 %v1000, 116
        %v1036 = vpop.permute.xlu0 %1035
        %vm1041 = vcmask 146528
        %1042 = vst.msk [vmem:[#allocation2] sm:$0xff] %vm1041, %v1030
        %1043 = vst.msk [vmem:[#allocation2 + $0x8] sm:$0xff] %vm1041, %v1032
        %1044 = vst.msk [vmem:[#allocation2 + $0x10] sm:$0xff] %vm1041, %v1034
        %vm1045 = vcmask 142432
        %1046 = vst.msk [vmem:[#allocation2 + $0x18] sm:$0xf] %vm1045, %v1036
        %1047 = vrot.lane.b32.xlu0 %v997, 110
        %v1048 = vpop.permute.xlu0 %1047
        %1049 = vrot.lane.b32.xlu0 %v998, 110
        %v1050 = vpop.permute.xlu0 %1049
        %1051 = vrot.lane.b32.xlu0 %v999, 110
        %v1052 = vpop.permute.xlu0 %1051
        %1053 = vrot.lane.b32.xlu0 %v1000, 110
        %v1054 = vpop.permute.xlu0 %1053
        %vm1059 = vcmask 195728
        %1060 = vst.msk [vmem:[#allocation2] sm:$0xff] %vm1059, %v1048
        %1061 = vst.msk [vmem:[#allocation2 + $0x8] sm:$0xff] %vm1059, %v1050
        %1062 = vst.msk [vmem:[#allocation2 + $0x10] sm:$0xff] %vm1059, %v1052
        %vm1063 = vcmask 191632
        %1064 = vst.msk [vmem:[#allocation2 + $0x18] sm:$0xf] %vm1063, %v1054
        %1065 = vrot.lane.b32.xlu0 %v997, 104
        %v1066 = vpop.permute.xlu0 %1065
        %1067 = vrot.lane.b32.xlu0 %v998, 104
        %v1068 = vpop.permute.xlu0 %1067
        %1069 = vrot.lane.b32.xlu0 %v999, 104
        %v1070 = vpop.permute.xlu0 %1069
        %1071 = vrot.lane.b32.xlu0 %v1000, 104
        %v1072 = vpop.permute.xlu0 %1071
        %vm1077 = vcmask 244928
        %1078 = vst.msk [vmem:[#allocation2] sm:$0xff] %vm1077, %v1066
        %1079 = vst.msk [vmem:[#allocation2 + $0x8] sm:$0xff] %vm1077, %v1068
        %1080 = vst.msk [vmem:[#allocation2 + $0x10] sm:$0xff] %vm1077, %v1070
        %vm1081 = vcmask 240832
        %1082 = vst.msk [vmem:[#allocation2 + $0x18] sm:$0xf] %vm1081, %v1072
        %1083 = vrot.lane.b32.xlu0 %v997, 98
        %v1084 = vpop.permute.xlu0 %1083
        %1085 = vrot.lane.b32.xlu0 %v998, 98
        %v1086 = vpop.permute.xlu0 %1085
        %1087 = vrot.lane.b32.xlu0 %v999, 98
        %v1088 = vpop.permute.xlu0 %1087
        %1089 = vrot.lane.b32.xlu0 %v1000, 98
        %v1090 = vpop.permute.xlu0 %1089
        %vm1095 = vcmask 294128
        %1096 = vst.msk [vmem:[#allocation2] sm:$0xff] %vm1095, %v1084
        %1097 = vst.msk [vmem:[#allocation2 + $0x8] sm:$0xff] %vm1095, %v1086
        %1098 = vst.msk [vmem:[#allocation2 + $0x10] sm:$0xff] %vm1095, %v1088
        %vm1099 = vcmask 290032
        %1100 = vst.msk [vmem:[#allocation2 + $0x18] sm:$0xf] %vm1099, %v1090
        %1101 = vrot.lane.b32.xlu0 %v997, 92
        %v1102 = vpop.permute.xlu0 %1101
        %1103 = vrot.lane.b32.xlu0 %v998, 92
        %v1104 = vpop.permute.xlu0 %1103
        %1105 = vrot.lane.b32.xlu0 %v999, 92
        %v1106 = vpop.permute.xlu0 %1105
        %1107 = vrot.lane.b32.xlu0 %v1000, 92
        %v1108 = vpop.permute.xlu0 %1107
        %vm1113 = vcmask 343328
        %1114 = vst.msk [vmem:[#allocation2] sm:$0xff] %vm1113, %v1102
        %1115 = vst.msk [vmem:[#allocation2 + $0x8] sm:$0xff] %vm1113, %v1104
        %1116 = vst.msk [vmem:[#allocation2 + $0x10] sm:$0xff] %vm1113, %v1106
        %vm1117 = vcmask 339232
        %1118 = vst.msk [vmem:[#allocation2 + $0x18] sm:$0xf] %vm1117, %v1108
        %1119 = vrot.lane.b32.xlu0 %v997, 86
        %v1120 = vpop.permute.xlu0 %1119
        %1121 = vrot.lane.b32.xlu0 %v998, 86
        %v1122 = vpop.permute.xlu0 %1121
        %1123 = vrot.lane.b32.xlu0 %v999, 86
        %v1124 = vpop.permute.xlu0 %1123
        %1125 = vrot.lane.b32.xlu0 %v1000, 86
        %v1126 = vpop.permute.xlu0 %1125
        %vm1131 = vcmask 392528
        %1132 = vst.msk [vmem:[#allocation2] sm:$0xff] %vm1131, %v1120
        %1133 = vst.msk [vmem:[#allocation2 + $0x8] sm:$0xff] %vm1131, %v1122
        %1134 = vst.msk [vmem:[#allocation2 + $0x10] sm:$0xff] %vm1131, %v1124
        %vm1135 = vcmask 388432
        %1136 = vst.msk [vmem:[#allocation2 + $0x18] sm:$0xf] %vm1135, %v1126
        %1137 = vrot.lane.b32.xlu0 %v997, 80
        %v1138 = vpop.permute.xlu0 %1137
        %1139 = vrot.lane.b32.xlu0 %v998, 80
        %v1140 = vpop.permute.xlu0 %1139
        %1141 = vrot.lane.b32.xlu0 %v999, 80
        %v1142 = vpop.permute.xlu0 %1141
        %1143 = vrot.lane.b32.xlu0 %v1000, 80
        %v1144 = vpop.permute.xlu0 %1143
        %vm1149 = vcmask 441728
        %1150 = vst.msk [vmem:[#allocation2] sm:$0xff] %vm1149, %v1138
        %1151 = vst.msk [vmem:[#allocation2 + $0x8] sm:$0xff] %vm1149, %v1140
        %1152 = vst.msk [vmem:[#allocation2 + $0x10] sm:$0xff] %vm1149, %v1142
        %vm1153 = vcmask 437632
        %1154 = vst.msk [vmem:[#allocation2 + $0x18] sm:$0xf] %vm1153, %v1144
        %1155 = vrot.lane.b32.xlu0 %v997, 74
        %v1156 = vpop.permute.xlu0 %1155
        %1157 = vrot.lane.b32.xlu0 %v998, 74
        %v1158 = vpop.permute.xlu0 %1157
        %1159 = vrot.lane.b32.xlu0 %v999, 74
        %v1160 = vpop.permute.xlu0 %1159
        %1161 = vrot.lane.b32.xlu0 %v1000, 74
        %v1162 = vpop.permute.xlu0 %1161
        %vm1167 = vcmask 490928
        %1168 = vst.msk [vmem:[#allocation2] sm:$0xff] %vm1167, %v1156
        %1169 = vst.msk [vmem:[#allocation2 + $0x8] sm:$0xff] %vm1167, %v1158
        %1170 = vst.msk [vmem:[#allocation2 + $0x10] sm:$0xff] %vm1167, %v1160
        %vm1171 = vcmask 486832
        %1172 = vst.msk [vmem:[#allocation2 + $0x18] sm:$0xf] %vm1171, %v1162
        %1177 = vrot.lane.b32.xlu0 %v974, 122
        %v1178 = vpop.permute.xlu0 %1177
        %1179 = vrot.lane.b32.xlu0 %v976, 122
        %v1180 = vpop.permute.xlu0 %1179
        %1181 = vrot.lane.b32.xlu0 %v978, 122
        %v1182 = vpop.permute.xlu0 %1181
        %1183 = vrot.lane.b32.xlu0 %v980, 122
        %v1184 = vpop.permute.xlu0 %1183
        %vm1185 = vcmask 998400
        %v1186 = vsel %vm1185, %v986, %v1178
        %v1187 = vsel %vm1185, %v988, %v1180
        %v1188 = vsel %vm1185, %v990, %v1182
        %v1189 = vsel %vm1185, %v992, %v1184
        %v1194 = vmax.f32 %v973, %v1186
        %v1195 = vmax.f32 %v975, %v1187
        %v1196 = vmax.f32 %v977, %v1188
        %v1197 = vmax.f32 %v979, %v1189
        %1202 = vrot.lane.b32.xlu0 %v1194, 68
        %v1203 = vpop.permute.xlu0 %1202
        %1204 = vrot.lane.b32.xlu0 %v1195, 68
        %v1205 = vpop.permute.xlu0 %1204
        %1206 = vrot.lane.b32.xlu0 %v1196, 68
        %v1207 = vpop.permute.xlu0 %1206
        %1208 = vrot.lane.b32.xlu0 %v1197, 68
        %v1209 = vpop.permute.xlu0 %1208
        %vm1214 = vcmask 540128
        %1215 = vst.msk [vmem:[#allocation2] sm:$0xff] %vm1214, %v1203
        %1216 = vst.msk [vmem:[#allocation2 + $0x8] sm:$0xff] %vm1214, %v1205
        %1217 = vst.msk [vmem:[#allocation2 + $0x10] sm:$0xff] %vm1214, %v1207
        %vm1218 = vcmask 536032
        %1219 = vst.msk [vmem:[#allocation2 + $0x18] sm:$0xf] %vm1218, %v1209
        %v1224 = vmax.f32 %v974, %v1178
        %v1225 = vmax.f32 %v976, %v1180
        %v1226 = vmax.f32 %v978, %v1182
        %v1227 = vmax.f32 %v980, %v1184
        %1232 = vrot.lane.b32.xlu0 %v1224, 62
        %v1233 = vpop.permute.xlu0 %1232
        %1234 = vrot.lane.b32.xlu0 %v1225, 62
        %v1235 = vpop.permute.xlu0 %1234
        %1236 = vrot.lane.b32.xlu0 %v1226, 62
        %v1237 = vpop.permute.xlu0 %1236
        %1238 = vrot.lane.b32.xlu0 %v1227, 62
        %v1239 = vpop.permute.xlu0 %1238
        %vm1244 = vcmask 589328
        %1245 = vst.msk [vmem:[#allocation2] sm:$0xff] %vm1244, %v1233
        %1246 = vst.msk [vmem:[#allocation2 + $0x8] sm:$0xff] %vm1244, %v1235
        %1247 = vst.msk [vmem:[#allocation2 + $0x10] sm:$0xff] %vm1244, %v1237
        %vm1248 = vcmask 585232
        %1249 = vst.msk [vmem:[#allocation2 + $0x18] sm:$0xf] %vm1248, %v1239
        %1250 = vrot.lane.b32.xlu0 %v1224, 56
        %v1251 = vpop.permute.xlu0 %1250
        %1252 = vrot.lane.b32.xlu0 %v1225, 56
        %v1253 = vpop.permute.xlu0 %1252
        %1254 = vrot.lane.b32.xlu0 %v1226, 56
        %v1255 = vpop.permute.xlu0 %1254
        %1256 = vrot.lane.b32.xlu0 %v1227, 56
        %v1257 = vpop.permute.xlu0 %1256
        %vm1262 = vcmask 638528
        %1263 = vst.msk [vmem:[#allocation2] sm:$0xff] %vm1262, %v1251
        %1264 = vst.msk [vmem:[#allocation2 + $0x8] sm:$0xff] %vm1262, %v1253
        %1265 = vst.msk [vmem:[#allocation2 + $0x10] sm:$0xff] %vm1262, %v1255
        %vm1266 = vcmask 634432
        %1267 = vst.msk [vmem:[#allocation2 + $0x18] sm:$0xf] %vm1266, %v1257
        %1268 = vrot.lane.b32.xlu0 %v1224, 50
        %v1269 = vpop.permute.xlu0 %1268
        %1270 = vrot.lane.b32.xlu0 %v1225, 50
        %v1271 = vpop.permute.xlu0 %1270
        %1272 = vrot.lane.b32.xlu0 %v1226, 50
        %v1273 = vpop.permute.xlu0 %1272
        %1274 = vrot.lane.b32.xlu0 %v1227, 50
        %v1275 = vpop.permute.xlu0 %1274
        %vm1280 = vcmask 687728
        %1281 = vst.msk [vmem:[#allocation2] sm:$0xff] %vm1280, %v1269
        %1282 = vst.msk [vmem:[#allocation2 + $0x8] sm:$0xff] %vm1280, %v1271
        %1283 = vst.msk [vmem:[#allocation2 + $0x10] sm:$0xff] %vm1280, %v1273
        %vm1284 = vcmask 683632
        %1285 = vst.msk [vmem:[#allocation2 + $0x18] sm:$0xf] %vm1284, %v1275
        %v1286 = vld [vmem:[#allocation2] sm:$0x1]
        %v1287 = vld [vmem:[#allocation2 + $0x1] sm:$0x1]
        %v1288 = vmax.f32 %v1286, %v1287
        %vm1289 = vcmask 679936
        %1290 = vst.msk [vmem:[#allocation3] sm:$0x1] %vm1289, %v1288
        %v1291 = vld [vmem:[#allocation2 + $0x2] sm:$0x1]
        %v1292 = vld [vmem:[#allocation2 + $0x3] sm:$0x1]
        %v1293 = vmax.f32 %v1291, %v1292
        %1294 = vst.msk [vmem:[#allocation3 + $0x1] sm:$0x1] %vm1289, %v1293
        %v1295 = vld [vmem:[#allocation2 + $0x4] sm:$0x1]
        %v1296 = vld [vmem:[#allocation2 + $0x5] sm:$0x1]
        %v1297 = vmax.f32 %v1295, %v1296
        %1298 = vst.msk [vmem:[#allocation3 + $0x2] sm:$0x1] %vm1289, %v1297
        %v1299 = vld [vmem:[#allocation2 + $0x6] sm:$0x1]
        %v1300 = vld [vmem:[#allocation2 + $0x7] sm:$0x1]
        %v1301 = vmax.f32 %v1299, %v1300
        %1302 = vst.msk [vmem:[#allocation3 + $0x3] sm:$0x1] %vm1289, %v1301
        %v1303 = vld [vmem:[#allocation2 + $0x8] sm:$0x1]
        %v1304 = vld [vmem:[#allocation2 + $0x9] sm:$0x1]
        %v1305 = vmax.f32 %v1303, %v1304
        %1306 = vst.msk [vmem:[#allocation3 + $0x4] sm:$0x1] %vm1289, %v1305
        %v1307 = vld [vmem:[#allocation2 + $0xa] sm:$0x1]
        %v1308 = vld [vmem:[#allocation2 + $0xb] sm:$0x1]
        %v1309 = vmax.f32 %v1307, %v1308
        %1310 = vst.msk [vmem:[#allocation3 + $0x5] sm:$0x1] %vm1289, %v1309
        %v1311 = vld [vmem:[#allocation2 + $0xc] sm:$0x1]
        %v1312 = vld [vmem:[#allocation2 + $0xd] sm:$0x1]
        %v1313 = vmax.f32 %v1311, %v1312
        %1314 = vst.msk [vmem:[#allocation3 + $0x6] sm:$0x1] %vm1289, %v1313
        %v1315 = vld [vmem:[#allocation2 + $0xe] sm:$0x1]
        %v1316 = vld [vmem:[#allocation2 + $0xf] sm:$0x1]
        %v1317 = vmax.f32 %v1315, %v1316
        %1318 = vst.msk [vmem:[#allocation3 + $0x7] sm:$0x1] %vm1289, %v1317
        %v1319 = vld [vmem:[#allocation2 + $0x10] sm:$0x1]
        %v1320 = vld [vmem:[#allocation2 + $0x11] sm:$0x1]
        %v1321 = vmax.f32 %v1319, %v1320
        %1322 = vst.msk [vmem:[#allocation3 + $0x8] sm:$0x1] %vm1289, %v1321
        %v1323 = vld [vmem:[#allocation2 + $0x12] sm:$0x1]
        %v1324 = vld [vmem:[#allocation2 + $0x13] sm:$0x1]
        %v1325 = vmax.f32 %v1323, %v1324
        %1326 = vst.msk [vmem:[#allocation3 + $0x9] sm:$0x1] %vm1289, %v1325
        %v1327 = vld [vmem:[#allocation2 + $0x14] sm:$0x1]
        %v1328 = vld [vmem:[#allocation2 + $0x15] sm:$0x1]
        %v1329 = vmax.f32 %v1327, %v1328
        %1330 = vst.msk [vmem:[#allocation3 + $0xa] sm:$0x1] %vm1289, %v1329
        %v1331 = vld [vmem:[#allocation2 + $0x16] sm:$0x1]
        %v1332 = vld [vmem:[#allocation2 + $0x17] sm:$0x1]
        %v1333 = vmax.f32 %v1331, %v1332
        %1334 = vst.msk [vmem:[#allocation3 + $0xb] sm:$0x1] %vm1289, %v1333
        %v1335 = vld [vmem:[#allocation2 + $0x18] sm:$0x1]
        %v1336 = vld [vmem:[#allocation2 + $0x19] sm:$0x1]
        %v1337 = vmax.f32 %v1335, %v1336
        %1338 = vst.msk [vmem:[#allocation3 + $0xc] sm:$0x1] %vm1289, %v1337
        %v1339 = vld [vmem:[#allocation2 + $0x1a] sm:$0x1]
        %v1340 = vld [vmem:[#allocation2 + $0x1b] sm:$0x1]
        %v1341 = vmax.f32 %v1339, %v1340
        %1342 = vst.msk [vmem:[#allocation3 + $0xd] sm:$0x1] %vm1289, %v1341
        %v1343 = vld [vmem:[#allocation3] sm:$0xff]
        %v1344 = vld [vmem:[#allocation3 + $0x8] sm:$0xff]
        %v1345 = vld [vmem:[#allocation8] sm:$0xff]
        %v1346 = vld [vmem:[#allocation8 + $0x8] sm:$0xff]
        %v1347 = vld [vmem:[#allocation8 + $0x10] sm:$0xff]
        %v1348 = vld [vmem:[#allocation8 + $0x18] sm:$0xff]
        %v1349 = vld [vmem:[#allocation8 + $0x20] sm:$0xff]
        %v1350 = vld [vmem:[#allocation8 + $0x28] sm:$0xff]
        %v1351 = vld [vmem:[#allocation8 + $0x30] sm:$0xff]
        %v1352 = vld [vmem:[#allocation8 + $0x38] sm:$0xff]
        %v1353 = vld [vmem:[#allocation8 + $0x40] sm:$0xff]
        %v1354 = vld [vmem:[#allocation8 + $0x48] sm:$0xff]
        %v1355 = vld [vmem:[#allocation8 + $0x50] sm:$0xff]
        %v1356 = vld [vmem:[#allocation8 + $0x58] sm:$0xff]
        %v1357 = vld [vmem:[#allocation8 + $0x60] sm:$0xff]
        %v1358 = vld [vmem:[#allocation8 + $0x68] sm:$0xff]
        %v1359 = vld [vmem:[#allocation8 + $0x70] sm:$0xff]
        %v1360 = vld [vmem:[#allocation8 + $0x78] sm:$0xff]
        %v1361 = vld [vmem:[#allocation8 + $0x80] sm:$0xff]
        %v1362 = vld [vmem:[#allocation8 + $0x88] sm:$0xff]
        %v1363 = vld [vmem:[#allocation8 + $0x90] sm:$0xff]
        %v1364 = vld [vmem:[#allocation8 + $0x98] sm:$0xff]
        %v1365 = vld [vmem:[#allocation8 + $0xa0] sm:$0xff]
        %v1366 = vld [vmem:[#allocation8 + $0xa8] sm:$0xff]
        %v1367 = vld [vmem:[#allocation8 + $0xb0] sm:$0xff]
        %v1368 = vld [vmem:[#allocation8 + $0xb8] sm:$0xff]
        %v1369 = vld [vmem:[#allocation8 + $0xc0] sm:$0xff]
        %v1370 = vld [vmem:[#allocation8 + $0xc8] sm:$0xff]
        %v1371 = vld [vmem:[#allocation8 + $0xd0] sm:$0xff]
        %v1372 = vld [vmem:[#allocation8 + $0xd8] sm:$0xff]
        %v1373 = vld [vmem:[#allocation8 + $0xe0] sm:$0xff]
        %v1374 = vld [vmem:[#allocation8 + $0xe8] sm:$0xff]
        %v1375 = vld [vmem:[#allocation8 + $0xf0] sm:$0xff]
        %v1376 = vld [vmem:[#allocation8 + $0xf8] sm:$0xff]
        %s1377 = scalar_lea.vmem [#allocation8], 256
        %v1378 = vld [vmem:[%s1377] sm:$0xff]
        %v1379 = vld [vmem:[%s1377 + $0x8] sm:$0xff]
        %v1380 = vld [vmem:[%s1377 + $0x10] sm:$0xff]
        %v1381 = vld [vmem:[%s1377 + $0x18] sm:$0xff]
        %v1382 = vld [vmem:[%s1377 + $0x20] sm:$0xff]
        %v1383 = vld [vmem:[%s1377 + $0x28] sm:$0xff]
        %v1384 = vld [vmem:[%s1377 + $0x30] sm:$0xff]
        %v1385 = vld [vmem:[%s1377 + $0x38] sm:$0xff]
        %v1386 = vld [vmem:[%s1377 + $0x40] sm:$0xff]
        %v1387 = vld [vmem:[%s1377 + $0x48] sm:$0xff]
        %v1388 = vld [vmem:[%s1377 + $0x50] sm:$0xff]
        %v1389 = vld [vmem:[%s1377 + $0x58] sm:$0xff]
        %v1390 = vld [vmem:[%s1377 + $0x60] sm:$0xff]
        %v1391 = vld [vmem:[%s1377 + $0x68] sm:$0xff]
        %v1392 = vld [vmem:[%s1377 + $0x70] sm:$0xff]
        %v1393 = vld [vmem:[%s1377 + $0x78] sm:$0xff]
        %v1394 = vld [vmem:[%s1377 + $0x80] sm:$0xff]
        %v1395 = vld [vmem:[%s1377 + $0x88] sm:$0xff]
        %v1396 = vld [vmem:[%s1377 + $0x90] sm:$0xff]
        %v1397 = vld [vmem:[%s1377 + $0x98] sm:$0xff]
        %v1398 = vld [vmem:[%s1377 + $0xa0] sm:$0xff]
        %v1399 = vld [vmem:[%s1377 + $0xa8] sm:$0xff]
        %v1400 = vld [vmem:[%s1377 + $0xb0] sm:$0xff]
        %v1401 = vld [vmem:[%s1377 + $0xb8] sm:$0xff]
        %v1402 = vld [vmem:[%s1377 + $0xc0] sm:$0xff]
        %v1403 = vld [vmem:[%s1377 + $0xc8] sm:$0xff]
        %v1404 = vld [vmem:[%s1377 + $0xd0] sm:$0xff]
        %v1405 = vld [vmem:[%s1377 + $0xd8] sm:$0xff]
        %v1406 = vld [vmem:[%s1377 + $0xe0] sm:$0xff]
        %v1407 = vld [vmem:[%s1377 + $0xe8] sm:$0xff]
        %v1408 = vld [vmem:[%s1377 + $0xf0] sm:$0xff]
        %v1409 = vld [vmem:[%s1377 + $0xf8] sm:$0xff]
        %v1412 = vrot.slane %v1343, 1
        %v1413 = vrot.slane %v1344, 1
        %v1414 = vsel %vm498, %v1412, %v1413
        %1417 = vmatpush.msra.mxu0 %v1408
        %1418 = vmatpush.msra.mxu0 %v1406
        %1419 = vmatpush.msra.mxu0 %v1404
        %1420 = vmatpush.msra.mxu0 %v1402
        %1421 = vmatpush.msra.mxu0 %v1400
        %1422 = vmatpush.msra.mxu0 %v1398
        %1423 = vmatpush.msra.mxu0 %v1396
        %1424 = vmatpush.msra.mxu0 %v1394
        %1425 = vmatpush.msra.mxu0 %v1392
        %1426 = vmatpush.msra.mxu0 %v1390
        %1427 = vmatpush.msra.mxu0 %v1388
        %1428 = vmatpush.msra.mxu0 %v1386
        %1429 = vmatpush.msra.mxu0 %v1384
        %1430 = vmatpush.msra.mxu0 %v1382
        %1431 = vmatpush.msra.mxu0 %v1380
        %1432 = vmatpush.msra.mxu0 %v1378
        %1433 = vmatmul.f32.gmra.mxu0 %v1414
        %v1434 = vpop.f32.mrf.mxu0
        %v1435 = vadd.f32 0.0, %v1434
        %1436 = vmatmul.f32.gmra.mxu0 %v1413
        %v1437 = vpop.f32.mrf.mxu0
        %v1438 = vadd.f32 0.0, %v1437
        %1439 = vdwg.mxu0
        %1440 = vmatpush.msra.mxu0 %v1409
        %1441 = vmatpush.msra.mxu0 %v1407
        %1442 = vmatpush.msra.mxu0 %v1405
        %1443 = vmatpush.msra.mxu0 %v1403
        %1444 = vmatpush.msra.mxu0 %v1401
        %1445 = vmatpush.msra.mxu0 %v1399
        %1446 = vmatpush.msra.mxu0 %v1397
        %1447 = vmatpush.msra.mxu0 %v1395
        %1448 = vmatpush.msra.mxu0 %v1393
        %1449 = vmatpush.msra.mxu0 %v1391
        %1450 = vmatpush.msra.mxu0 %v1389
        %1451 = vmatpush.msra.mxu0 %v1387
        %1452 = vmatpush.msra.mxu0 %v1385
        %1453 = vmatpush.msra.mxu0 %v1383
        %1454 = vmatpush.msra.mxu0 %v1381
        %1455 = vmatpush.msra.mxu0 %v1379
        %1456 = vmatmul.f32.gmra.mxu0 %v1414
        %v1457 = vpop.f32.mrf.mxu0
        %v1458 = vadd.f32 0.0, %v1457
        %1459 = vmatmul.f32.gmra.mxu0 %v1413
        %v1460 = vpop.f32.mrf.mxu0
        %v1461 = vadd.f32 0.0, %v1460
        %1462 = vdwg.mxu0
        %1463 = vmatpush.msra.mxu0 %v1375
        %1464 = vmatpush.msra.mxu0 %v1373
        %1465 = vmatpush.msra.mxu0 %v1371
        %1466 = vmatpush.msra.mxu0 %v1369
        %1467 = vmatpush.msra.mxu0 %v1367
        %1468 = vmatpush.msra.mxu0 %v1365
        %1469 = vmatpush.msra.mxu0 %v1363
        %1470 = vmatpush.msra.mxu0 %v1361
        %1471 = vmatpush.msra.mxu0 %v1359
        %1472 = vmatpush.msra.mxu0 %v1357
        %1473 = vmatpush.msra.mxu0 %v1355
        %1474 = vmatpush.msra.mxu0 %v1353
        %1475 = vmatpush.msra.mxu0 %v1351
        %1476 = vmatpush.msra.mxu0 %v1349
        %1477 = vmatpush.msra.mxu0 %v1347
        %1478 = vmatpush.msra.mxu0 %v1345
        %1479 = vmatmul.f32.gmra.mxu0 %v1343
        %v1480 = vpop.f32.mrf.mxu0
        %v1481 = vadd.f32 %v1435, %v1480
        %1482 = vmatmul.f32.gmra.mxu0 %v1344
        %v1483 = vpop.f32.mrf.mxu0
        %v1484 = vadd.f32 %v1438, %v1483
        %1485 = vdwg.mxu0
        %1486 = vmatpush.msra.mxu0 %v1376
        %1487 = vmatpush.msra.mxu0 %v1374
        %1488 = vmatpush.msra.mxu0 %v1372
        %1489 = vmatpush.msra.mxu0 %v1370
        %1490 = vmatpush.msra.mxu0 %v1368
        %1491 = vmatpush.msra.mxu0 %v1366
        %1492 = vmatpush.msra.mxu0 %v1364
        %1493 = vmatpush.msra.mxu0 %v1362
        %1494 = vmatpush.msra.mxu0 %v1360
        %1495 = vmatpush.msra.mxu0 %v1358
        %1496 = vmatpush.msra.mxu0 %v1356
        %1497 = vmatpush.msra.mxu0 %v1354
        %1498 = vmatpush.msra.mxu0 %v1352
        %1499 = vmatpush.msra.mxu0 %v1350
        %1500 = vmatpush.msra.mxu0 %v1348
        %1501 = vmatpush.msra.mxu0 %v1346
        %1502 = vmatmul.f32.gmra.mxu0 %v1343
        %v1503 = vpop.f32.mrf.mxu0
        %v1504 = vadd.f32 %v1458, %v1503
        %1505 = vmatmul.f32.gmra.mxu0 %v1344
        %v1506 = vpop.f32.mrf.mxu0
        %v1507 = vadd.f32 %v1461, %v1506
        %1508 = vdwg.mxu0
        %s1509 = scalar_lea.vmem [#allocation8], 512
        %v1510 = vld [vmem:[%s1509] sm:$0xff]
        %v1511 = vld [vmem:[%s1509 + $0x8] sm:$0xff]
        %v1512 = vld [vmem:[%s1509 + $0x10] sm:$0xff]
        %v1513 = vld [vmem:[%s1509 + $0x18] sm:$0xff]
        %v1514 = vld [vmem:[%s1509 + $0x20] sm:$0xff]
        %v1515 = vld [vmem:[%s1509 + $0x28] sm:$0xff]
        %v1516 = vld [vmem:[%s1509 + $0x30] sm:$0xff]
        %v1517 = vld [vmem:[%s1509 + $0x38] sm:$0xff]
        %v1518 = vld [vmem:[%s1509 + $0x40] sm:$0xff]
        %v1519 = vld [vmem:[%s1509 + $0x48] sm:$0xff]
        %v1520 = vld [vmem:[%s1509 + $0x50] sm:$0xff]
        %v1521 = vld [vmem:[%s1509 + $0x58] sm:$0xff]
        %v1522 = vld [vmem:[%s1509 + $0x60] sm:$0xff]
        %v1523 = vld [vmem:[%s1509 + $0x68] sm:$0xff]
        %v1524 = vld [vmem:[%s1509 + $0x70] sm:$0xff]
        %v1525 = vld [vmem:[%s1509 + $0x78] sm:$0xff]
        %v1526 = vld [vmem:[%s1509 + $0x80] sm:$0xff]
        %v1527 = vld [vmem:[%s1509 + $0x88] sm:$0xff]
        %v1528 = vld [vmem:[%s1509 + $0x90] sm:$0xff]
        %v1529 = vld [vmem:[%s1509 + $0x98] sm:$0xff]
        %v1530 = vld [vmem:[%s1509 + $0xa0] sm:$0xff]
        %v1531 = vld [vmem:[%s1509 + $0xa8] sm:$0xff]
        %v1532 = vld [vmem:[%s1509 + $0xb0] sm:$0xff]
        %v1533 = vld [vmem:[%s1509 + $0xb8] sm:$0xff]
        %v1534 = vld [vmem:[%s1509 + $0xc0] sm:$0xff]
        %v1535 = vld [vmem:[%s1509 + $0xc8] sm:$0xff]
        %v1536 = vld [vmem:[%s1509 + $0xd0] sm:$0xff]
        %v1537 = vld [vmem:[%s1509 + $0xd8] sm:$0xff]
        %v1538 = vld [vmem:[%s1509 + $0xe0] sm:$0xff]
        %v1539 = vld [vmem:[%s1509 + $0xe8] sm:$0xff]
        %v1540 = vld [vmem:[%s1509 + $0xf0] sm:$0xff]
        %v1541 = vld [vmem:[%s1509 + $0xf8] sm:$0xff]
        %v1542 = vrot.slane %v1343, 2
        %v1543 = vrot.slane %v1344, 2
        %v1544 = vsel %vm659, %v1542, %v1543
        %1547 = vmatpush.msra.mxu0 %v1540
        %1548 = vmatpush.msra.mxu0 %v1538
        %1549 = vmatpush.msra.mxu0 %v1536
        %1550 = vmatpush.msra.mxu0 %v1534
        %1551 = vmatpush.msra.mxu0 %v1532
        %1552 = vmatpush.msra.mxu0 %v1530
        %1553 = vmatpush.msra.mxu0 %v1528
        %1554 = vmatpush.msra.mxu0 %v1526
        %1555 = vmatpush.msra.mxu0 %v1524
        %1556 = vmatpush.msra.mxu0 %v1522
        %1557 = vmatpush.msra.mxu0 %v1520
        %1558 = vmatpush.msra.mxu0 %v1518
        %1559 = vmatpush.msra.mxu0 %v1516
        %1560 = vmatpush.msra.mxu0 %v1514
        %1561 = vmatpush.msra.mxu0 %v1512
        %1562 = vmatpush.msra.mxu0 %v1510
        %1563 = vmatmul.f32.gmra.mxu0 %v1544
        %v1564 = vpop.f32.mrf.mxu0
        %v1565 = vadd.f32 0.0, %v1564
        %1566 = vmatmul.f32.gmra.mxu0 %v1543
        %v1567 = vpop.f32.mrf.mxu0
        %v1568 = vadd.f32 0.0, %v1567
        %1569 = vdwg.mxu0
        %1570 = vmatpush.msra.mxu0 %v1541
        %1571 = vmatpush.msra.mxu0 %v1539
        %1572 = vmatpush.msra.mxu0 %v1537
        %1573 = vmatpush.msra.mxu0 %v1535
        %1574 = vmatpush.msra.mxu0 %v1533
        %1575 = vmatpush.msra.mxu0 %v1531
        %1576 = vmatpush.msra.mxu0 %v1529
        %1577 = vmatpush.msra.mxu0 %v1527
        %1578 = vmatpush.msra.mxu0 %v1525
        %1579 = vmatpush.msra.mxu0 %v1523
        %1580 = vmatpush.msra.mxu0 %v1521
        %1581 = vmatpush.msra.mxu0 %v1519
        %1582 = vmatpush.msra.mxu0 %v1517
        %1583 = vmatpush.msra.mxu0 %v1515
        %1584 = vmatpush.msra.mxu0 %v1513
        %1585 = vmatpush.msra.mxu0 %v1511
        %1586 = vmatmul.f32.gmra.mxu0 %v1544
        %v1587 = vpop.f32.mrf.mxu0
        %v1588 = vadd.f32 0.0, %v1587
        %1589 = vmatmul.f32.gmra.mxu0 %v1543
        %v1590 = vpop.f32.mrf.mxu0
        %v1591 = vadd.f32 0.0, %v1590
        %1592 = vdwg.mxu0
        %v1593 = vadd.f32 %v1481, %v1565
        %v1594 = vadd.f32 %v1504, %v1588
        %v1595 = vadd.f32 %v1484, %v1568
        %v1596 = vadd.f32 %v1507, %v1591
        %s1597 = scalar_lea.vmem [#allocation8], 768
        %v1598 = vld [vmem:[%s1597] sm:$0xff]
        %v1599 = vld [vmem:[%s1597 + $0x8] sm:$0xff]
        %v1600 = vld [vmem:[%s1597 + $0x10] sm:$0xff]
        %v1601 = vld [vmem:[%s1597 + $0x18] sm:$0xff]
        %v1602 = vld [vmem:[%s1597 + $0x20] sm:$0xff]
        %v1603 = vld [vmem:[%s1597 + $0x28] sm:$0xff]
        %v1604 = vld [vmem:[%s1597 + $0x30] sm:$0xff]
        %v1605 = vld [vmem:[%s1597 + $0x38] sm:$0xff]
        %v1606 = vld [vmem:[%s1597 + $0x40] sm:$0xff]
        %v1607 = vld [vmem:[%s1597 + $0x48] sm:$0xff]
        %v1608 = vld [vmem:[%s1597 + $0x50] sm:$0xff]
        %v1609 = vld [vmem:[%s1597 + $0x58] sm:$0xff]
        %v1610 = vld [vmem:[%s1597 + $0x60] sm:$0xff]
        %v1611 = vld [vmem:[%s1597 + $0x68] sm:$0xff]
        %v1612 = vld [vmem:[%s1597 + $0x70] sm:$0xff]
        %v1613 = vld [vmem:[%s1597 + $0x78] sm:$0xff]
        %v1614 = vld [vmem:[%s1597 + $0x80] sm:$0xff]
        %v1615 = vld [vmem:[%s1597 + $0x88] sm:$0xff]
        %v1616 = vld [vmem:[%s1597 + $0x90] sm:$0xff]
        %v1617 = vld [vmem:[%s1597 + $0x98] sm:$0xff]
        %v1618 = vld [vmem:[%s1597 + $0xa0] sm:$0xff]
        %v1619 = vld [vmem:[%s1597 + $0xa8] sm:$0xff]
        %v1620 = vld [vmem:[%s1597 + $0xb0] sm:$0xff]
        %v1621 = vld [vmem:[%s1597 + $0xb8] sm:$0xff]
        %v1622 = vld [vmem:[%s1597 + $0xc0] sm:$0xff]
        %v1623 = vld [vmem:[%s1597 + $0xc8] sm:$0xff]
        %v1624 = vld [vmem:[%s1597 + $0xd0] sm:$0xff]
        %v1625 = vld [vmem:[%s1597 + $0xd8] sm:$0xff]
        %v1626 = vld [vmem:[%s1597 + $0xe0] sm:$0xff]
        %v1627 = vld [vmem:[%s1597 + $0xe8] sm:$0xff]
        %v1628 = vld [vmem:[%s1597 + $0xf0] sm:$0xff]
        %v1629 = vld [vmem:[%s1597 + $0xf8] sm:$0xff]
        %v1630 = vrot.slane %v1343, 3
        %v1631 = vrot.slane %v1344, 3
        %v1632 = vsel %vm770, %v1630, %v1631
        %1635 = vmatpush.msra.mxu0 %v1628
        %1636 = vmatpush.msra.mxu0 %v1626
        %1637 = vmatpush.msra.mxu0 %v1624
        %1638 = vmatpush.msra.mxu0 %v1622
        %1639 = vmatpush.msra.mxu0 %v1620
        %1640 = vmatpush.msra.mxu0 %v1618
        %1641 = vmatpush.msra.mxu0 %v1616
        %1642 = vmatpush.msra.mxu0 %v1614
        %1643 = vmatpush.msra.mxu0 %v1612
        %1644 = vmatpush.msra.mxu0 %v1610
        %1645 = vmatpush.msra.mxu0 %v1608
        %1646 = vmatpush.msra.mxu0 %v1606
        %1647 = vmatpush.msra.mxu0 %v1604
        %1648 = vmatpush.msra.mxu0 %v1602
        %1649 = vmatpush.msra.mxu0 %v1600
        %1650 = vmatpush.msra.mxu0 %v1598
        %1651 = vmatmul.f32.gmra.mxu0 %v1632
        %v1652 = vpop.f32.mrf.mxu0
        %v1653 = vadd.f32 0.0, %v1652
        %1654 = vmatmul.f32.gmra.mxu0 %v1631
        %v1655 = vpop.f32.mrf.mxu0
        %v1656 = vadd.f32 0.0, %v1655
        %1657 = vdwg.mxu0
        %1658 = vmatpush.msra.mxu0 %v1629
        %1659 = vmatpush.msra.mxu0 %v1627
        %1660 = vmatpush.msra.mxu0 %v1625
        %1661 = vmatpush.msra.mxu0 %v1623
        %1662 = vmatpush.msra.mxu0 %v1621
        %1663 = vmatpush.msra.mxu0 %v1619
        %1664 = vmatpush.msra.mxu0 %v1617
        %1665 = vmatpush.msra.mxu0 %v1615
        %1666 = vmatpush.msra.mxu0 %v1613
        %1667 = vmatpush.msra.mxu0 %v1611
        %1668 = vmatpush.msra.mxu0 %v1609
        %1669 = vmatpush.msra.mxu0 %v1607
        %1670 = vmatpush.msra.mxu0 %v1605
        %1671 = vmatpush.msra.mxu0 %v1603
        %1672 = vmatpush.msra.mxu0 %v1601
        %1673 = vmatpush.msra.mxu0 %v1599
        %1674 = vmatmul.f32.gmra.mxu0 %v1632
        %v1675 = vpop.f32.mrf.mxu0
        %v1676 = vadd.f32 0.0, %v1675
        %1677 = vmatmul.f32.gmra.mxu0 %v1631
        %v1678 = vpop.f32.mrf.mxu0
        %v1679 = vadd.f32 0.0, %v1678
        %1680 = vdwg.mxu0
        %v1681 = vadd.f32 %v1593, %v1653
        %v1682 = vadd.f32 %v1594, %v1676
        %v1683 = vadd.f32 %v1595, %v1656
        %v1684 = vadd.f32 %v1596, %v1679
        %s1685 = scalar_lea.vmem [#allocation8], 1024
        %v1686 = vld [vmem:[%s1685] sm:$0xff]
        %v1687 = vld [vmem:[%s1685 + $0x8] sm:$0xff]
        %v1688 = vld [vmem:[%s1685 + $0x10] sm:$0xff]
        %v1689 = vld [vmem:[%s1685 + $0x18] sm:$0xff]
        %v1690 = vld [vmem:[%s1685 + $0x20] sm:$0xff]
        %v1691 = vld [vmem:[%s1685 + $0x28] sm:$0xff]
        %v1692 = vld [vmem:[%s1685 + $0x30] sm:$0xff]
        %v1693 = vld [vmem:[%s1685 + $0x38] sm:$0xff]
        %v1694 = vld [vmem:[%s1685 + $0x40] sm:$0xff]
        %v1695 = vld [vmem:[%s1685 + $0x48] sm:$0xff]
        %v1696 = vld [vmem:[%s1685 + $0x50] sm:$0xff]
        %v1697 = vld [vmem:[%s1685 + $0x58] sm:$0xff]
        %v1698 = vld [vmem:[%s1685 + $0x60] sm:$0xff]
        %v1699 = vld [vmem:[%s1685 + $0x68] sm:$0xff]
        %v1700 = vld [vmem:[%s1685 + $0x70] sm:$0xff]
        %v1701 = vld [vmem:[%s1685 + $0x78] sm:$0xff]
        %v1702 = vld [vmem:[%s1685 + $0x80] sm:$0xff]
        %v1703 = vld [vmem:[%s1685 + $0x88] sm:$0xff]
        %v1704 = vld [vmem:[%s1685 + $0x90] sm:$0xff]
        %v1705 = vld [vmem:[%s1685 + $0x98] sm:$0xff]
        %v1706 = vld [vmem:[%s1685 + $0xa0] sm:$0xff]
        %v1707 = vld [vmem:[%s1685 + $0xa8] sm:$0xff]
        %v1708 = vld [vmem:[%s1685 + $0xb0] sm:$0xff]
        %v1709 = vld [vmem:[%s1685 + $0xb8] sm:$0xff]
        %v1710 = vld [vmem:[%s1685 + $0xc0] sm:$0xff]
        %v1711 = vld [vmem:[%s1685 + $0xc8] sm:$0xff]
        %v1712 = vld [vmem:[%s1685 + $0xd0] sm:$0xff]
        %v1713 = vld [vmem:[%s1685 + $0xd8] sm:$0xff]
        %v1714 = vld [vmem:[%s1685 + $0xe0] sm:$0xff]
        %v1715 = vld [vmem:[%s1685 + $0xe8] sm:$0xff]
        %v1716 = vld [vmem:[%s1685 + $0xf0] sm:$0xff]
        %v1717 = vld [vmem:[%s1685 + $0xf8] sm:$0xff]
        %v1718 = vrot.slane %v1343, 4
        %v1719 = vrot.slane %v1344, 4
        %v1720 = vsel %vm881, %v1718, %v1719
        %1723 = vmatpush.msra.mxu0 %v1716
        %1724 = vmatpush.msra.mxu0 %v1714
        %1725 = vmatpush.msra.mxu0 %v1712
        %1726 = vmatpush.msra.mxu0 %v1710
        %1727 = vmatpush.msra.mxu0 %v1708
        %1728 = vmatpush.msra.mxu0 %v1706
        %1729 = vmatpush.msra.mxu0 %v1704
        %1730 = vmatpush.msra.mxu0 %v1702
        %1731 = vmatpush.msra.mxu0 %v1700
        %1732 = vmatpush.msra.mxu0 %v1698
        %1733 = vmatpush.msra.mxu0 %v1696
        %1734 = vmatpush.msra.mxu0 %v1694
        %1735 = vmatpush.msra.mxu0 %v1692
        %1736 = vmatpush.msra.mxu0 %v1690
        %1737 = vmatpush.msra.mxu0 %v1688
        %1738 = vmatpush.msra.mxu0 %v1686
        %1739 = vmatmul.f32.gmra.mxu0 %v1720
        %v1740 = vpop.f32.mrf.mxu0
        %v1741 = vadd.f32 0.0, %v1740
        %1742 = vmatmul.f32.gmra.mxu0 %v1719
        %v1743 = vpop.f32.mrf.mxu0
        %v1744 = vadd.f32 0.0, %v1743
        %1745 = vdwg.mxu0
        %1746 = vmatpush.msra.mxu0 %v1717
        %1747 = vmatpush.msra.mxu0 %v1715
        %1748 = vmatpush.msra.mxu0 %v1713
        %1749 = vmatpush.msra.mxu0 %v1711
        %1750 = vmatpush.msra.mxu0 %v1709
        %1751 = vmatpush.msra.mxu0 %v1707
        %1752 = vmatpush.msra.mxu0 %v1705
        %1753 = vmatpush.msra.mxu0 %v1703
        %1754 = vmatpush.msra.mxu0 %v1701
        %1755 = vmatpush.msra.mxu0 %v1699
        %1756 = vmatpush.msra.mxu0 %v1697
        %1757 = vmatpush.msra.mxu0 %v1695
        %1758 = vmatpush.msra.mxu0 %v1693
        %1759 = vmatpush.msra.mxu0 %v1691
        %1760 = vmatpush.msra.mxu0 %v1689
        %1761 = vmatpush.msra.mxu0 %v1687
        %1762 = vmatmul.f32.gmra.mxu0 %v1720
        %v1763 = vpop.f32.mrf.mxu0
        %v1764 = vadd.f32 0.0, %v1763
        %1765 = vmatmul.f32.gmra.mxu0 %v1719
        %v1766 = vpop.f32.mrf.mxu0
        %v1767 = vadd.f32 0.0, %v1766
        %1768 = vdwg.mxu0
        %v1769 = vadd.f32 %v1681, %v1741
        %v1770 = vadd.f32 %v1682, %v1764
        %v1771 = vadd.f32 %v1683, %v1744
        %v1772 = vadd.f32 %v1684, %v1767
        %v1773 = vld [vmem:[%s4] sm:$0x3]
        %v1775 = vperm.slane %v1773, 0
        %v1776 = vperm.slane %v1773, 1
        %v1779 = vadd.f32 %v1769, %v1775
        %v1780 = vadd.f32 %v1770, %v1776
        %v1781 = vadd.f32 %v1771, %v1775
        %v1782 = vadd.f32 %v1772, %v1776
        %v1783 = vmax.f32 %v1779, 0.0
        %v1784 = vmax.f32 %v1780, 0.0
        %v1785 = vmax.f32 %v1781, 0.0
        %v1786 = vmax.f32 %v1782, 0.0
        %1789 = vrot.lane.b32.xlu0 %v1783, 112
        %v1790 = vpop.permute.xlu0 %1789
        %1791 = vrot.lane.b32.xlu0 %v1785, 112
        %v1792 = vpop.permute.xlu0 %1791
        %v1795 = vmax.f32 %v1783, %v1790
        %v1796 = vmax.f32 %v1785, %v1792
        %vm1797 = vcmask 130048
        %1798 = vst.msk [vmem:[#allocation4] sm:$0xff] %vm1797, %v1795
        %vm1799 = vcmask 123904
        %1800 = vst.msk [vmem:[#allocation4 + $0x8] sm:$0x3] %vm1799, %v1796
        %1803 = vrot.lane.b32.xlu0 %v1795, 112
        %v1804 = vpop.permute.xlu0 %1803
        %1805 = vrot.lane.b32.xlu0 %v1796, 112
        %v1806 = vpop.permute.xlu0 %1805
        %vm1809 = vcmask 261248
        %1810 = vst.msk [vmem:[#allocation4] sm:$0xff] %vm1809, %v1804
        %vm1811 = vcmask 255104
        %1812 = vst.msk [vmem:[#allocation4 + $0x8] sm:$0x3] %vm1811, %v1806
        %1813 = vrot.lane.b32.xlu0 %v1795, 96
        %v1814 = vpop.permute.xlu0 %1813
        %1815 = vrot.lane.b32.xlu0 %v1796, 96
        %v1816 = vpop.permute.xlu0 %1815
        %vm1819 = vcmask 392448
        %1820 = vst.msk [vmem:[#allocation4] sm:$0xff] %vm1819, %v1814
        %vm1821 = vcmask 386304
        %1822 = vst.msk [vmem:[#allocation4 + $0x8] sm:$0x3] %vm1821, %v1816
        %1823 = vrot.lane.b32.xlu0 %v1795, 80
        %v1824 = vpop.permute.xlu0 %1823
        %1825 = vrot.lane.b32.xlu0 %v1796, 80
        %v1826 = vpop.permute.xlu0 %1825
        %vm1829 = vcmask 523648
        %1830 = vst.msk [vmem:[#allocation4] sm:$0xff] %vm1829, %v1824
        %vm1831 = vcmask 517504
        %1832 = vst.msk [vmem:[#allocation4 + $0x8] sm:$0x3] %vm1831, %v1826
        %1835 = vrot.lane.b32.xlu0 %v1784, 112
        %v1836 = vpop.permute.xlu0 %1835
        %1837 = vrot.lane.b32.xlu0 %v1786, 112
        %v1838 = vpop.permute.xlu0 %1837
        %v1841 = vmax.f32 %v1784, %v1836
        %v1842 = vmax.f32 %v1786, %v1838
        %1845 = vrot.lane.b32.xlu0 %v1841, 64
        %v1846 = vpop.permute.xlu0 %1845
        %1847 = vrot.lane.b32.xlu0 %v1842, 64
        %v1848 = vpop.permute.xlu0 %1847
        %vm1851 = vcmask 654848
        %1852 = vst.msk [vmem:[#allocation4] sm:$0xff] %vm1851, %v1846
        %vm1853 = vcmask 648704
        %1854 = vst.msk [vmem:[#allocation4 + $0x8] sm:$0x3] %vm1853, %v1848
        %v1855 = vld [vmem:[#allocation4] sm:$0x1]
        %v1856 = vld [vmem:[#allocation4 + $0x1] sm:$0x1]
        %v1857 = vmax.f32 %v1855, %v1856
        %vm1858 = vcmask 647168
        %1859 = vst.msk [vmem:[#allocation5] sm:$0x1] %vm1858, %v1857
        %v1860 = vld [vmem:[#allocation4 + $0x2] sm:$0x1]
        %v1861 = vld [vmem:[#allocation4 + $0x3] sm:$0x1]
        %v1862 = vmax.f32 %v1860, %v1861
        %1864 = vrot.lane.b32.xlu0 %v1862, 80
        %v1865 = vpop.permute.xlu0 %1864
        %vm1867 = vcmask 1041024
        %1868 = vst.msk [vmem:[#allocation5] sm:$0x1] %vm1867, %v1865
        %vm1869 = vcmask 253952
        %1870 = vst.msk [vmem:[#allocation5 + $0x8] sm:$0x1] %vm1869, %v1865
        %v1871 = vld [vmem:[#allocation4 + $0x4] sm:$0x1]
        %v1872 = vld [vmem:[#allocation4 + $0x5] sm:$0x1]
        %v1873 = vmax.f32 %v1871, %v1872
        %1875 = vrot.lane.b32.xlu0 %v1873, 32
        %v1876 = vpop.permute.xlu0 %1875
        %vm1878 = vcmask 909568
        %1879 = vst.msk [vmem:[#allocation5 + $0x8] sm:$0x1] %vm1878, %v1876
        %v1880 = vld [vmem:[#allocation4 + $0x6] sm:$0x1]
        %v1881 = vld [vmem:[#allocation4 + $0x7] sm:$0x1]
        %v1882 = vmax.f32 %v1880, %v1881
        %1884 = vrot.lane.b32.xlu0 %v1882, 112
        %v1885 = vpop.permute.xlu0 %1884
        %vm1887 = vcmask 1041280
        %1888 = vst.msk [vmem:[#allocation5 + $0x8] sm:$0x1] %vm1887, %v1885
        %vm1889 = vcmask 516096
        %1890 = vst.msk [vmem:[#allocation5 + $0x10] sm:$0x1] %vm1889, %v1885
        %v1891 = vld [vmem:[#allocation4 + $0x8] sm:$0x1]
        %v1892 = vld [vmem:[#allocation4 + $0x9] sm:$0x1]
        %v1893 = vmax.f32 %v1891, %v1892
        %1895 = vrot.lane.b32.xlu0 %v1893, 64
        %v1896 = vpop.permute.xlu0 %1895
        %vm1898 = vcmask 1040896
        %1899 = vst.msk [vmem:[#allocation5 + $0x10] sm:$0x1] %vm1898, %v1896
        %vm1900 = vcmask 122880
        %1901 = vst.msk [vmem:[#allocation5 + $0x18] sm:$0x1] %vm1900, %v1896
        %v1902 = vld [vmem:[#allocation5] sm:$0xff]
        %v1903 = vld [vmem:[#allocation5 + $0x8] sm:$0xff]
        %v1904 = vld [vmem:[#allocation5 + $0x10] sm:$0xff]
        %v1905 = vld [vmem:[#allocation5 + $0x18] sm:$0xff]
        %v1906 = vld [vmem:[%s5] sm:$0xff]
        %v1907 = vld [vmem:[%s5 + $0x8] sm:$0xff]
        %v1908 = vld [vmem:[%s5 + $0x10] sm:$0xff]
        %v1909 = vld [vmem:[%s5 + $0x18] sm:$0xff]
        %v1910 = vld [vmem:[%s5 + $0x20] sm:$0xff]
        %v1911 = vld [vmem:[%s5 + $0x28] sm:$0xff]
        %v1912 = vld [vmem:[%s5 + $0x30] sm:$0xff]
        %v1913 = vld [vmem:[%s5 + $0x38] sm:$0xff]
        %v1914 = vld [vmem:[%s5 + $0x40] sm:$0xff]
        %v1915 = vld [vmem:[%s5 + $0x48] sm:$0xff]
        %v1916 = vld [vmem:[%s5 + $0x50] sm:$0xff]
        %v1917 = vld [vmem:[%s5 + $0x58] sm:$0xff]
        %v1918 = vld [vmem:[%s5 + $0x60] sm:$0xff]
        %v1919 = vld [vmem:[%s5 + $0x68] sm:$0xff]
        %v1920 = vld [vmem:[%s5 + $0x70] sm:$0xff]
        %v1921 = vld [vmem:[%s5 + $0x78] sm:$0xff]
        %v1922 = vld [vmem:[%s5 + $0x80] sm:$0xff]
        %v1923 = vld [vmem:[%s5 + $0x88] sm:$0xff]
        %v1924 = vld [vmem:[%s5 + $0x90] sm:$0xff]
        %v1925 = vld [vmem:[%s5 + $0x98] sm:$0xff]
        %v1926 = vld [vmem:[%s5 + $0xa0] sm:$0xff]
        %v1927 = vld [vmem:[%s5 + $0xa8] sm:$0xff]
        %v1928 = vld [vmem:[%s5 + $0xb0] sm:$0xff]
        %v1929 = vld [vmem:[%s5 + $0xb8] sm:$0xff]
        %v1930 = vld [vmem:[%s5 + $0xc0] sm:$0xff]
        %v1931 = vld [vmem:[%s5 + $0xc8] sm:$0xff]
        %v1932 = vld [vmem:[%s5 + $0xd0] sm:$0xff]
        %v1933 = vld [vmem:[%s5 + $0xd8] sm:$0xff]
        %v1934 = vld [vmem:[%s5 + $0xe0] sm:$0xff]
        %v1935 = vld [vmem:[%s5 + $0xe8] sm:$0xff]
        %v1936 = vld [vmem:[%s5 + $0xf0] sm:$0xff]
        %v1937 = vld [vmem:[%s5 + $0xf8] sm:$0xff]
        %v1938 = vld [vmem:[%s5 + $0x100] sm:$0xff]
        %v1939 = vld [vmem:[%s5 + $0x108] sm:$0xff]
        %v1940 = vld [vmem:[%s5 + $0x110] sm:$0xff]
        %v1941 = vld [vmem:[%s5 + $0x118] sm:$0xff]
        %v1942 = vld [vmem:[%s5 + $0x120] sm:$0xff]
        %v1943 = vld [vmem:[%s5 + $0x128] sm:$0xff]
        %v1944 = vld [vmem:[%s5 + $0x130] sm:$0xff]
        %v1945 = vld [vmem:[%s5 + $0x138] sm:$0xff]
        %v1946 = vld [vmem:[%s5 + $0x140] sm:$0xff]
        %v1947 = vld [vmem:[%s5 + $0x148] sm:$0xff]
        %v1948 = vld [vmem:[%s5 + $0x150] sm:$0xff]
        %v1949 = vld [vmem:[%s5 + $0x158] sm:$0xff]
        %v1950 = vld [vmem:[%s5 + $0x160] sm:$0xff]
        %v1951 = vld [vmem:[%s5 + $0x168] sm:$0xff]
        %v1952 = vld [vmem:[%s5 + $0x170] sm:$0xff]
        %v1953 = vld [vmem:[%s5 + $0x178] sm:$0xff]
        %v1954 = vld [vmem:[%s5 + $0x180] sm:$0xff]
        %v1955 = vld [vmem:[%s5 + $0x188] sm:$0xff]
        %v1956 = vld [vmem:[%s5 + $0x190] sm:$0xff]
        %v1957 = vld [vmem:[%s5 + $0x198] sm:$0xff]
        %v1958 = vld [vmem:[%s5 + $0x1a0] sm:$0xff]
        %v1959 = vld [vmem:[%s5 + $0x1a8] sm:$0xff]
        %v1960 = vld [vmem:[%s5 + $0x1b0] sm:$0xff]
        %v1961 = vld [vmem:[%s5 + $0x1b8] sm:$0xff]
        %v1962 = vld [vmem:[%s5 + $0x1c0] sm:$0xff]
        %v1963 = vld [vmem:[%s5 + $0x1c8] sm:$0xff]
        %v1964 = vld [vmem:[%s5 + $0x1d0] sm:$0xff]
        %v1965 = vld [vmem:[%s5 + $0x1d8] sm:$0xff]
        %v1966 = vld [vmem:[%s5 + $0x1e0] sm:$0xff]
        %v1967 = vld [vmem:[%s5 + $0x1e8] sm:$0xff]
        %v1968 = vld [vmem:[%s5 + $0x1f0] sm:$0xff]
        %v1969 = vld [vmem:[%s5 + $0x1f8] sm:$0xff]
        %v1970 = vld [vmem:[%s6] sm:$0x1]
        %v1972 = vperm.slane %v1970, 0
        %1974 = vmatpush.msra.mxu0 %v1921
        %1975 = vmatpush.msra.mxu0 %v1920
        %1976 = vmatpush.msra.mxu0 %v1919
        %1977 = vmatpush.msra.mxu0 %v1918
        %1978 = vmatpush.msra.mxu0 %v1917
        %1979 = vmatpush.msra.mxu0 %v1916
        %1980 = vmatpush.msra.mxu0 %v1915
        %1981 = vmatpush.msra.mxu0 %v1914
        %1982 = vmatpush.msra.mxu0 %v1913
        %1983 = vmatpush.msra.mxu0 %v1912
        %1984 = vmatpush.msra.mxu0 %v1911
        %1985 = vmatpush.msra.mxu0 %v1910
        %1986 = vmatpush.msra.mxu0 %v1909
        %1987 = vmatpush.msra.mxu0 %v1908
        %1988 = vmatpush.msra.mxu0 %v1907
        %1989 = vmatpush.msra.mxu0 %v1906
        %1990 = vmatmul.f32.gmra.mxu0 %v1902
        %v1991 = vpop.f32.mrf.mxu0
        %v1992 = vadd.f32 %v1972, %v1991
        %1993 = vdwg.mxu0
        %1994 = vmatpush.msra.mxu0 %v1937
        %1995 = vmatpush.msra.mxu0 %v1936
        %1996 = vmatpush.msra.mxu0 %v1935
        %1997 = vmatpush.msra.mxu0 %v1934
        %1998 = vmatpush.msra.mxu0 %v1933
        %1999 = vmatpush.msra.mxu0 %v1932
        %2000 = vmatpush.msra.mxu0 %v1931
        %2001 = vmatpush.msra.mxu0 %v1930
        %2002 = vmatpush.msra.mxu0 %v1929
        %2003 = vmatpush.msra.mxu0 %v1928
        %2004 = vmatpush.msra.mxu0 %v1927
        %2005 = vmatpush.msra.mxu0 %v1926
        %2006 = vmatpush.msra.mxu0 %v1925
        %2007 = vmatpush.msra.mxu0 %v1924
        %2008 = vmatpush.msra.mxu0 %v1923
        %2009 = vmatpush.msra.mxu0 %v1922
        %2010 = vmatmul.f32.gmra.mxu0 %v1903
        %v2011 = vpop.f32.mrf.mxu0
        %v2012 = vadd.f32 %v1992, %v2011
        %2013 = vdwg.mxu0
        %2014 = vmatpush.msra.mxu0 %v1953
        %2015 = vmatpush.msra.mxu0 %v1952
        %2016 = vmatpush.msra.mxu0 %v1951
        %2017 = vmatpush.msra.mxu0 %v1950
        %2018 = vmatpush.msra.mxu0 %v1949
        %2019 = vmatpush.msra.mxu0 %v1948
        %2020 = vmatpush.msra.mxu0 %v1947
        %2021 = vmatpush.msra.mxu0 %v1946
        %2022 = vmatpush.msra.mxu0 %v1945
        %2023 = vmatpush.msra.mxu0 %v1944
        %2024 = vmatpush.msra.mxu0 %v1943
        %2025 = vmatpush.msra.mxu0 %v1942
        %2026 = vmatpush.msra.mxu0 %v1941
        %2027 = vmatpush.msra.mxu0 %v1940
        %2028 = vmatpush.msra.mxu0 %v1939
        %2029 = vmatpush.msra.mxu0 %v1938
        %2030 = vmatmul.f32.gmra.mxu0 %v1904
        %v2031 = vpop.f32.mrf.mxu0
        %v2032 = vadd.f32 %v2012, %v2031
        %2033 = vdwg.mxu0
        %2034 = vmatpush.msra.mxu0 %v1969
        %2035 = vmatpush.msra.mxu0 %v1968
        %2036 = vmatpush.msra.mxu0 %v1967
        %2037 = vmatpush.msra.mxu0 %v1966
        %2038 = vmatpush.msra.mxu0 %v1965
        %2039 = vmatpush.msra.mxu0 %v1964
        %2040 = vmatpush.msra.mxu0 %v1963
        %2041 = vmatpush.msra.mxu0 %v1962
        %2042 = vmatpush.msra.mxu0 %v1961
        %2043 = vmatpush.msra.mxu0 %v1960
        %2044 = vmatpush.msra.mxu0 %v1959
        %2045 = vmatpush.msra.mxu0 %v1958
        %2046 = vmatpush.msra.mxu0 %v1957
        %2047 = vmatpush.msra.mxu0 %v1956
        %2048 = vmatpush.msra.mxu0 %v1955
        %2049 = vmatpush.msra.mxu0 %v1954
        %2050 = vmatmul.f32.gmra.mxu0 %v1905
        %v2051 = vpop.f32.mrf.mxu0
        %v2052 = vadd.f32 %v2032, %v2051
        %2053 = vdwg.mxu0
        %v2054 = vmax.f32 %v2052, 0.0
        %v2055 = vld [vmem:[%s7] sm:$0xff]
        %v2056 = vld [vmem:[%s7 + $0x8] sm:$0xff]
        %v2057 = vld [vmem:[%s7 + $0x10] sm:$0xff]
        %v2058 = vld [vmem:[%s7 + $0x18] sm:$0xff]
        %v2059 = vld [vmem:[%s7 + $0x20] sm:$0xff]
        %v2060 = vld [vmem:[%s7 + $0x28] sm:$0xff]
        %v2061 = vld [vmem:[%s7 + $0x30] sm:$0xff]
        %v2062 = vld [vmem:[%s7 + $0x38] sm:$0xff]
        %v2063 = vld [vmem:[%s7 + $0x40] sm:$0xff]
        %v2064 = vld [vmem:[%s7 + $0x48] sm:$0xff]
        %v2065 = vld [vmem:[%s7 + $0x50] sm:$0xff]
        %v2066 = vld [vmem:[%s7 + $0x58] sm:$0xff]
        %v2067 = vld [vmem:[%s7 + $0x60] sm:$0xff]
        %v2068 = vld [vmem:[%s7 + $0x68] sm:$0xff]
        %v2069 = vld [vmem:[%s7 + $0x70] sm:$0xff]
        %v2070 = vld [vmem:[%s7 + $0x78] sm:$0xff]
        %v2071 = vld [vmem:[%s8] sm:$0x1]
        %v2073 = vperm.slane %v2071, 0
        %2075 = vmatpush.msra.mxu0 %v2070
        %2076 = vmatpush.msra.mxu0 %v2069
        %2077 = vmatpush.msra.mxu0 %v2068
        %2078 = vmatpush.msra.mxu0 %v2067
        %2079 = vmatpush.msra.mxu0 %v2066
        %2080 = vmatpush.msra.mxu0 %v2065
        %2081 = vmatpush.msra.mxu0 %v2064
        %2082 = vmatpush.msra.mxu0 %v2063
        %2083 = vmatpush.msra.mxu0 %v2062
        %2084 = vmatpush.msra.mxu0 %v2061
        %2085 = vmatpush.msra.mxu0 %v2060
        %2086 = vmatpush.msra.mxu0 %v2059
        %2087 = vmatpush.msra.mxu0 %v2058
        %2088 = vmatpush.msra.mxu0 %v2057
        %2089 = vmatpush.msra.mxu0 %v2056
        %2090 = vmatpush.msra.mxu0 %v2055
        %2091 = vmatmul.f32.gmra.mxu0 %v2054
        %v2092 = vpop.f32.mrf.mxu0
        %v2093 = vadd.f32 %v2073, %v2092
        %2094 = vdwg.mxu0
        %v2095 = vmax.f32 %v2093, 0.0
        %v2096 = vld [vmem:[%s9] sm:$0xff]
        %v2097 = vld [vmem:[%s9 + $0x8] sm:$0xff]
        %v2098 = vld [vmem:[%s9 + $0x10] sm:$0xff]
        %v2099 = vld [vmem:[%s9 + $0x18] sm:$0xff]
        %v2100 = vld [vmem:[%s9 + $0x20] sm:$0xff]
        %v2101 = vld [vmem:[%s9 + $0x28] sm:$0xff]
        %v2102 = vld [vmem:[%s9 + $0x30] sm:$0xff]
        %v2103 = vld [vmem:[%s9 + $0x38] sm:$0xff]
        %v2104 = vld [vmem:[%s9 + $0x40] sm:$0xff]
        %v2105 = vld [vmem:[%s9 + $0x48] sm:$0xff]
        %v2106 = vld [vmem:[%s9 + $0x50] sm:$0xff]
        %v2107 = vld [vmem:[%s9 + $0x58] sm:$0xff]
        %v2108 = vld [vmem:[%s9 + $0x60] sm:$0xff]
        %v2109 = vld [vmem:[%s9 + $0x68] sm:$0xff]
        %v2110 = vld [vmem:[%s9 + $0x70] sm:$0xff]
        %v2111 = vld [vmem:[%s9 + $0x78] sm:$0xff]
        %v2112 = vld [vmem:[%s10] sm:$0x1]
        %v2114 = vperm.slane %v2112, 0
        %2116 = vmatpush.msra.mxu0 %v2111
        %2117 = vmatpush.msra.mxu0 %v2110
        %2118 = vmatpush.msra.mxu0 %v2109
        %2119 = vmatpush.msra.mxu0 %v2108
        %2120 = vmatpush.msra.mxu0 %v2107
        %2121 = vmatpush.msra.mxu0 %v2106
        %2122 = vmatpush.msra.mxu0 %v2105
        %2123 = vmatpush.msra.mxu0 %v2104
        %2124 = vmatpush.msra.mxu0 %v2103
        %2125 = vmatpush.msra.mxu0 %v2102
        %2126 = vmatpush.msra.mxu0 %v2101
        %2127 = vmatpush.msra.mxu0 %v2100
        %2128 = vmatpush.msra.mxu0 %v2099
        %2129 = vmatpush.msra.mxu0 %v2098
        %2130 = vmatpush.msra.mxu0 %v2097
        %2131 = vmatpush.msra.mxu0 %v2096
        %2132 = vmatmul.f32.gmra.mxu0 %v2095
        %v2133 = vpop.f32.mrf.mxu0
        %v2134 = vadd.f32 %v2114, %v2133
        %2135 = vdwg.mxu0
        %2136 = vst [vmem:[%s418] sm:$0xff] %v2134
        %p2137 = scmp.lt.s32.totalorder %s24, 1
        %s2138 = scalar_select %p2137, %s24, 1
        %s2139 = smul.addr %s2138, 8
        %s2140 = scalar_lea.vmem %s11, %s2139
        // Predicated region
        $region73: #{lenet2_forward.1} parent=63 // pred_check
          %p2141 = pneg %p278
        $region74: #{lenet2_forward.1} parent=63 // pred_check_branch
          %2143 = sbr.rel (%p2141) target = $region76
        $region75: #{lenet2_forward.1} parent=63 // pred_region
          _
        $region76: #{lenet2_forward.1} parent=63 // pred_fallthru
          _
      $region64: #{lenet2_forward.1} parent=5 // pred_fallthru
        _
      %p2144 = scmp.le.s32.totalorder 2, %s19
      // Predicated region
      $region77: #{lenet2_forward.1} parent=5 // pred_check
        %p2145 = pneg %p2144
      $region78: #{lenet2_forward.1} parent=5 // pred_check_branch
        %2147 = sbr.rel (%p2145) target = $region80
      $region79: #{lenet2_forward.1} parent=5 // pred_region
        %s2148 = ssub.s32 %s19, 2
        // Predicated region
        $region81: #{lenet2_forward.1} parent=79 // pred_check
          %p2149 = pneg %p284
        $region82: #{lenet2_forward.1} parent=79 // pred_check_branch
          %2151 = sbr.rel (%p2149) target = $region84
        $region83: #{lenet2_forward.1} parent=79 // pred_region
          %p2152 = scmp.lt.s32.totalorder %s25, 1
          %s2153 = scalar_select %p2152, %s25, 1
          %s2154 = smul.addr %s2153, 8
          %s2155 = scalar_lea.vmem %s11, %s2154
        $region84: #{lenet2_forward.1} parent=79 // pred_fallthru
          _
      $region80: #{lenet2_forward.1} parent=5 // pred_fallthru
        _
    $region6: #{lenet2_forward.1} parent=1 // loop_footer
      %s23 = sadd.s32 1, %s19
    $region7: #{lenet2_forward.1} parent=1 // loop_footer_branch
      %18 = sbr.rel target = $region3
    $region8: #{lenet2_forward.1} parent=1 // loop_exit
      _
    %2156 = vsyncpa [#allocation7], 1
    %s2157 = scalar_lea.sflag [#allocation7], 1
    %2158 = vsyncpa %s2157, 1
    %2159 = vsyncpa [#allocation9], 1

</llo_original>
